<compile_context>
chip_gen: v6e
topology: v6e:2x2x1
jax: 0.10.0
libtpu: 0.0.40
codegen_flags: <defaults>
</compile_context>

<pallas_src>
import functools

import numpy as np
import jax
import jax.numpy as jnp
from jax.experimental import pallas as pl
from jax.experimental.pallas import tpu as pltpu


# -----------------------------------------------------------------------------
# Host-side construction of the small separable operator matrices.
# Replicate padding, ::2 decimation and bilinear 2x upsampling are folded into
# these matrices, so every pyramid stage is  RowOp @ X @ ColOp^T  on the MXU.
# -----------------------------------------------------------------------------
def gauss1d(klen, nsig):
    # same math as cv2.getGaussianKernel(klen, nsig) for nsig > 0
    x = np.arange(klen, dtype=np.float64) - (klen - 1) * 0.5
    g = np.exp(-(x ** 2) / (2.0 * float(nsig) ** 2))
    return g / g.sum()


def blur_band(n, g):
    """(n, n) band matrix: 1-D Gaussian blur with replicate padding folded in."""
    K = len(g)
    r = K // 2
    B = np.zeros((n, n), np.float64)
    for i in range(n):
        for d in range(K):
            j = min(max(i + d - r, 0), n - 1)
            B[i, j] += g[d]
    return B


def down_op(n, g):
    """(n//2, n): Gaussian blur (replicate pad) followed by ::2 decimation."""
    return blur_band(n, g)[0::2, :]


def up_op(n):
    """(2n, n): torch bilinear 2x upsample (align_corners=False) along one axis."""
    U = np.zeros((2 * n, n), np.float64)
    for r in range(2 * n):
        s = max((r + 0.5) * 0.5 - 0.5, 0.0)
        i0 = min(int(np.floor(s)), n - 1)
        i1 = min(i0 + 1, n - 1)
        w = s - i0
        U[r, i0] += 1.0 - w
        U[r, i1] += w
    return U


def upblur_op(n, g):
    """(2n, n): bilinear 2x upsample followed by Gaussian blur (replicate pad)."""
    return blur_band(2 * n, g) @ up_op(n)


# -----------------------------------------------------------------------------
# Fused kernel body: one batch element (C planes) per grid step; the full
# 3-level pyramid is computed with all intermediates resident in VMEM.
# -----------------------------------------------------------------------------
def _lpls_fused_body(C, ratio, vmin, vmax,
                     med_ref, x_ref, m_ref,
                     dr0_ref, dc0t_ref, dr1_ref, dc1t_ref, dr2_ref, dc2t_ref,
                     ar0_ref, ac0t_ref, ar1_ref, ac1t_ref, ar2_ref, ac2t_ref,
                     h1_ref, h2_ref, h3_ref, d3_ref):
    n = pl.program_id(0)
    m = m_ref[0]                          # (H, W) mask of this batch element
    one_m = 1.0 - m

    # load the (tiny) separable operators once per grid step
    dr0, dc0t = dr0_ref[...], dc0t_ref[...]   # blur + ::2 decimate, level 0
    dr1, dc1t = dr1_ref[...], dc1t_ref[...]
    dr2, dc2t = dr2_ref[...], dc2t_ref[...]
    ar0, ac0t = ar0_ref[...], ac0t_ref[...]   # bilinear-2x upsample + blur
    ar1, ac1t = ar1_ref[...], ac1t_ref[...]
    ar2, ac2t = ar2_ref[...], ac2t_ref[...]

    dot = lambda a, b: jnp.dot(a, b, preferred_element_type=jnp.float32)
    sub = lambda hi, low: jnp.clip(ratio * (hi - low), vmin, vmax)

    for p in range(C):                    # static unroll over channel planes
        med = med_ref[n * C + p]          # scalar read from SMEM
        xm = m * x_ref[p] + one_m * med   # median padding blend

        # level 0: blur + downsample, then high-freq residual h1
        d1 = dot(dot(dr0, xm), dc0t)                    # (H/2, W/2)
        h1_ref[p] = sub(xm, dot(dot(ar0, d1), ac0t))    # (H,   W)

        # level 1
        d2 = dot(dot(dr1, d1), dc1t)                    # (H/4, W/4)
        h2_ref[p] = sub(d1, dot(dot(ar1, d2), ac1t))    # (H/2, W/2)

        # level 2
        d3 = dot(dot(dr2, d2), dc2t)                    # (H/8, W/8)
        h3_ref[p] = sub(d2, dot(dot(ar2, d3), ac2t))    # (H/4, W/4)
        d3_ref[p] = d3


# -----------------------------------------------------------------------------
# Forward pass
# -----------------------------------------------------------------------------
def lpls_pyramid_forward(x, mask, *, ratio=4.0, vmin=-1.0, vmax=1.0):
    N, C, H, W = x.shape
    assert H % 8 == 0 and W % 8 == 0, "3-level pyramid needs H, W divisible by 8"
    g = gauss1d(5, 1.0)  # self.blur; gaussian_filter1/2/3 unused (insert_level=False)

    # per-(n,c) lower median over H*W elements (matches torch.median) + 0.2
    # (selection via jnp.partition instead of a full sort)
    k = (H * W - 1) // 2
    med = jnp.partition(x.reshape(N, C, H * W).astype(jnp.float32), k, axis=-1)[..., k] + 0.2
    med_flat = med.reshape(N * C)

    xp = x.reshape(N * C, H, W).astype(jnp.float32)
    mp = mask.reshape(N, H, W).astype(jnp.float32)

    f32 = lambda a: jnp.asarray(a, dtype=jnp.float32)
    # blur + ::2-decimate operators (replicate padding folded in), per level
    dr0, dc0t = f32(down_op(H, g)), f32(down_op(W, g).T)
    dr1, dc1t = f32(down_op(H // 2, g)), f32(down_op(W // 2, g).T)
    dr2, dc2t = f32(down_op(H // 4, g)), f32(down_op(W // 4, g).T)
    # bilinear-2x-upsample + blur operators, per level
    ar0, ac0t = f32(upblur_op(H // 2, g)), f32(upblur_op(W // 2, g).T)
    ar1, ac1t = f32(upblur_op(H // 4, g)), f32(upblur_op(W // 4, g).T)
    ar2, ac2t = f32(upblur_op(H // 8, g)), f32(upblur_op(W // 8, g).T)

    ops = [dr0, dc0t, dr1, dc1t, dr2, dc2t, ar0, ac0t, ar1, ac1t, ar2, ac2t]
    op_specs = [pl.BlockSpec(o.shape, lambda n: (0, 0)) for o in ops]

    H2, W2, H4, W4, H8, W8 = H // 2, W // 2, H // 4, W // 4, H // 8, W // 8

    h1, h2, h3, d3 = pl.pallas_call(
        functools.partial(_lpls_fused_body, C, ratio, vmin, vmax),
        out_shape=(
            jax.ShapeDtypeStruct((N * C, H, W), jnp.float32),
            jax.ShapeDtypeStruct((N * C, H2, W2), jnp.float32),
            jax.ShapeDtypeStruct((N * C, H4, W4), jnp.float32),
            jax.ShapeDtypeStruct((N * C, H8, W8), jnp.float32),
        ),
        grid=(N,),
        in_specs=[
            pl.BlockSpec(memory_space=pltpu.MemorySpace.SMEM),  # per-plane medians
            pl.BlockSpec((C, H, W), lambda n: (n, 0, 0)),       # x planes
            pl.BlockSpec((1, H, W), lambda n: (n, 0, 0)),       # mask plane
            *op_specs,                                          # separable operators
        ],
        out_specs=(
            pl.BlockSpec((C, H, W), lambda n: (n, 0, 0)),
            pl.BlockSpec((C, H2, W2), lambda n: (n, 0, 0)),
            pl.BlockSpec((C, H4, W4), lambda n: (n, 0, 0)),
            pl.BlockSpec((C, H8, W8), lambda n: (n, 0, 0)),
        ),
        compiler_params=pltpu.CompilerParams(dimension_semantics=("parallel",)),
    )(med_flat, xp, mp, *ops)

    # TODO(synk): mask1/mask2/mask3 (bilinear-downsampled masks) are only consumed
    # when sub_mask=True (default False) and don't affect the returned tensors.

    rs = lambda a: a.reshape(N, C, a.shape[1], a.shape[2])
    return [rs(h1), rs(h2), rs(h3), rs(d3)]


if __name__ == "__main__":
    key = jax.random.PRNGKey(0)
    kx, km = jax.random.split(key)
    # channels must be 3 (the module's Gaussian kernels are repeated 3x for groups=3)
    x = jax.random.normal(kx, (2, 3, 16, 16), dtype=jnp.float32)
    mask = jax.random.bernoulli(km, p=0.7, shape=(2, 1, 16, 16)).astype(jnp.float32)

    fwd = jax.jit(lpls_pyramid_forward)
    outs = jax.block_until_ready(fwd(x, mask))

    expected_shapes = [(2, 3, 16, 16), (2, 3, 8, 8), (2, 3, 4, 4), (2, 3, 2, 2)]
    assert [tuple(o.shape) for o in outs] == expected_shapes
    assert all(bool(jnp.all(jnp.isfinite(o))) for o in outs)
    print("KERNEL_OK")
</pallas_src>

<mosaic_0001>
module attributes {stable_mosaic.version = 11 : i64} {
  func.func @_lpls_fused_body(%arg0: i32, %arg1: memref<6xf32, #tpu.memory_space<smem>>, %arg2: memref<3x16x16xf32, #tpu.memory_space<vmem>>, %arg3: memref<1x16x16xf32, #tpu.memory_space<vmem>>, %arg4: memref<8x16xf32, #tpu.memory_space<vmem>>, %arg5: memref<16x8xf32, #tpu.memory_space<vmem>>, %arg6: memref<4x8xf32, #tpu.memory_space<vmem>>, %arg7: memref<8x4xf32, #tpu.memory_space<vmem>>, %arg8: memref<2x4xf32, #tpu.memory_space<vmem>>, %arg9: memref<4x2xf32, #tpu.memory_space<vmem>>, %arg10: memref<16x8xf32, #tpu.memory_space<vmem>>, %arg11: memref<8x16xf32, #tpu.memory_space<vmem>>, %arg12: memref<8x4xf32, #tpu.memory_space<vmem>>, %arg13: memref<4x8xf32, #tpu.memory_space<vmem>>, %arg14: memref<4x2xf32, #tpu.memory_space<vmem>>, %arg15: memref<2x4xf32, #tpu.memory_space<vmem>>, %arg16: memref<3x16x16xf32, #tpu.memory_space<vmem>>, %arg17: memref<3x8x8xf32, #tpu.memory_space<vmem>>, %arg18: memref<3x4x4xf32, #tpu.memory_space<vmem>>, %arg19: memref<3x2x2xf32, #tpu.memory_space<vmem>>) attributes {dimension_semantics = [#tpu.dimension_semantics<parallel>], iteration_bounds = array<i64: 2>, scalar_prefetch = 0 : i64, scratch_operands = 0 : i64, tpu.core_type = #tpu.core_type<tc>, window_params = [{transform_indices = @transform_0, window_bounds = array<i64: 6>}, {transform_indices = @transform_1, window_bounds = array<i64: 3, 16, 16>}, {transform_indices = @transform_2, window_bounds = array<i64: 1, 16, 16>}, {pipeline_mode = #tpu.pipeline_mode<synchronous>, transform_indices = @transform_3, window_bounds = array<i64: 8, 16>}, {pipeline_mode = #tpu.pipeline_mode<synchronous>, transform_indices = @transform_4, window_bounds = array<i64: 16, 8>}, {pipeline_mode = #tpu.pipeline_mode<synchronous>, transform_indices = @transform_5, window_bounds = array<i64: 4, 8>}, {pipeline_mode = #tpu.pipeline_mode<synchronous>, transform_indices = @transform_6, window_bounds = array<i64: 8, 4>}, {pipeline_mode = #tpu.pipeline_mode<synchronous>, transform_indices = @transform_7, window_bounds = array<i64: 2, 4>}, {pipeline_mode = #tpu.pipeline_mode<synchronous>, transform_indices = @transform_8, window_bounds = array<i64: 4, 2>}, {pipeline_mode = #tpu.pipeline_mode<synchronous>, transform_indices = @transform_9, window_bounds = array<i64: 16, 8>}, {pipeline_mode = #tpu.pipeline_mode<synchronous>, transform_indices = @transform_10, window_bounds = array<i64: 8, 16>}, {pipeline_mode = #tpu.pipeline_mode<synchronous>, transform_indices = @transform_11, window_bounds = array<i64: 8, 4>}, {pipeline_mode = #tpu.pipeline_mode<synchronous>, transform_indices = @transform_12, window_bounds = array<i64: 4, 8>}, {pipeline_mode = #tpu.pipeline_mode<synchronous>, transform_indices = @transform_13, window_bounds = array<i64: 4, 2>}, {pipeline_mode = #tpu.pipeline_mode<synchronous>, transform_indices = @transform_14, window_bounds = array<i64: 2, 4>}, {transform_indices = @transform_15, window_bounds = array<i64: 3, 16, 16>}, {transform_indices = @transform_16, window_bounds = array<i64: 3, 8, 8>}, {transform_indices = @transform_17, window_bounds = array<i64: 3, 4, 4>}, {transform_indices = @transform_18, window_bounds = array<i64: 3, 2, 2>}]} {
    %c0 = arith.constant 0 : index
    %c0_0 = arith.constant 0 : index
    %c0_1 = arith.constant 0 : index
    %0 = vector.load %arg3[%c0, %c0_0, %c0_1] : memref<1x16x16xf32, #tpu.memory_space<vmem>>, vector<1x16x16xf32>
    %1 = vector.shape_cast %0 : vector<1x16x16xf32> to vector<16x16xf32>
    %cst = arith.constant 1.000000e+00 : f32
    %2 = vector.broadcast %cst : f32 to vector<16x16xf32>
    %3 = arith.subf %2, %1 : vector<16x16xf32>
    %c0_2 = arith.constant 0 : index
    %c0_3 = arith.constant 0 : index
    %4 = vector.load %arg4[%c0_2, %c0_3] : memref<8x16xf32, #tpu.memory_space<vmem>>, vector<8x16xf32>
    %c0_4 = arith.constant 0 : index
    %c0_5 = arith.constant 0 : index
    %5 = vector.load %arg5[%c0_4, %c0_5] : memref<16x8xf32, #tpu.memory_space<vmem>>, vector<16x8xf32>
    %c0_6 = arith.constant 0 : index
    %c0_7 = arith.constant 0 : index
    %6 = vector.load %arg6[%c0_6, %c0_7] : memref<4x8xf32, #tpu.memory_space<vmem>>, vector<4x8xf32>
    %c0_8 = arith.constant 0 : index
    %c0_9 = arith.constant 0 : index
    %7 = vector.load %arg7[%c0_8, %c0_9] : memref<8x4xf32, #tpu.memory_space<vmem>>, vector<8x4xf32>
    %c0_10 = arith.constant 0 : index
    %c0_11 = arith.constant 0 : index
    %8 = vector.load %arg8[%c0_10, %c0_11] : memref<2x4xf32, #tpu.memory_space<vmem>>, vector<2x4xf32>
    %c0_12 = arith.constant 0 : index
    %c0_13 = arith.constant 0 : index
    %9 = vector.load %arg9[%c0_12, %c0_13] : memref<4x2xf32, #tpu.memory_space<vmem>>, vector<4x2xf32>
    %c0_14 = arith.constant 0 : index
    %c0_15 = arith.constant 0 : index
    %10 = vector.load %arg10[%c0_14, %c0_15] : memref<16x8xf32, #tpu.memory_space<vmem>>, vector<16x8xf32>
    %c0_16 = arith.constant 0 : index
    %c0_17 = arith.constant 0 : index
    %11 = vector.load %arg11[%c0_16, %c0_17] : memref<8x16xf32, #tpu.memory_space<vmem>>, vector<8x16xf32>
    %c0_18 = arith.constant 0 : index
    %c0_19 = arith.constant 0 : index
    %12 = vector.load %arg12[%c0_18, %c0_19] : memref<8x4xf32, #tpu.memory_space<vmem>>, vector<8x4xf32>
    %c0_20 = arith.constant 0 : index
    %c0_21 = arith.constant 0 : index
    %13 = vector.load %arg13[%c0_20, %c0_21] : memref<4x8xf32, #tpu.memory_space<vmem>>, vector<4x8xf32>
    %c0_22 = arith.constant 0 : index
    %c0_23 = arith.constant 0 : index
    %14 = vector.load %arg14[%c0_22, %c0_23] : memref<4x2xf32, #tpu.memory_space<vmem>>, vector<4x2xf32>
    %c0_24 = arith.constant 0 : index
    %c0_25 = arith.constant 0 : index
    %15 = vector.load %arg15[%c0_24, %c0_25] : memref<2x4xf32, #tpu.memory_space<vmem>>, vector<2x4xf32>
    %c3_i32 = arith.constant 3 : i32
    %16 = arith.muli %arg0, %c3_i32 : i32
    %c0_i32 = arith.constant 0 : i32
    %17 = arith.addi %16, %c0_i32 : i32
    %18 = arith.index_cast %17 : i32 to index
    %19 = memref.load %arg1[%18] : memref<6xf32, #tpu.memory_space<smem>>
    %c0_26 = arith.constant 0 : index
    %c0_27 = arith.constant 0 : index
    %c0_28 = arith.constant 0 : index
    %20 = vector.load %arg2[%c0_26, %c0_27, %c0_28] : memref<3x16x16xf32, #tpu.memory_space<vmem>>, vector<1x16x16xf32>
    %21 = vector.shape_cast %20 : vector<1x16x16xf32> to vector<16x16xf32>
    %22 = arith.mulf %1, %21 : vector<16x16xf32>
    %23 = vector.broadcast %19 : f32 to vector<16x16xf32>
    %24 = arith.mulf %3, %23 : vector<16x16xf32>
    %25 = arith.addf %22, %24 : vector<16x16xf32>
    %cst_29 = arith.constant dense<0.000000e+00> : vector<8x16xf32>
    %26 = tpu.matmul %4, %25, %cst_29 {dimension_numbers = #tpu.dot_dimension_numbers<[1], [0], [0], [1], [0, 0, 1, 1], [], []>} : vector<8x16xf32>, vector<16x16xf32>, vector<8x16xf32> -> vector<8x16xf32>
    %cst_30 = arith.constant dense<0.000000e+00> : vector<8x8xf32>
    %27 = tpu.matmul %26, %5, %cst_30 {dimension_numbers = #tpu.dot_dimension_numbers<[1], [0], [0], [1], [0, 0, 1, 1], [], []>} : vector<8x16xf32>, vector<16x8xf32>, vector<8x8xf32> -> vector<8x8xf32>
    %cst_31 = arith.constant dense<0.000000e+00> : vector<16x8xf32>
    %28 = tpu.matmul %10, %27, %cst_31 {dimension_numbers = #tpu.dot_dimension_numbers<[1], [0], [0], [1], [0, 0, 1, 1], [], []>} : vector<16x8xf32>, vector<8x8xf32>, vector<16x8xf32> -> vector<16x8xf32>
    %cst_32 = arith.constant dense<0.000000e+00> : vector<16x16xf32>
    %29 = tpu.matmul %28, %11, %cst_32 {dimension_numbers = #tpu.dot_dimension_numbers<[1], [0], [0], [1], [0, 0, 1, 1], [], []>} : vector<16x8xf32>, vector<8x16xf32>, vector<16x16xf32> -> vector<16x16xf32>
    %30 = arith.subf %25, %29 : vector<16x16xf32>
    %cst_33 = arith.constant 4.000000e+00 : f32
    %31 = vector.broadcast %cst_33 : f32 to vector<16x16xf32>
    %32 = arith.mulf %31, %30 : vector<16x16xf32>
    %cst_34 = arith.constant -1.000000e+00 : f32
    %cst_35 = arith.constant 1.000000e+00 : f32
    %33 = vector.broadcast %cst_34 : f32 to vector<16x16xf32>
    %34 = arith.maximumf %33, %32 : vector<16x16xf32>
    %35 = vector.broadcast %cst_35 : f32 to vector<16x16xf32>
    %36 = arith.minimumf %35, %34 : vector<16x16xf32>
    %c0_36 = arith.constant 0 : index
    %c0_37 = arith.constant 0 : index
    %c0_38 = arith.constant 0 : index
    %37 = vector.load %arg16[%c0_36, %c0_37, %c0_38] : memref<3x16x16xf32, #tpu.memory_space<vmem>>, vector<1x16x16xf32>
    %38 = vector.shape_cast %37 : vector<1x16x16xf32> to vector<16x16xf32>
    %39 = vector.shape_cast %36 : vector<16x16xf32> to vector<1x16x16xf32>
    tpu.vector_store %arg16[%c0_36, %c0_37, %c0_38], %39 {strides = array<i32>} : memref<3x16x16xf32, #tpu.memory_space<vmem>>, vector<1x16x16xf32>,
    %cst_39 = arith.constant dense<0.000000e+00> : vector<4x8xf32>
    %40 = tpu.matmul %6, %27, %cst_39 {dimension_numbers = #tpu.dot_dimension_numbers<[1], [0], [0], [1], [0, 0, 1, 1], [], []>} : vector<4x8xf32>, vector<8x8xf32>, vector<4x8xf32> -> vector<4x8xf32>
    %cst_40 = arith.constant dense<0.000000e+00> : vector<4x4xf32>
    %41 = tpu.matmul %40, %7, %cst_40 {dimension_numbers = #tpu.dot_dimension_numbers<[1], [0], [0], [1], [0, 0, 1, 1], [], []>} : vector<4x8xf32>, vector<8x4xf32>, vector<4x4xf32> -> vector<4x4xf32>
    %cst_41 = arith.constant dense<0.000000e+00> : vector<8x4xf32>
    %42 = tpu.matmul %12, %41, %cst_41 {dimension_numbers = #tpu.dot_dimension_numbers<[1], [0], [0], [1], [0, 0, 1, 1], [], []>} : vector<8x4xf32>, vector<4x4xf32>, vector<8x4xf32> -> vector<8x4xf32>
    %cst_42 = arith.constant dense<0.000000e+00> : vector<8x8xf32>
    %43 = tpu.matmul %42, %13, %cst_42 {dimension_numbers = #tpu.dot_dimension_numbers<[1], [0], [0], [1], [0, 0, 1, 1], [], []>} : vector<8x4xf32>, vector<4x8xf32>, vector<8x8xf32> -> vector<8x8xf32>
    %44 = arith.subf %27, %43 : vector<8x8xf32>
    %cst_43 = arith.constant 4.000000e+00 : f32
    %45 = vector.broadcast %cst_43 : f32 to vector<8x8xf32>
    %46 = arith.mulf %45, %44 : vector<8x8xf32>
    %cst_44 = arith.constant -1.000000e+00 : f32
    %cst_45 = arith.constant 1.000000e+00 : f32
    %47 = vector.broadcast %cst_44 : f32 to vector<8x8xf32>
    %48 = arith.maximumf %47, %46 : vector<8x8xf32>
    %49 = vector.broadcast %cst_45 : f32 to vector<8x8xf32>
    %50 = arith.minimumf %49, %48 : vector<8x8xf32>
    %c0_46 = arith.constant 0 : index
    %c0_47 = arith.constant 0 : index
    %c0_48 = arith.constant 0 : index
    %51 = vector.load %arg17[%c0_46, %c0_47, %c0_48] : memref<3x8x8xf32, #tpu.memory_space<vmem>>, vector<1x8x8xf32>
    %52 = vector.shape_cast %51 : vector<1x8x8xf32> to vector<8x8xf32>
    %53 = vector.shape_cast %50 : vector<8x8xf32> to vector<1x8x8xf32>
    tpu.vector_store %arg17[%c0_46, %c0_47, %c0_48], %53 {strides = array<i32>} : memref<3x8x8xf32, #tpu.memory_space<vmem>>, vector<1x8x8xf32>,
    %cst_49 = arith.constant dense<0.000000e+00> : vector<2x4xf32>
    %54 = tpu.matmul %8, %41, %cst_49 {dimension_numbers = #tpu.dot_dimension_numbers<[1], [0], [0], [1], [0, 0, 1, 1], [], []>} : vector<2x4xf32>, vector<4x4xf32>, vector<2x4xf32> -> vector<2x4xf32>
    %cst_50 = arith.constant dense<0.000000e+00> : vector<2x2xf32>
    %55 = tpu.matmul %54, %9, %cst_50 {dimension_numbers = #tpu.dot_dimension_numbers<[1], [0], [0], [1], [0, 0, 1, 1], [], []>} : vector<2x4xf32>, vector<4x2xf32>, vector<2x2xf32> -> vector<2x2xf32>
    %cst_51 = arith.constant dense<0.000000e+00> : vector<4x2xf32>
    %56 = tpu.matmul %14, %55, %cst_51 {dimension_numbers = #tpu.dot_dimension_numbers<[1], [0], [0], [1], [0, 0, 1, 1], [], []>} : vector<4x2xf32>, vector<2x2xf32>, vector<4x2xf32> -> vector<4x2xf32>
    %cst_52 = arith.constant dense<0.000000e+00> : vector<4x4xf32>
    %57 = tpu.matmul %56, %15, %cst_52 {dimension_numbers = #tpu.dot_dimension_numbers<[1], [0], [0], [1], [0, 0, 1, 1], [], []>} : vector<4x2xf32>, vector<2x4xf32>, vector<4x4xf32> -> vector<4x4xf32>
    %58 = arith.subf %41, %57 : vector<4x4xf32>
    %cst_53 = arith.constant 4.000000e+00 : f32
    %59 = vector.broadcast %cst_53 : f32 to vector<4x4xf32>
    %60 = arith.mulf %59, %58 : vector<4x4xf32>
    %cst_54 = arith.constant -1.000000e+00 : f32
    %cst_55 = arith.constant 1.000000e+00 : f32
    %61 = vector.broadcast %cst_54 : f32 to vector<4x4xf32>
    %62 = arith.maximumf %61, %60 : vector<4x4xf32>
    %63 = vector.broadcast %cst_55 : f32 to vector<4x4xf32>
    %64 = arith.minimumf %63, %62 : vector<4x4xf32>
    %c0_56 = arith.constant 0 : index
    %c0_57 = arith.constant 0 : index
    %c0_58 = arith.constant 0 : index
    %65 = vector.load %arg18[%c0_56, %c0_57, %c0_58] : memref<3x4x4xf32, #tpu.memory_space<vmem>>, vector<1x4x4xf32>
    %66 = vector.shape_cast %65 : vector<1x4x4xf32> to vector<4x4xf32>
    %67 = vector.shape_cast %64 : vector<4x4xf32> to vector<1x4x4xf32>
    tpu.vector_store %arg18[%c0_56, %c0_57, %c0_58], %67 {strides = array<i32>} : memref<3x4x4xf32, #tpu.memory_space<vmem>>, vector<1x4x4xf32>,
    %c0_59 = arith.constant 0 : index
    %c0_60 = arith.constant 0 : index
    %c0_61 = arith.constant 0 : index
    %68 = vector.load %arg19[%c0_59, %c0_60, %c0_61] : memref<3x2x2xf32, #tpu.memory_space<vmem>>, vector<1x2x2xf32>
    %69 = vector.shape_cast %68 : vector<1x2x2xf32> to vector<2x2xf32>
    %70 = vector.shape_cast %55 : vector<2x2xf32> to vector<1x2x2xf32>
    tpu.vector_store %arg19[%c0_59, %c0_60, %c0_61], %70 {strides = array<i32>} : memref<3x2x2xf32, #tpu.memory_space<vmem>>, vector<1x2x2xf32>,
    %c3_i32_62 = arith.constant 3 : i32
    %71 = arith.muli %arg0, %c3_i32_62 : i32
    %c1_i32 = arith.constant 1 : i32
    %72 = arith.addi %71, %c1_i32 : i32
    %73 = arith.index_cast %72 : i32 to index
    %74 = memref.load %arg1[%73] : memref<6xf32, #tpu.memory_space<smem>>
    %c1 = arith.constant 1 : index
    %c0_63 = arith.constant 0 : index
    %c0_64 = arith.constant 0 : index
    %75 = vector.load %arg2[%c1, %c0_63, %c0_64] : memref<3x16x16xf32, #tpu.memory_space<vmem>>, vector<1x16x16xf32>
    %76 = vector.shape_cast %75 : vector<1x16x16xf32> to vector<16x16xf32>
    %77 = arith.mulf %1, %76 : vector<16x16xf32>
    %78 = vector.broadcast %74 : f32 to vector<16x16xf32>
    %79 = arith.mulf %3, %78 : vector<16x16xf32>
    %80 = arith.addf %77, %79 : vector<16x16xf32>
    %cst_65 = arith.constant dense<0.000000e+00> : vector<8x16xf32>
    %81 = tpu.matmul %4, %80, %cst_65 {dimension_numbers = #tpu.dot_dimension_numbers<[1], [0], [0], [1], [0, 0, 1, 1], [], []>} : vector<8x16xf32>, vector<16x16xf32>, vector<8x16xf32> -> vector<8x16xf32>
    %cst_66 = arith.constant dense<0.000000e+00> : vector<8x8xf32>
    %82 = tpu.matmul %81, %5, %cst_66 {dimension_numbers = #tpu.dot_dimension_numbers<[1], [0], [0], [1], [0, 0, 1, 1], [], []>} : vector<8x16xf32>, vector<16x8xf32>, vector<8x8xf32> -> vector<8x8xf32>
    %cst_67 = arith.constant dense<0.000000e+00> : vector<16x8xf32>
    %83 = tpu.matmul %10, %82, %cst_67 {dimension_numbers = #tpu.dot_dimension_numbers<[1], [0], [0], [1], [0, 0, 1, 1], [], []>} : vector<16x8xf32>, vector<8x8xf32>, vector<16x8xf32> -> vector<16x8xf32>
    %cst_68 = arith.constant dense<0.000000e+00> : vector<16x16xf32>
    %84 = tpu.matmul %83, %11, %cst_68 {dimension_numbers = #tpu.dot_dimension_numbers<[1], [0], [0], [1], [0, 0, 1, 1], [], []>} : vector<16x8xf32>, vector<8x16xf32>, vector<16x16xf32> -> vector<16x16xf32>
    %85 = arith.subf %80, %84 : vector<16x16xf32>
    %cst_69 = arith.constant 4.000000e+00 : f32
    %86 = vector.broadcast %cst_69 : f32 to vector<16x16xf32>
    %87 = arith.mulf %86, %85 : vector<16x16xf32>
    %cst_70 = arith.constant -1.000000e+00 : f32
    %cst_71 = arith.constant 1.000000e+00 : f32
    %88 = vector.broadcast %cst_70 : f32 to vector<16x16xf32>
    %89 = arith.maximumf %88, %87 : vector<16x16xf32>
    %90 = vector.broadcast %cst_71 : f32 to vector<16x16xf32>
    %91 = arith.minimumf %90, %89 : vector<16x16xf32>
    %c1_72 = arith.constant 1 : index
    %c0_73 = arith.constant 0 : index
    %c0_74 = arith.constant 0 : index
    %92 = vector.load %arg16[%c1_72, %c0_73, %c0_74] : memref<3x16x16xf32, #tpu.memory_space<vmem>>, vector<1x16x16xf32>
    %93 = vector.shape_cast %92 : vector<1x16x16xf32> to vector<16x16xf32>
    %94 = vector.shape_cast %91 : vector<16x16xf32> to vector<1x16x16xf32>
    tpu.vector_store %arg16[%c1_72, %c0_73, %c0_74], %94 {strides = array<i32>} : memref<3x16x16xf32, #tpu.memory_space<vmem>>, vector<1x16x16xf32>,
    %cst_75 = arith.constant dense<0.000000e+00> : vector<4x8xf32>
    %95 = tpu.matmul %6, %82, %cst_75 {dimension_numbers = #tpu.dot_dimension_numbers<[1], [0], [0], [1], [0, 0, 1, 1], [], []>} : vector<4x8xf32>, vector<8x8xf32>, vector<4x8xf32> -> vector<4x8xf32>
    %cst_76 = arith.constant dense<0.000000e+00> : vector<4x4xf32>
    %96 = tpu.matmul %95, %7, %cst_76 {dimension_numbers = #tpu.dot_dimension_numbers<[1], [0], [0], [1], [0, 0, 1, 1], [], []>} : vector<4x8xf32>, vector<8x4xf32>, vector<4x4xf32> -> vector<4x4xf32>
    %cst_77 = arith.constant dense<0.000000e+00> : vector<8x4xf32>
    %97 = tpu.matmul %12, %96, %cst_77 {dimension_numbers = #tpu.dot_dimension_numbers<[1], [0], [0], [1], [0, 0, 1, 1], [], []>} : vector<8x4xf32>, vector<4x4xf32>, vector<8x4xf32> -> vector<8x4xf32>
    %cst_78 = arith.constant dense<0.000000e+00> : vector<8x8xf32>
    %98 = tpu.matmul %97, %13, %cst_78 {dimension_numbers = #tpu.dot_dimension_numbers<[1], [0], [0], [1], [0, 0, 1, 1], [], []>} : vector<8x4xf32>, vector<4x8xf32>, vector<8x8xf32> -> vector<8x8xf32>
    %99 = arith.subf %82, %98 : vector<8x8xf32>
    %cst_79 = arith.constant 4.000000e+00 : f32
    %100 = vector.broadcast %cst_79 : f32 to vector<8x8xf32>
    %101 = arith.mulf %100, %99 : vector<8x8xf32>
    %cst_80 = arith.constant -1.000000e+00 : f32
    %cst_81 = arith.constant 1.000000e+00 : f32
    %102 = vector.broadcast %cst_80 : f32 to vector<8x8xf32>
    %103 = arith.maximumf %102, %101 : vector<8x8xf32>
    %104 = vector.broadcast %cst_81 : f32 to vector<8x8xf32>
    %105 = arith.minimumf %104, %103 : vector<8x8xf32>
    %c1_82 = arith.constant 1 : index
    %c0_83 = arith.constant 0 : index
    %c0_84 = arith.constant 0 : index
    %106 = vector.load %arg17[%c1_82, %c0_83, %c0_84] : memref<3x8x8xf32, #tpu.memory_space<vmem>>, vector<1x8x8xf32>
    %107 = vector.shape_cast %106 : vector<1x8x8xf32> to vector<8x8xf32>
    %108 = vector.shape_cast %105 : vector<8x8xf32> to vector<1x8x8xf32>
    tpu.vector_store %arg17[%c1_82, %c0_83, %c0_84], %108 {strides = array<i32>} : memref<3x8x8xf32, #tpu.memory_space<vmem>>, vector<1x8x8xf32>,
    %cst_85 = arith.constant dense<0.000000e+00> : vector<2x4xf32>
    %109 = tpu.matmul %8, %96, %cst_85 {dimension_numbers = #tpu.dot_dimension_numbers<[1], [0], [0], [1], [0, 0, 1, 1], [], []>} : vector<2x4xf32>, vector<4x4xf32>, vector<2x4xf32> -> vector<2x4xf32>
    %cst_86 = arith.constant dense<0.000000e+00> : vector<2x2xf32>
    %110 = tpu.matmul %109, %9, %cst_86 {dimension_numbers = #tpu.dot_dimension_numbers<[1], [0], [0], [1], [0, 0, 1, 1], [], []>} : vector<2x4xf32>, vector<4x2xf32>, vector<2x2xf32> -> vector<2x2xf32>
    %cst_87 = arith.constant dense<0.000000e+00> : vector<4x2xf32>
    %111 = tpu.matmul %14, %110, %cst_87 {dimension_numbers = #tpu.dot_dimension_numbers<[1], [0], [0], [1], [0, 0, 1, 1], [], []>} : vector<4x2xf32>, vector<2x2xf32>, vector<4x2xf32> -> vector<4x2xf32>
    %cst_88 = arith.constant dense<0.000000e+00> : vector<4x4xf32>
    %112 = tpu.matmul %111, %15, %cst_88 {dimension_numbers = #tpu.dot_dimension_numbers<[1], [0], [0], [1], [0, 0, 1, 1], [], []>} : vector<4x2xf32>, vector<2x4xf32>, vector<4x4xf32> -> vector<4x4xf32>
    %113 = arith.subf %96, %112 : vector<4x4xf32>
    %cst_89 = arith.constant 4.000000e+00 : f32
    %114 = vector.broadcast %cst_89 : f32 to vector<4x4xf32>
    %115 = arith.mulf %114, %113 : vector<4x4xf32>
    %cst_90 = arith.constant -1.000000e+00 : f32
    %cst_91 = arith.constant 1.000000e+00 : f32
    %116 = vector.broadcast %cst_90 : f32 to vector<4x4xf32>
    %117 = arith.maximumf %116, %115 : vector<4x4xf32>
    %118 = vector.broadcast %cst_91 : f32 to vector<4x4xf32>
    %119 = arith.minimumf %118, %117 : vector<4x4xf32>
    %c1_92 = arith.constant 1 : index
    %c0_93 = arith.constant 0 : index
    %c0_94 = arith.constant 0 : index
    %120 = vector.load %arg18[%c1_92, %c0_93, %c0_94] : memref<3x4x4xf32, #tpu.memory_space<vmem>>, vector<1x4x4xf32>
    %121 = vector.shape_cast %120 : vector<1x4x4xf32> to vector<4x4xf32>
    %122 = vector.shape_cast %119 : vector<4x4xf32> to vector<1x4x4xf32>
    tpu.vector_store %arg18[%c1_92, %c0_93, %c0_94], %122 {strides = array<i32>} : memref<3x4x4xf32, #tpu.memory_space<vmem>>, vector<1x4x4xf32>,
    %c1_95 = arith.constant 1 : index
    %c0_96 = arith.constant 0 : index
    %c0_97 = arith.constant 0 : index
    %123 = vector.load %arg19[%c1_95, %c0_96, %c0_97] : memref<3x2x2xf32, #tpu.memory_space<vmem>>, vector<1x2x2xf32>
    %124 = vector.shape_cast %123 : vector<1x2x2xf32> to vector<2x2xf32>
    %125 = vector.shape_cast %110 : vector<2x2xf32> to vector<1x2x2xf32>
    tpu.vector_store %arg19[%c1_95, %c0_96, %c0_97], %125 {strides = array<i32>} : memref<3x2x2xf32, #tpu.memory_space<vmem>>, vector<1x2x2xf32>,
    %c3_i32_98 = arith.constant 3 : i32
    %126 = arith.muli %arg0, %c3_i32_98 : i32
    %c2_i32 = arith.constant 2 : i32
    %127 = arith.addi %126, %c2_i32 : i32
    %128 = arith.index_cast %127 : i32 to index
    %129 = memref.load %arg1[%128] : memref<6xf32, #tpu.memory_space<smem>>
    %c2 = arith.constant 2 : index
    %c0_99 = arith.constant 0 : index
    %c0_100 = arith.constant 0 : index
    %130 = vector.load %arg2[%c2, %c0_99, %c0_100] : memref<3x16x16xf32, #tpu.memory_space<vmem>>, vector<1x16x16xf32>
    %131 = vector.shape_cast %130 : vector<1x16x16xf32> to vector<16x16xf32>
    %132 = arith.mulf %1, %131 : vector<16x16xf32>
    %133 = vector.broadcast %129 : f32 to vector<16x16xf32>
    %134 = arith.mulf %3, %133 : vector<16x16xf32>
    %135 = arith.addf %132, %134 : vector<16x16xf32>
    %cst_101 = arith.constant dense<0.000000e+00> : vector<8x16xf32>
    %136 = tpu.matmul %4, %135, %cst_101 {dimension_numbers = #tpu.dot_dimension_numbers<[1], [0], [0], [1], [0, 0, 1, 1], [], []>} : vector<8x16xf32>, vector<16x16xf32>, vector<8x16xf32> -> vector<8x16xf32>
    %cst_102 = arith.constant dense<0.000000e+00> : vector<8x8xf32>
    %137 = tpu.matmul %136, %5, %cst_102 {dimension_numbers = #tpu.dot_dimension_numbers<[1], [0], [0], [1], [0, 0, 1, 1], [], []>} : vector<8x16xf32>, vector<16x8xf32>, vector<8x8xf32> -> vector<8x8xf32>
    %cst_103 = arith.constant dense<0.000000e+00> : vector<16x8xf32>
    %138 = tpu.matmul %10, %137, %cst_103 {dimension_numbers = #tpu.dot_dimension_numbers<[1], [0], [0], [1], [0, 0, 1, 1], [], []>} : vector<16x8xf32>, vector<8x8xf32>, vector<16x8xf32> -> vector<16x8xf32>
    %cst_104 = arith.constant dense<0.000000e+00> : vector<16x16xf32>
    %139 = tpu.matmul %138, %11, %cst_104 {dimension_numbers = #tpu.dot_dimension_numbers<[1], [0], [0], [1], [0, 0, 1, 1], [], []>} : vector<16x8xf32>, vector<8x16xf32>, vector<16x16xf32> -> vector<16x16xf32>
    %140 = arith.subf %135, %139 : vector<16x16xf32>
    %cst_105 = arith.constant 4.000000e+00 : f32
    %141 = vector.broadcast %cst_105 : f32 to vector<16x16xf32>
    %142 = arith.mulf %141, %140 : vector<16x16xf32>
    %cst_106 = arith.constant -1.000000e+00 : f32
    %cst_107 = arith.constant 1.000000e+00 : f32
    %143 = vector.broadcast %cst_106 : f32 to vector<16x16xf32>
    %144 = arith.maximumf %143, %142 : vector<16x16xf32>
    %145 = vector.broadcast %cst_107 : f32 to vector<16x16xf32>
    %146 = arith.minimumf %145, %144 : vector<16x16xf32>
    %c2_108 = arith.constant 2 : index
    %c0_109 = arith.constant 0 : index
    %c0_110 = arith.constant 0 : index
    %147 = vector.load %arg16[%c2_108, %c0_109, %c0_110] : memref<3x16x16xf32, #tpu.memory_space<vmem>>, vector<1x16x16xf32>
    %148 = vector.shape_cast %147 : vector<1x16x16xf32> to vector<16x16xf32>
    %149 = vector.shape_cast %146 : vector<16x16xf32> to vector<1x16x16xf32>
    tpu.vector_store %arg16[%c2_108, %c0_109, %c0_110], %149 {strides = array<i32>} : memref<3x16x16xf32, #tpu.memory_space<vmem>>, vector<1x16x16xf32>,
    %cst_111 = arith.constant dense<0.000000e+00> : vector<4x8xf32>
    %150 = tpu.matmul %6, %137, %cst_111 {dimension_numbers = #tpu.dot_dimension_numbers<[1], [0], [0], [1], [0, 0, 1, 1], [], []>} : vector<4x8xf32>, vector<8x8xf32>, vector<4x8xf32> -> vector<4x8xf32>
    %cst_112 = arith.constant dense<0.000000e+00> : vector<4x4xf32>
    %151 = tpu.matmul %150, %7, %cst_112 {dimension_numbers = #tpu.dot_dimension_numbers<[1], [0], [0], [1], [0, 0, 1, 1], [], []>} : vector<4x8xf32>, vector<8x4xf32>, vector<4x4xf32> -> vector<4x4xf32>
    %cst_113 = arith.constant dense<0.000000e+00> : vector<8x4xf32>
    %152 = tpu.matmul %12, %151, %cst_113 {dimension_numbers = #tpu.dot_dimension_numbers<[1], [0], [0], [1], [0, 0, 1, 1], [], []>} : vector<8x4xf32>, vector<4x4xf32>, vector<8x4xf32> -> vector<8x4xf32>
    %cst_114 = arith.constant dense<0.000000e+00> : vector<8x8xf32>
    %153 = tpu.matmul %152, %13, %cst_114 {dimension_numbers = #tpu.dot_dimension_numbers<[1], [0], [0], [1], [0, 0, 1, 1], [], []>} : vector<8x4xf32>, vector<4x8xf32>, vector<8x8xf32> -> vector<8x8xf32>
    %154 = arith.subf %137, %153 : vector<8x8xf32>
    %cst_115 = arith.constant 4.000000e+00 : f32
    %155 = vector.broadcast %cst_115 : f32 to vector<8x8xf32>
    %156 = arith.mulf %155, %154 : vector<8x8xf32>
    %cst_116 = arith.constant -1.000000e+00 : f32
    %cst_117 = arith.constant 1.000000e+00 : f32
    %157 = vector.broadcast %cst_116 : f32 to vector<8x8xf32>
    %158 = arith.maximumf %157, %156 : vector<8x8xf32>
    %159 = vector.broadcast %cst_117 : f32 to vector<8x8xf32>
    %160 = arith.minimumf %159, %158 : vector<8x8xf32>
    %c2_118 = arith.constant 2 : index
    %c0_119 = arith.constant 0 : index
    %c0_120 = arith.constant 0 : index
    %161 = vector.load %arg17[%c2_118, %c0_119, %c0_120] : memref<3x8x8xf32, #tpu.memory_space<vmem>>, vector<1x8x8xf32>
    %162 = vector.shape_cast %161 : vector<1x8x8xf32> to vector<8x8xf32>
    %163 = vector.shape_cast %160 : vector<8x8xf32> to vector<1x8x8xf32>
    tpu.vector_store %arg17[%c2_118, %c0_119, %c0_120], %163 {strides = array<i32>} : memref<3x8x8xf32, #tpu.memory_space<vmem>>, vector<1x8x8xf32>,
    %cst_121 = arith.constant dense<0.000000e+00> : vector<2x4xf32>
    %164 = tpu.matmul %8, %151, %cst_121 {dimension_numbers = #tpu.dot_dimension_numbers<[1], [0], [0], [1], [0, 0, 1, 1], [], []>} : vector<2x4xf32>, vector<4x4xf32>, vector<2x4xf32> -> vector<2x4xf32>
    %cst_122 = arith.constant dense<0.000000e+00> : vector<2x2xf32>
    %165 = tpu.matmul %164, %9, %cst_122 {dimension_numbers = #tpu.dot_dimension_numbers<[1], [0], [0], [1], [0, 0, 1, 1], [], []>} : vector<2x4xf32>, vector<4x2xf32>, vector<2x2xf32> -> vector<2x2xf32>
    %cst_123 = arith.constant dense<0.000000e+00> : vector<4x2xf32>
    %166 = tpu.matmul %14, %165, %cst_123 {dimension_numbers = #tpu.dot_dimension_numbers<[1], [0], [0], [1], [0, 0, 1, 1], [], []>} : vector<4x2xf32>, vector<2x2xf32>, vector<4x2xf32> -> vector<4x2xf32>
    %cst_124 = arith.constant dense<0.000000e+00> : vector<4x4xf32>
    %167 = tpu.matmul %166, %15, %cst_124 {dimension_numbers = #tpu.dot_dimension_numbers<[1], [0], [0], [1], [0, 0, 1, 1], [], []>} : vector<4x2xf32>, vector<2x4xf32>, vector<4x4xf32> -> vector<4x4xf32>
    %168 = arith.subf %151, %167 : vector<4x4xf32>
    %cst_125 = arith.constant 4.000000e+00 : f32
    %169 = vector.broadcast %cst_125 : f32 to vector<4x4xf32>
    %170 = arith.mulf %169, %168 : vector<4x4xf32>
    %cst_126 = arith.constant -1.000000e+00 : f32
    %cst_127 = arith.constant 1.000000e+00 : f32
    %171 = vector.broadcast %cst_126 : f32 to vector<4x4xf32>
    %172 = arith.maximumf %171, %170 : vector<4x4xf32>
    %173 = vector.broadcast %cst_127 : f32 to vector<4x4xf32>
    %174 = arith.minimumf %173, %172 : vector<4x4xf32>
    %c2_128 = arith.constant 2 : index
    %c0_129 = arith.constant 0 : index
    %c0_130 = arith.constant 0 : index
    %175 = vector.load %arg18[%c2_128, %c0_129, %c0_130] : memref<3x4x4xf32, #tpu.memory_space<vmem>>, vector<1x4x4xf32>
    %176 = vector.shape_cast %175 : vector<1x4x4xf32> to vector<4x4xf32>
    %177 = vector.shape_cast %174 : vector<4x4xf32> to vector<1x4x4xf32>
    tpu.vector_store %arg18[%c2_128, %c0_129, %c0_130], %177 {strides = array<i32>} : memref<3x4x4xf32, #tpu.memory_space<vmem>>, vector<1x4x4xf32>,
    %c2_131 = arith.constant 2 : index
    %c0_132 = arith.constant 0 : index
    %c0_133 = arith.constant 0 : index
    %178 = vector.load %arg19[%c2_131, %c0_132, %c0_133] : memref<3x2x2xf32, #tpu.memory_space<vmem>>, vector<1x2x2xf32>
    %179 = vector.shape_cast %178 : vector<1x2x2xf32> to vector<2x2xf32>
    %180 = vector.shape_cast %165 : vector<2x2xf32> to vector<1x2x2xf32>
    tpu.vector_store %arg19[%c2_131, %c0_132, %c0_133], %180 {strides = array<i32>} : memref<3x2x2xf32, #tpu.memory_space<vmem>>, vector<1x2x2xf32>,
    return
  }
  func.func @transform_0(%arg0: i32) -> i32 {
    %c0_i32 = arith.constant 0 : i32
    %c0_i32_0 = arith.constant 0 : i32
    return %c0_i32 : i32
  }
  func.func @transform_1(%arg0: i32) -> (i32, i32, i32) {
    %c0_i32 = arith.constant 0 : i32
    %c0_i32_0 = arith.constant 0 : i32
    %c0_i32_1 = arith.constant 0 : i32
    return %arg0, %c0_i32, %c0_i32_0 : i32, i32, i32
  }
  func.func @transform_2(%arg0: i32) -> (i32, i32, i32) {
    %c0_i32 = arith.constant 0 : i32
    %c0_i32_0 = arith.constant 0 : i32
    %c0_i32_1 = arith.constant 0 : i32
    return %arg0, %c0_i32, %c0_i32_0 : i32, i32, i32
  }
  func.func @transform_3(%arg0: i32) -> (i32, i32) {
    %c0_i32 = arith.constant 0 : i32
    %c0_i32_0 = arith.constant 0 : i32
    %c0_i32_1 = arith.constant 0 : i32
    return %c0_i32, %c0_i32_0 : i32, i32
  }
  func.func @transform_4(%arg0: i32) -> (i32, i32) {
    %c0_i32 = arith.constant 0 : i32
    %c0_i32_0 = arith.constant 0 : i32
    %c0_i32_1 = arith.constant 0 : i32
    return %c0_i32, %c0_i32_0 : i32, i32
  }
  func.func @transform_5(%arg0: i32) -> (i32, i32) {
    %c0_i32 = arith.constant 0 : i32
    %c0_i32_0 = arith.constant 0 : i32
    %c0_i32_1 = arith.constant 0 : i32
    return %c0_i32, %c0_i32_0 : i32, i32
  }
  func.func @transform_6(%arg0: i32) -> (i32, i32) {
    %c0_i32 = arith.constant 0 : i32
    %c0_i32_0 = arith.constant 0 : i32
    %c0_i32_1 = arith.constant 0 : i32
    return %c0_i32, %c0_i32_0 : i32, i32
  }
  func.func @transform_7(%arg0: i32) -> (i32, i32) {
    %c0_i32 = arith.constant 0 : i32
    %c0_i32_0 = arith.constant 0 : i32
    %c0_i32_1 = arith.constant 0 : i32
    return %c0_i32, %c0_i32_0 : i32, i32
  }
  func.func @transform_8(%arg0: i32) -> (i32, i32) {
    %c0_i32 = arith.constant 0 : i32
    %c0_i32_0 = arith.constant 0 : i32
    %c0_i32_1 = arith.constant 0 : i32
    return %c0_i32, %c0_i32_0 : i32, i32
  }
  func.func @transform_9(%arg0: i32) -> (i32, i32) {
    %c0_i32 = arith.constant 0 : i32
    %c0_i32_0 = arith.constant 0 : i32
    %c0_i32_1 = arith.constant 0 : i32
    return %c0_i32, %c0_i32_0 : i32, i32
  }
  func.func @transform_10(%arg0: i32) -> (i32, i32) {
    %c0_i32 = arith.constant 0 : i32
    %c0_i32_0 = arith.constant 0 : i32
    %c0_i32_1 = arith.constant 0 : i32
    return %c0_i32, %c0_i32_0 : i32, i32
  }
  func.func @transform_11(%arg0: i32) -> (i32, i32) {
    %c0_i32 = arith.constant 0 : i32
    %c0_i32_0 = arith.constant 0 : i32
    %c0_i32_1 = arith.constant 0 : i32
    return %c0_i32, %c0_i32_0 : i32, i32
  }
  func.func @transform_12(%arg0: i32) -> (i32, i32) {
    %c0_i32 = arith.constant 0 : i32
    %c0_i32_0 = arith.constant 0 : i32
    %c0_i32_1 = arith.constant 0 : i32
    return %c0_i32, %c0_i32_0 : i32, i32
  }
  func.func @transform_13(%arg0: i32) -> (i32, i32) {
    %c0_i32 = arith.constant 0 : i32
    %c0_i32_0 = arith.constant 0 : i32
    %c0_i32_1 = arith.constant 0 : i32
    return %c0_i32, %c0_i32_0 : i32, i32
  }
  func.func @transform_14(%arg0: i32) -> (i32, i32) {
    %c0_i32 = arith.constant 0 : i32
    %c0_i32_0 = arith.constant 0 : i32
    %c0_i32_1 = arith.constant 0 : i32
    return %c0_i32, %c0_i32_0 : i32, i32
  }
  func.func @transform_15(%arg0: i32) -> (i32, i32, i32) {
    %c0_i32 = arith.constant 0 : i32
    %c0_i32_0 = arith.constant 0 : i32
    %c0_i32_1 = arith.constant 0 : i32
    return %arg0, %c0_i32, %c0_i32_0 : i32, i32, i32
  }
  func.func @transform_16(%arg0: i32) -> (i32, i32, i32) {
    %c0_i32 = arith.constant 0 : i32
    %c0_i32_0 = arith.constant 0 : i32
    %c0_i32_1 = arith.constant 0 : i32
    return %arg0, %c0_i32, %c0_i32_0 : i32, i32, i32
  }
  func.func @transform_17(%arg0: i32) -> (i32, i32, i32) {
    %c0_i32 = arith.constant 0 : i32
    %c0_i32_0 = arith.constant 0 : i32
    %c0_i32_1 = arith.constant 0 : i32
    return %arg0, %c0_i32, %c0_i32_0 : i32, i32, i32
  }
  func.func @transform_18(%arg0: i32) -> (i32, i32, i32) {
    %c0_i32 = arith.constant 0 : i32
    %c0_i32_0 = arith.constant 0 : i32
    %c0_i32_1 = arith.constant 0 : i32
    return %arg0, %c0_i32, %c0_i32_0 : i32, i32, i32
  }
}

</mosaic_0001>

<llo_original>
// kernel: neg.4
$region0: #{neg.4}
  #allocation2 [shape = 's32[1]{0}', space=sflag, size = 0x4, scoped, tag = 'scoped memory for neg.4']
  %s0 = inlined_call_operand.hbm [shape: f32[2,3,16,16], index: 0, kind: input, shape index: {}]
  %s1 = inlined_call_operand.vmem [shape: f32[2,3,16,16], index: 1, kind: output, shape index: {}]
  $region1: #{neg.4} parent=0
    #allocation0 [shape = 'u8[49152]{0}', space=vmem, size = 0xc000, scoped, tag = 'operand span for operand 0']
    #allocation1 [shape = 's32[1]{0}', space=sflag, size = 0x4, scoped, tag = 'scoped memory for neg.4']
    %2 = vsyncpa [#allocation1], 0
    %s4 = ssub.s32 1536, 1536
    %5 = vsyncadd [#allocation1], %s4
    %s6 = sshll.u32 [#allocation0], 4
    %s7 = int_to_ptr.vmem [resolvable:$true] %s6
    %12 = dma.hbm_to_vmem [thread:$0]  %s0, 1536, %s7, [#allocation1], 128, 128, 8
    %13 = dma.done [#allocation1], 1536
    %v14 = vld [vmem:[#allocation0] sm:$0xff]
    %15 = xla_tuple %v14
    %16 = xla_tuple %15
    %v17 = vxor.u32 %v14, 2147483648
    %18 = xla_tuple %v17
    %19 = vst [vmem:[%s1] sm:$0xff] %v17
    %s20 = scalar_lea.vmem [#allocation0], 48
    %v21 = vld [vmem:[%s20] sm:$0xff]
    %22 = xla_tuple %v21
    %23 = xla_tuple %22
    %v24 = vxor.u32 %v21, 2147483648
    %25 = xla_tuple %v24
    %s26 = scalar_lea.vmem %s1, 48
    %27 = vst [vmem:[%s26] sm:$0xff] %v24
    %s28 = scalar_lea.vmem [#allocation0], 16
    %v29 = vld [vmem:[%s28] sm:$0xff]
    %30 = xla_tuple %v29
    %31 = xla_tuple %30
    %v32 = vxor.u32 %v29, 2147483648
    %33 = xla_tuple %v32
    %s34 = scalar_lea.vmem %s1, 16
    %35 = vst [vmem:[%s34] sm:$0xff] %v32
    %s36 = scalar_lea.vmem [#allocation0], 64
    %v37 = vld [vmem:[%s36] sm:$0xff]
    %38 = xla_tuple %v37
    %39 = xla_tuple %38
    %v40 = vxor.u32 %v37, 2147483648
    %41 = xla_tuple %v40
    %s42 = scalar_lea.vmem %s1, 64
    %43 = vst [vmem:[%s42] sm:$0xff] %v40
    %s44 = scalar_lea.vmem [#allocation0], 32
    %v45 = vld [vmem:[%s44] sm:$0xff]
    %46 = xla_tuple %v45
    %47 = xla_tuple %46
    %v48 = vxor.u32 %v45, 2147483648
    %49 = xla_tuple %v48
    %s50 = scalar_lea.vmem %s1, 32
    %51 = vst [vmem:[%s50] sm:$0xff] %v48
    %s52 = scalar_lea.vmem [#allocation0], 80
    %v53 = vld [vmem:[%s52] sm:$0xff]
    %54 = xla_tuple %v53
    %55 = xla_tuple %54
    %v56 = vxor.u32 %v53, 2147483648
    %57 = xla_tuple %v56
    %s58 = scalar_lea.vmem %s1, 80
    %59 = vst [vmem:[%s58] sm:$0xff] %v56
    %s60 = scalar_lea.vmem [#allocation0], 8
    %v61 = vld [vmem:[%s60] sm:$0xff]
    %62 = xla_tuple %v61
    %63 = xla_tuple %62
    %v64 = vxor.u32 %v61, 2147483648
    %65 = xla_tuple %v64
    %s66 = scalar_lea.vmem %s1, 8
    %67 = vst [vmem:[%s66] sm:$0xff] %v64
    %s68 = scalar_lea.vmem [#allocation0], 56
    %v69 = vld [vmem:[%s68] sm:$0xff]
    %70 = xla_tuple %v69
    %71 = xla_tuple %70
    %v72 = vxor.u32 %v69, 2147483648
    %73 = xla_tuple %v72
    %s74 = scalar_lea.vmem %s1, 56
    %75 = vst [vmem:[%s74] sm:$0xff] %v72
    %s76 = scalar_lea.vmem [#allocation0], 24
    %v77 = vld [vmem:[%s76] sm:$0xff]
    %78 = xla_tuple %v77
    %79 = xla_tuple %78
    %v80 = vxor.u32 %v77, 2147483648
    %81 = xla_tuple %v80
    %s82 = scalar_lea.vmem %s1, 24
    %83 = vst [vmem:[%s82] sm:$0xff] %v80
    %s84 = scalar_lea.vmem [#allocation0], 72
    %v85 = vld [vmem:[%s84] sm:$0xff]
    %86 = xla_tuple %v85
    %87 = xla_tuple %86
    %v88 = vxor.u32 %v85, 2147483648
    %89 = xla_tuple %v88
    %s90 = scalar_lea.vmem %s1, 72
    %91 = vst [vmem:[%s90] sm:$0xff] %v88
    %s92 = scalar_lea.vmem [#allocation0], 40
    %v93 = vld [vmem:[%s92] sm:$0xff]
    %94 = xla_tuple %v93
    %95 = xla_tuple %94
    %v96 = vxor.u32 %v93, 2147483648
    %97 = xla_tuple %v96
    %s98 = scalar_lea.vmem %s1, 40
    %99 = vst [vmem:[%s98] sm:$0xff] %v96
    %s100 = scalar_lea.vmem [#allocation0], 88
    %v101 = vld [vmem:[%s100] sm:$0xff]
    %102 = xla_tuple %v101
    %103 = xla_tuple %102
    %v104 = vxor.u32 %v101, 2147483648
    %105 = xla_tuple %v104
    %s106 = scalar_lea.vmem %s1, 88
    %107 = vst [vmem:[%s106] sm:$0xff] %v104
    %108 = vsyncpa [#allocation1], 1

// kernel: lpls_pyramid_forward.1
$region0: #{lpls_pyramid_forward.1}
  #allocation0 [shape = 'u32[]', space=smem, size = 0x4, offset = 0x4, fixed_abs, tag = 'smem constant byte address 0x4 - core index']
  #allocation1 [shape = 'u32[144,128]{1,0:T(1,128)}', space=vmem, size = 0x12000, scoped, tag = 'internal scratch']
  %s0 = inlined_call_operand.vmem [shape: f32[6], index: 0, kind: input, shape index: {}]
  %s1 = inlined_call_operand.vmem [shape: f32[6,16,16], index: 1, kind: input, shape index: {}]
  %s2 = inlined_call_operand.vmem [shape: f32[2,16,16], index: 2, kind: input, shape index: {}]
  %s3 = inlined_call_operand.vmem [shape: f32[8,16], index: 3, kind: input, shape index: {}]
  %s4 = inlined_call_operand.vmem [shape: f32[16,8], index: 4, kind: input, shape index: {}]
  %s5 = inlined_call_operand.vmem [shape: f32[4,8], index: 5, kind: input, shape index: {}]
  %s6 = inlined_call_operand.vmem [shape: f32[8,4], index: 6, kind: input, shape index: {}]
  %s7 = inlined_call_operand.vmem [shape: f32[2,4], index: 7, kind: input, shape index: {}]
  %s8 = inlined_call_operand.vmem [shape: f32[4,2], index: 8, kind: input, shape index: {}]
  %s9 = inlined_call_operand.vmem [shape: f32[16,8], index: 9, kind: input, shape index: {}]
  %s10 = inlined_call_operand.vmem [shape: f32[8,16], index: 10, kind: input, shape index: {}]
  %s11 = inlined_call_operand.vmem [shape: f32[8,4], index: 11, kind: input, shape index: {}]
  %s12 = inlined_call_operand.vmem [shape: f32[4,8], index: 12, kind: input, shape index: {}]
  %s13 = inlined_call_operand.vmem [shape: f32[4,2], index: 13, kind: input, shape index: {}]
  %s14 = inlined_call_operand.vmem [shape: f32[2,4], index: 14, kind: input, shape index: {}]
  %s15 = inlined_call_operand.hbm [shape: f32[6,16,16], index: 15, kind: output, shape index: {0}]
  %s16 = inlined_call_operand.hbm [shape: f32[6,8,8], index: 16, kind: output, shape index: {1}]
  %s17 = inlined_call_operand.hbm [shape: f32[6,4,4], index: 17, kind: output, shape index: {2}]
  %s18 = inlined_call_operand.vmem [shape: f32[6,2,2], index: 18, kind: output, shape index: {3}]
  %19 = xla_tuple %s15, %s16, %s17, %s18
  %s20 = sld [smem:[#allocation0]]
  $region121: #{lpls_pyramid_forward.1} parent=0
    _
  %s22 = ssub.s32 1, %s20
  %s23 = scalar_select 0, %s22, %s20
  $region1: #{lpls_pyramid_forward.1} parent=0
    #allocation2 [shape = 'u8[512]{0}', space=smem, size = 0x200, scoped, tag = 'input window, operand 0, single buffered']
    #allocation3 [shape = 's32[2]{0}', space=sflag, size = 0x8, scoped, tag = 'scoped memory for lpls_pyramid_forward.1']
    #allocation4 [shape = 's32[2]{0}', space=sflag, size = 0x8, scoped, tag = 'scoped memory for lpls_pyramid_forward.1']
    #allocation5 [shape = 'u8[49152]{0}', space=vmem, size = 0xc000, scoped, tag = 'output window, operand 0']
    #allocation6 [shape = 'u8[24576]{0}', space=vmem, size = 0x6000, scoped, tag = 'output window, operand 1']
    #allocation7 [shape = 's32[2]{0}', space=sflag, size = 0x8, scoped, tag = 'scoped memory for lpls_pyramid_forward.1']
    #allocation8 [shape = 'u8[12288]{0}', space=vmem, size = 0x3000, scoped, tag = 'output window, operand 2']
    %24 = vsyncpa [#allocation4], 0
    %25 = vsyncpa [#allocation3], 0
    %s26 = scalar_lea.sflag [#allocation3], 1
    %27 = vsyncpa %s26, 0
    %28 = vsyncpa [#allocation7], 0
    %s29 = scalar_lea.sflag [#allocation7], 1
    %30 = vsyncpa %s29, 0
    loop: start=0, step=1, limit=4
    $region2: #{lpls_pyramid_forward.1} parent=1 // loop_pre_header
      _
    $region3: #{lpls_pyramid_forward.1} parent=1 // loop_header
      %s32 = sphi 0, %s36
      %p33 = scmp.ge.s32.totalorder %s32, 4
      %s40 = sphi 0, %s40
      %s42 = sphi 0, %s40
      %s43 = sphi 0, %s42
      %s57 = sphi 0, %s43
      %s63 = sphi 0, %s65
      %s66 = sphi 0, %s63
      %s67 = sphi 0, %s66
      %s83 = sphi 0, %s67
      %s89 = sphi 0, %s91
      %s92 = sphi 0, %s89
      %s93 = sphi 0, %s92
      %s109 = sphi 0, %s93
      %s113 = sphi 0, %s113
      %s115 = sphi 0, %s113
      %s116 = sphi 0, %s115
      %s130 = sphi 0, %s116
      %s134 = sphi 0, %s134
      %s136 = sphi 0, %s134
      %s137 = sphi 0, %s136
      %s151 = sphi 0, %s137
      %s155 = sphi 0, %s155
      %s157 = sphi 0, %s155
      %s158 = sphi 0, %s157
      %s172 = sphi 0, %s158
      %s176 = sphi 0, %s176
      %s178 = sphi 0, %s176
      %s179 = sphi 0, %s178
      %s193 = sphi 0, %s179
      %s197 = sphi 0, %s197
      %s199 = sphi 0, %s197
      %s200 = sphi 0, %s199
      %s214 = sphi 0, %s200
      %s218 = sphi 0, %s218
      %s220 = sphi 0, %s218
      %s221 = sphi 0, %s220
      %s235 = sphi 0, %s221
      %s239 = sphi 0, %s239
      %s241 = sphi 0, %s239
      %s242 = sphi 0, %s241
      %s256 = sphi 0, %s242
      %s260 = sphi 0, %s260
      %s262 = sphi 0, %s260
      %s263 = sphi 0, %s262
      %s277 = sphi 0, %s263
      %s281 = sphi 0, %s281
      %s283 = sphi 0, %s281
      %s284 = sphi 0, %s283
      %s298 = sphi 0, %s284
      %s302 = sphi 0, %s302
      %s304 = sphi 0, %s302
      %s305 = sphi 0, %s304
      %s319 = sphi 0, %s305
      %s323 = sphi 0, %s323
      %s325 = sphi 0, %s323
      %s326 = sphi 0, %s325
      %s340 = sphi 0, %s326
      %s344 = sphi 0, %s344
      %s346 = sphi 0, %s344
      %s347 = sphi 0, %s346
      %s361 = sphi 0, %s347
      %s367 = sphi 0, %s369
      %s370 = sphi 0, %s367
      %s371 = sphi 0, %s370
      %s387 = sphi 0, %s371
      %s393 = sphi 0, %s395
      %s396 = sphi 0, %s393
      %s397 = sphi 0, %s396
      %s413 = sphi 0, %s397
      %s419 = sphi 0, %s421
      %s422 = sphi 0, %s419
      %s423 = sphi 0, %s422
      %s439 = sphi 0, %s423
      %s445 = sphi 0, %s447
      %s448 = sphi 0, %s445
      %s449 = sphi 0, %s448
      %s465 = sphi 0, %s449
    $region4: #{lpls_pyramid_forward.1} parent=1 // loop_header_branch
      %35 = sbr.rel (%p33) target = $region8
    $region5: #{lpls_pyramid_forward.1} parent=1 // loop_body
      %s37 = ssub.s32 %s32, 1
      %s38 = ssub.s32 %s32, 2
      %s39 = sadd.s32 %s32, 1
      %s41 = sadd.s32 %s40, 1
      %p44 = scmp.eq.s32.totalorder %s32, 1
      %p45 = scmp.ne.s32.totalorder %s40, %s42
      %p46 = scmp.eq.s32.totalorder %s32, 0
      %p47 = por %p45, %p46
      %p48 = scmp.ne.s32.totalorder %s40, %s42
      %p49 = scmp.eq.s32.totalorder %s37, 1
      %p50 = por %p48, %p49
      %p51 = scmp.ne.s32.totalorder %s42, %s43
      %p52 = scmp.eq.s32.totalorder %s37, 0
      %p53 = por %p51, %p52
      %p54 = scmp.ne.s32.totalorder %s42, %s43
      %p55 = scmp.eq.s32.totalorder %s38, 1
      %p56 = por %p54, %p55
      %p58 = scmp.ne.s32.totalorder %s43, %s57
      %p59 = scmp.eq.s32.totalorder %s38, 0
      %p60 = por %p58, %p59
      %s61 = ssub.s32 %s32, %s39
      %p62 = scmp.eq.s32.totalorder %s61, 0
      %s64 = sadd.s32 %s63, 1
      %s65 = scalar_select %p62, %s63, %s64
      %p68 = pneg %p62
      %p69 = scmp.eq.s32.totalorder %s32, 1
      %p70 = por %p68, %p69
      %p71 = scmp.ne.s32.totalorder %s63, %s66
      %p72 = scmp.eq.s32.totalorder %s32, 0
      %p73 = por %p71, %p72
      %p74 = scmp.ne.s32.totalorder %s63, %s66
      %p75 = scmp.eq.s32.totalorder %s37, 1
      %p76 = por %p74, %p75
      %p77 = scmp.ne.s32.totalorder %s66, %s67
      %p78 = scmp.eq.s32.totalorder %s37, 0
      %p79 = por %p77, %p78
      %p80 = scmp.ne.s32.totalorder %s66, %s67
      %p81 = scmp.eq.s32.totalorder %s38, 1
      %p82 = por %p80, %p81
      %p84 = scmp.ne.s32.totalorder %s67, %s83
      %p85 = scmp.eq.s32.totalorder %s38, 0
      %p86 = por %p84, %p85
      %s87 = ssub.s32 %s32, %s39
      %p88 = scmp.eq.s32.totalorder %s87, 0
      %s90 = sadd.s32 %s89, 1
      %s91 = scalar_select %p88, %s89, %s90
      %p94 = pneg %p88
      %p95 = scmp.eq.s32.totalorder %s32, 1
      %p96 = por %p94, %p95
      %p97 = scmp.ne.s32.totalorder %s89, %s92
      %p98 = scmp.eq.s32.totalorder %s32, 0
      %p99 = por %p97, %p98
      %p100 = scmp.ne.s32.totalorder %s89, %s92
      %p101 = scmp.eq.s32.totalorder %s37, 1
      %p102 = por %p100, %p101
      %p103 = scmp.ne.s32.totalorder %s92, %s93
      %p104 = scmp.eq.s32.totalorder %s37, 0
      %p105 = por %p103, %p104
      %p106 = scmp.ne.s32.totalorder %s92, %s93
      %p107 = scmp.eq.s32.totalorder %s38, 1
      %p108 = por %p106, %p107
      %p110 = scmp.ne.s32.totalorder %s93, %s109
      %p111 = scmp.eq.s32.totalorder %s38, 0
      %p112 = por %p110, %p111
      %s114 = sadd.s32 %s113, 1
      %p117 = scmp.eq.s32.totalorder %s32, 1
      %p118 = scmp.ne.s32.totalorder %s113, %s115
      %p119 = scmp.eq.s32.totalorder %s32, 0
      %p120 = por %p118, %p119
      %p121 = scmp.ne.s32.totalorder %s113, %s115
      %p122 = scmp.eq.s32.totalorder %s37, 1
      %p123 = por %p121, %p122
      %p124 = scmp.ne.s32.totalorder %s115, %s116
      %p125 = scmp.eq.s32.totalorder %s37, 0
      %p126 = por %p124, %p125
      %p127 = scmp.ne.s32.totalorder %s115, %s116
      %p128 = scmp.eq.s32.totalorder %s38, 1
      %p129 = por %p127, %p128
      %p131 = scmp.ne.s32.totalorder %s116, %s130
      %p132 = scmp.eq.s32.totalorder %s38, 0
      %p133 = por %p131, %p132
      %s135 = sadd.s32 %s134, 1
      %p138 = scmp.eq.s32.totalorder %s32, 1
      %p139 = scmp.ne.s32.totalorder %s134, %s136
      %p140 = scmp.eq.s32.totalorder %s32, 0
      %p141 = por %p139, %p140
      %p142 = scmp.ne.s32.totalorder %s134, %s136
      %p143 = scmp.eq.s32.totalorder %s37, 1
      %p144 = por %p142, %p143
      %p145 = scmp.ne.s32.totalorder %s136, %s137
      %p146 = scmp.eq.s32.totalorder %s37, 0
      %p147 = por %p145, %p146
      %p148 = scmp.ne.s32.totalorder %s136, %s137
      %p149 = scmp.eq.s32.totalorder %s38, 1
      %p150 = por %p148, %p149
      %p152 = scmp.ne.s32.totalorder %s137, %s151
      %p153 = scmp.eq.s32.totalorder %s38, 0
      %p154 = por %p152, %p153
      %s156 = sadd.s32 %s155, 1
      %p159 = scmp.eq.s32.totalorder %s32, 1
      %p160 = scmp.ne.s32.totalorder %s155, %s157
      %p161 = scmp.eq.s32.totalorder %s32, 0
      %p162 = por %p160, %p161
      %p163 = scmp.ne.s32.totalorder %s155, %s157
      %p164 = scmp.eq.s32.totalorder %s37, 1
      %p165 = por %p163, %p164
      %p166 = scmp.ne.s32.totalorder %s157, %s158
      %p167 = scmp.eq.s32.totalorder %s37, 0
      %p168 = por %p166, %p167
      %p169 = scmp.ne.s32.totalorder %s157, %s158
      %p170 = scmp.eq.s32.totalorder %s38, 1
      %p171 = por %p169, %p170
      %p173 = scmp.ne.s32.totalorder %s158, %s172
      %p174 = scmp.eq.s32.totalorder %s38, 0
      %p175 = por %p173, %p174
      %s177 = sadd.s32 %s176, 1
      %p180 = scmp.eq.s32.totalorder %s32, 1
      %p181 = scmp.ne.s32.totalorder %s176, %s178
      %p182 = scmp.eq.s32.totalorder %s32, 0
      %p183 = por %p181, %p182
      %p184 = scmp.ne.s32.totalorder %s176, %s178
      %p185 = scmp.eq.s32.totalorder %s37, 1
      %p186 = por %p184, %p185
      %p187 = scmp.ne.s32.totalorder %s178, %s179
      %p188 = scmp.eq.s32.totalorder %s37, 0
      %p189 = por %p187, %p188
      %p190 = scmp.ne.s32.totalorder %s178, %s179
      %p191 = scmp.eq.s32.totalorder %s38, 1
      %p192 = por %p190, %p191
      %p194 = scmp.ne.s32.totalorder %s179, %s193
      %p195 = scmp.eq.s32.totalorder %s38, 0
      %p196 = por %p194, %p195
      %s198 = sadd.s32 %s197, 1
      %p201 = scmp.eq.s32.totalorder %s32, 1
      %p202 = scmp.ne.s32.totalorder %s197, %s199
      %p203 = scmp.eq.s32.totalorder %s32, 0
      %p204 = por %p202, %p203
      %p205 = scmp.ne.s32.totalorder %s197, %s199
      %p206 = scmp.eq.s32.totalorder %s37, 1
      %p207 = por %p205, %p206
      %p208 = scmp.ne.s32.totalorder %s199, %s200
      %p209 = scmp.eq.s32.totalorder %s37, 0
      %p210 = por %p208, %p209
      %p211 = scmp.ne.s32.totalorder %s199, %s200
      %p212 = scmp.eq.s32.totalorder %s38, 1
      %p213 = por %p211, %p212
      %p215 = scmp.ne.s32.totalorder %s200, %s214
      %p216 = scmp.eq.s32.totalorder %s38, 0
      %p217 = por %p215, %p216
      %s219 = sadd.s32 %s218, 1
      %p222 = scmp.eq.s32.totalorder %s32, 1
      %p223 = scmp.ne.s32.totalorder %s218, %s220
      %p224 = scmp.eq.s32.totalorder %s32, 0
      %p225 = por %p223, %p224
      %p226 = scmp.ne.s32.totalorder %s218, %s220
      %p227 = scmp.eq.s32.totalorder %s37, 1
      %p228 = por %p226, %p227
      %p229 = scmp.ne.s32.totalorder %s220, %s221
      %p230 = scmp.eq.s32.totalorder %s37, 0
      %p231 = por %p229, %p230
      %p232 = scmp.ne.s32.totalorder %s220, %s221
      %p233 = scmp.eq.s32.totalorder %s38, 1
      %p234 = por %p232, %p233
      %p236 = scmp.ne.s32.totalorder %s221, %s235
      %p237 = scmp.eq.s32.totalorder %s38, 0
      %p238 = por %p236, %p237
      %s240 = sadd.s32 %s239, 1
      %p243 = scmp.eq.s32.totalorder %s32, 1
      %p244 = scmp.ne.s32.totalorder %s239, %s241
      %p245 = scmp.eq.s32.totalorder %s32, 0
      %p246 = por %p244, %p245
      %p247 = scmp.ne.s32.totalorder %s239, %s241
      %p248 = scmp.eq.s32.totalorder %s37, 1
      %p249 = por %p247, %p248
      %p250 = scmp.ne.s32.totalorder %s241, %s242
      %p251 = scmp.eq.s32.totalorder %s37, 0
      %p252 = por %p250, %p251
      %p253 = scmp.ne.s32.totalorder %s241, %s242
      %p254 = scmp.eq.s32.totalorder %s38, 1
      %p255 = por %p253, %p254
      %p257 = scmp.ne.s32.totalorder %s242, %s256
      %p258 = scmp.eq.s32.totalorder %s38, 0
      %p259 = por %p257, %p258
      %s261 = sadd.s32 %s260, 1
      %p264 = scmp.eq.s32.totalorder %s32, 1
      %p265 = scmp.ne.s32.totalorder %s260, %s262
      %p266 = scmp.eq.s32.totalorder %s32, 0
      %p267 = por %p265, %p266
      %p268 = scmp.ne.s32.totalorder %s260, %s262
      %p269 = scmp.eq.s32.totalorder %s37, 1
      %p270 = por %p268, %p269
      %p271 = scmp.ne.s32.totalorder %s262, %s263
      %p272 = scmp.eq.s32.totalorder %s37, 0
      %p273 = por %p271, %p272
      %p274 = scmp.ne.s32.totalorder %s262, %s263
      %p275 = scmp.eq.s32.totalorder %s38, 1
      %p276 = por %p274, %p275
      %p278 = scmp.ne.s32.totalorder %s263, %s277
      %p279 = scmp.eq.s32.totalorder %s38, 0
      %p280 = por %p278, %p279
      %s282 = sadd.s32 %s281, 1
      %p285 = scmp.eq.s32.totalorder %s32, 1
      %p286 = scmp.ne.s32.totalorder %s281, %s283
      %p287 = scmp.eq.s32.totalorder %s32, 0
      %p288 = por %p286, %p287
      %p289 = scmp.ne.s32.totalorder %s281, %s283
      %p290 = scmp.eq.s32.totalorder %s37, 1
      %p291 = por %p289, %p290
      %p292 = scmp.ne.s32.totalorder %s283, %s284
      %p293 = scmp.eq.s32.totalorder %s37, 0
      %p294 = por %p292, %p293
      %p295 = scmp.ne.s32.totalorder %s283, %s284
      %p296 = scmp.eq.s32.totalorder %s38, 1
      %p297 = por %p295, %p296
      %p299 = scmp.ne.s32.totalorder %s284, %s298
      %p300 = scmp.eq.s32.totalorder %s38, 0
      %p301 = por %p299, %p300
      %s303 = sadd.s32 %s302, 1
      %p306 = scmp.eq.s32.totalorder %s32, 1
      %p307 = scmp.ne.s32.totalorder %s302, %s304
      %p308 = scmp.eq.s32.totalorder %s32, 0
      %p309 = por %p307, %p308
      %p310 = scmp.ne.s32.totalorder %s302, %s304
      %p311 = scmp.eq.s32.totalorder %s37, 1
      %p312 = por %p310, %p311
      %p313 = scmp.ne.s32.totalorder %s304, %s305
      %p314 = scmp.eq.s32.totalorder %s37, 0
      %p315 = por %p313, %p314
      %p316 = scmp.ne.s32.totalorder %s304, %s305
      %p317 = scmp.eq.s32.totalorder %s38, 1
      %p318 = por %p316, %p317
      %p320 = scmp.ne.s32.totalorder %s305, %s319
      %p321 = scmp.eq.s32.totalorder %s38, 0
      %p322 = por %p320, %p321
      %s324 = sadd.s32 %s323, 1
      %p327 = scmp.eq.s32.totalorder %s32, 1
      %p328 = scmp.ne.s32.totalorder %s323, %s325
      %p329 = scmp.eq.s32.totalorder %s32, 0
      %p330 = por %p328, %p329
      %p331 = scmp.ne.s32.totalorder %s323, %s325
      %p332 = scmp.eq.s32.totalorder %s37, 1
      %p333 = por %p331, %p332
      %p334 = scmp.ne.s32.totalorder %s325, %s326
      %p335 = scmp.eq.s32.totalorder %s37, 0
      %p336 = por %p334, %p335
      %p337 = scmp.ne.s32.totalorder %s325, %s326
      %p338 = scmp.eq.s32.totalorder %s38, 1
      %p339 = por %p337, %p338
      %p341 = scmp.ne.s32.totalorder %s326, %s340
      %p342 = scmp.eq.s32.totalorder %s38, 0
      %p343 = por %p341, %p342
      %s345 = sadd.s32 %s344, 1
      %p348 = scmp.eq.s32.totalorder %s32, 1
      %p349 = scmp.ne.s32.totalorder %s344, %s346
      %p350 = scmp.eq.s32.totalorder %s32, 0
      %p351 = por %p349, %p350
      %p352 = scmp.ne.s32.totalorder %s344, %s346
      %p353 = scmp.eq.s32.totalorder %s37, 1
      %p354 = por %p352, %p353
      %p355 = scmp.ne.s32.totalorder %s346, %s347
      %p356 = scmp.eq.s32.totalorder %s37, 0
      %p357 = por %p355, %p356
      %p358 = scmp.ne.s32.totalorder %s346, %s347
      %p359 = scmp.eq.s32.totalorder %s38, 1
      %p360 = por %p358, %p359
      %p362 = scmp.ne.s32.totalorder %s347, %s361
      %p363 = scmp.eq.s32.totalorder %s38, 0
      %p364 = por %p362, %p363
      %s365 = ssub.s32 %s32, %s39
      %p366 = scmp.eq.s32.totalorder %s365, 0
      %s368 = sadd.s32 %s367, 1
      %s369 = scalar_select %p366, %s367, %s368
      %p372 = pneg %p366
      %p373 = scmp.eq.s32.totalorder %s32, 1
      %p374 = por %p372, %p373
      %p375 = scmp.ne.s32.totalorder %s367, %s370
      %p376 = scmp.eq.s32.totalorder %s32, 0
      %p377 = por %p375, %p376
      %p378 = scmp.ne.s32.totalorder %s367, %s370
      %p379 = scmp.eq.s32.totalorder %s37, 1
      %p380 = por %p378, %p379
      %p381 = scmp.ne.s32.totalorder %s370, %s371
      %p382 = scmp.eq.s32.totalorder %s37, 0
      %p383 = por %p381, %p382
      %p384 = scmp.ne.s32.totalorder %s370, %s371
      %p385 = scmp.eq.s32.totalorder %s38, 1
      %p386 = por %p384, %p385
      %p388 = scmp.ne.s32.totalorder %s371, %s387
      %p389 = scmp.eq.s32.totalorder %s38, 0
      %p390 = por %p388, %p389
      %s391 = ssub.s32 %s32, %s39
      %p392 = scmp.eq.s32.totalorder %s391, 0
      %s394 = sadd.s32 %s393, 1
      %s395 = scalar_select %p392, %s393, %s394
      %p398 = pneg %p392
      %p399 = scmp.eq.s32.totalorder %s32, 1
      %p400 = por %p398, %p399
      %p401 = scmp.ne.s32.totalorder %s393, %s396
      %p402 = scmp.eq.s32.totalorder %s32, 0
      %p403 = por %p401, %p402
      %p404 = scmp.ne.s32.totalorder %s393, %s396
      %p405 = scmp.eq.s32.totalorder %s37, 1
      %p406 = por %p404, %p405
      %p407 = scmp.ne.s32.totalorder %s396, %s397
      %p408 = scmp.eq.s32.totalorder %s37, 0
      %p409 = por %p407, %p408
      %p410 = scmp.ne.s32.totalorder %s396, %s397
      %p411 = scmp.eq.s32.totalorder %s38, 1
      %p412 = por %p410, %p411
      %p414 = scmp.ne.s32.totalorder %s397, %s413
      %p415 = scmp.eq.s32.totalorder %s38, 0
      %p416 = por %p414, %p415
      %s417 = ssub.s32 %s32, %s39
      %p418 = scmp.eq.s32.totalorder %s417, 0
      %s420 = sadd.s32 %s419, 1
      %s421 = scalar_select %p418, %s419, %s420
      %p424 = pneg %p418
      %p425 = scmp.eq.s32.totalorder %s32, 1
      %p426 = por %p424, %p425
      %p427 = scmp.ne.s32.totalorder %s419, %s422
      %p428 = scmp.eq.s32.totalorder %s32, 0
      %p429 = por %p427, %p428
      %p430 = scmp.ne.s32.totalorder %s419, %s422
      %p431 = scmp.eq.s32.totalorder %s37, 1
      %p432 = por %p430, %p431
      %p433 = scmp.ne.s32.totalorder %s422, %s423
      %p434 = scmp.eq.s32.totalorder %s37, 0
      %p435 = por %p433, %p434
      %p436 = scmp.ne.s32.totalorder %s422, %s423
      %p437 = scmp.eq.s32.totalorder %s38, 1
      %p438 = por %p436, %p437
      %p440 = scmp.ne.s32.totalorder %s423, %s439
      %p441 = scmp.eq.s32.totalorder %s38, 0
      %p442 = por %p440, %p441
      %s443 = ssub.s32 %s32, %s39
      %p444 = scmp.eq.s32.totalorder %s443, 0
      %s446 = sadd.s32 %s445, 1
      %s447 = scalar_select %p444, %s445, %s446
      %p450 = pneg %p444
      %p451 = scmp.eq.s32.totalorder %s32, 1
      %p452 = por %p450, %p451
      %p453 = scmp.ne.s32.totalorder %s445, %s448
      %p454 = scmp.eq.s32.totalorder %s32, 0
      %p455 = por %p453, %p454
      %p456 = scmp.ne.s32.totalorder %s445, %s448
      %p457 = scmp.eq.s32.totalorder %s37, 1
      %p458 = por %p456, %p457
      %p459 = scmp.ne.s32.totalorder %s448, %s449
      %p460 = scmp.eq.s32.totalorder %s37, 0
      %p461 = por %p459, %p460
      %p462 = scmp.ne.s32.totalorder %s448, %s449
      %p463 = scmp.eq.s32.totalorder %s38, 1
      %p464 = por %p462, %p463
      %p466 = scmp.ne.s32.totalorder %s449, %s465
      %p467 = scmp.eq.s32.totalorder %s38, 0
      %p468 = por %p466, %p467
      %p469 = scmp.le.s32.totalorder 1, %s32
      %p470 = scmp.lt.s32.totalorder %s32, 3
      %p471 = pnand %p469, %p470
      %p472 = pneg %p471
      // Predicated region
      $region9: #{lpls_pyramid_forward.1} parent=5 // pred_check
        _
      $region10: #{lpls_pyramid_forward.1} parent=5 // pred_check_branch
        %474 = sbr.rel (%p471) target = $region12
      $region11: #{lpls_pyramid_forward.1} parent=5 // pred_region
        %s475 = ssub.s32 %s32, 1
        // Predicated region
        $region13: #{lpls_pyramid_forward.1} parent=11 // pred_check
          %p476 = pneg %p53
        $region14: #{lpls_pyramid_forward.1} parent=11 // pred_check_branch
          %478 = sbr.rel (%p476) target = $region16
        $region15: #{lpls_pyramid_forward.1} parent=11 // pred_region
          %s480 = ssub.s32 16, 16
          %481 = vsyncadd [#allocation4], %s480
          %s483 = sshll.u32 %s0, 4
          %s484 = int_to_ptr.vmem [resolvable:$true] %s483
          %486 = dma.vmem_to_smem %s484, 16, [#allocation2], [#allocation4]
        $region16: #{lpls_pyramid_forward.1} parent=11 // pred_fallthru
          _
        // Predicated region
        $region17: #{lpls_pyramid_forward.1} parent=11 // pred_check
          %p487 = pneg %p126
        $region18: #{lpls_pyramid_forward.1} parent=11 // pred_check_branch
          %489 = sbr.rel (%p487) target = $region20
        $region19: #{lpls_pyramid_forward.1} parent=11 // pred_region
          _
        $region20: #{lpls_pyramid_forward.1} parent=11 // pred_fallthru
          _
        // Predicated region
        $region21: #{lpls_pyramid_forward.1} parent=11 // pred_check
          %p490 = pneg %p147
        $region22: #{lpls_pyramid_forward.1} parent=11 // pred_check_branch
          %492 = sbr.rel (%p490) target = $region24
        $region23: #{lpls_pyramid_forward.1} parent=11 // pred_region
          _
        $region24: #{lpls_pyramid_forward.1} parent=11 // pred_fallthru
          _
        // Predicated region
        $region25: #{lpls_pyramid_forward.1} parent=11 // pred_check
          %p493 = pneg %p168
        $region26: #{lpls_pyramid_forward.1} parent=11 // pred_check_branch
          %495 = sbr.rel (%p493) target = $region28
        $region27: #{lpls_pyramid_forward.1} parent=11 // pred_region
          _
        $region28: #{lpls_pyramid_forward.1} parent=11 // pred_fallthru
          _
        // Predicated region
        $region29: #{lpls_pyramid_forward.1} parent=11 // pred_check
          %p496 = pneg %p189
        $region30: #{lpls_pyramid_forward.1} parent=11 // pred_check_branch
          %498 = sbr.rel (%p496) target = $region32
        $region31: #{lpls_pyramid_forward.1} parent=11 // pred_region
          _
        $region32: #{lpls_pyramid_forward.1} parent=11 // pred_fallthru
          _
        // Predicated region
        $region33: #{lpls_pyramid_forward.1} parent=11 // pred_check
          %p499 = pneg %p210
        $region34: #{lpls_pyramid_forward.1} parent=11 // pred_check_branch
          %501 = sbr.rel (%p499) target = $region36
        $region35: #{lpls_pyramid_forward.1} parent=11 // pred_region
          _
        $region36: #{lpls_pyramid_forward.1} parent=11 // pred_fallthru
          _
        // Predicated region
        $region37: #{lpls_pyramid_forward.1} parent=11 // pred_check
          %p502 = pneg %p231
        $region38: #{lpls_pyramid_forward.1} parent=11 // pred_check_branch
          %504 = sbr.rel (%p502) target = $region40
        $region39: #{lpls_pyramid_forward.1} parent=11 // pred_region
          _
        $region40: #{lpls_pyramid_forward.1} parent=11 // pred_fallthru
          _
        // Predicated region
        $region41: #{lpls_pyramid_forward.1} parent=11 // pred_check
          %p505 = pneg %p252
        $region42: #{lpls_pyramid_forward.1} parent=11 // pred_check_branch
          %507 = sbr.rel (%p505) target = $region44
        $region43: #{lpls_pyramid_forward.1} parent=11 // pred_region
          _
        $region44: #{lpls_pyramid_forward.1} parent=11 // pred_fallthru
          _
        // Predicated region
        $region45: #{lpls_pyramid_forward.1} parent=11 // pred_check
          %p508 = pneg %p273
        $region46: #{lpls_pyramid_forward.1} parent=11 // pred_check_branch
          %510 = sbr.rel (%p508) target = $region48
        $region47: #{lpls_pyramid_forward.1} parent=11 // pred_region
          _
        $region48: #{lpls_pyramid_forward.1} parent=11 // pred_fallthru
          _
        // Predicated region
        $region49: #{lpls_pyramid_forward.1} parent=11 // pred_check
          %p511 = pneg %p294
        $region50: #{lpls_pyramid_forward.1} parent=11 // pred_check_branch
          %513 = sbr.rel (%p511) target = $region52
        $region51: #{lpls_pyramid_forward.1} parent=11 // pred_region
          _
        $region52: #{lpls_pyramid_forward.1} parent=11 // pred_fallthru
          _
        // Predicated region
        $region53: #{lpls_pyramid_forward.1} parent=11 // pred_check
          %p514 = pneg %p315
        $region54: #{lpls_pyramid_forward.1} parent=11 // pred_check_branch
          %516 = sbr.rel (%p514) target = $region56
        $region55: #{lpls_pyramid_forward.1} parent=11 // pred_region
          _
        $region56: #{lpls_pyramid_forward.1} parent=11 // pred_fallthru
          _
        // Predicated region
        $region57: #{lpls_pyramid_forward.1} parent=11 // pred_check
          %p517 = pneg %p336
        $region58: #{lpls_pyramid_forward.1} parent=11 // pred_check_branch
          %519 = sbr.rel (%p517) target = $region60
        $region59: #{lpls_pyramid_forward.1} parent=11 // pred_region
          _
        $region60: #{lpls_pyramid_forward.1} parent=11 // pred_fallthru
          _
        // Predicated region
        $region61: #{lpls_pyramid_forward.1} parent=11 // pred_check
          %p520 = pneg %p357
        $region62: #{lpls_pyramid_forward.1} parent=11 // pred_check_branch
          %522 = sbr.rel (%p520) target = $region64
        $region63: #{lpls_pyramid_forward.1} parent=11 // pred_region
          _
        $region64: #{lpls_pyramid_forward.1} parent=11 // pred_fallthru
          _
      $region12: #{lpls_pyramid_forward.1} parent=5 // pred_fallthru
        _
      %p523 = scmp.lt.s32.totalorder %s32, 2
      // Predicated region
      $region65: #{lpls_pyramid_forward.1} parent=5 // pred_check
        %p524 = pneg %p523
      $region66: #{lpls_pyramid_forward.1} parent=5 // pred_check_branch
        %526 = sbr.rel (%p524) target = $region68
      $region67: #{lpls_pyramid_forward.1} parent=5 // pred_region
        // Predicated region
        $region69: #{lpls_pyramid_forward.1} parent=67 // pred_check
          %p527 = pneg %p73
        $region70: #{lpls_pyramid_forward.1} parent=67 // pred_check_branch
          %529 = sbr.rel (%p527) target = $region72
        $region71: #{lpls_pyramid_forward.1} parent=67 // pred_region
          %s530 = smul.u32 3, %s32
          %p531 = scmp.lt.s32.totalorder %s530, 5
          %s532 = scalar_select %p531, %s530, 5
          %s533 = smul.addr %s532, 2
          %s534 = smul.addr %s533, 8
          %s535 = scalar_lea.vmem %s1, %s534
          %s536 = smul.u32 3, %s32
        $region72: #{lpls_pyramid_forward.1} parent=67 // pred_fallthru
          _
        // Predicated region
        $region73: #{lpls_pyramid_forward.1} parent=67 // pred_check
          %p537 = pneg %p99
        $region74: #{lpls_pyramid_forward.1} parent=67 // pred_check_branch
          %539 = sbr.rel (%p537) target = $region76
        $region75: #{lpls_pyramid_forward.1} parent=67 // pred_region
          %p540 = scmp.lt.s32.totalorder %s32, 1
          %s541 = scalar_select %p540, %s32, 1
          %s542 = smul.addr %s541, 2
          %s543 = smul.addr %s542, 8
          %s544 = scalar_lea.vmem %s2, %s543
        $region76: #{lpls_pyramid_forward.1} parent=67 // pred_fallthru
          _
      $region68: #{lpls_pyramid_forward.1} parent=5 // pred_fallthru
        _
      %p545 = scmp.le.s32.totalorder 1, %s32
      %p546 = scmp.lt.s32.totalorder %s32, 3
      %p547 = pnand %p545, %p546
      %p548 = pneg %p547
      // Predicated region
      $region77: #{lpls_pyramid_forward.1} parent=5 // pred_check
        _
      $region78: #{lpls_pyramid_forward.1} parent=5 // pred_check_branch
        %550 = sbr.rel (%p547) target = $region80
      $region79: #{lpls_pyramid_forward.1} parent=5 // pred_region
        %s551 = ssub.s32 %s32, 1
        // Predicated region
        $region81: #{lpls_pyramid_forward.1} parent=79 // pred_check
          %p552 = pneg %p53
        $region82: #{lpls_pyramid_forward.1} parent=79 // pred_check_branch
          %554 = sbr.rel (%p552) target = $region84
        $region83: #{lpls_pyramid_forward.1} parent=79 // pred_region
          %555 = dma.done [#allocation4], 16
        $region84: #{lpls_pyramid_forward.1} parent=79 // pred_fallthru
          _
        %556 = sfence
        %p557 = pneg %p53
        %p558 = pneg %p50
        %s559 = smul.u32 3, %s37
        %p560 = scmp.lt.s32.totalorder %s559, 5
        %s561 = scalar_select %p560, %s559, 5
        %s562 = smul.addr %s561, 2
        %s563 = smul.addr %s562, 8
        %s564 = scalar_lea.vmem %s1, %s563
        %p565 = pneg %p79
        %p566 = pneg %p76
        %p567 = scmp.lt.s32.totalorder %s37, 1
        %s568 = scalar_select %p567, %s37, 1
        %s569 = smul.addr %s568, 2
        %s570 = smul.addr %s569, 8
        %s571 = scalar_lea.vmem %s2, %s570
        %p572 = pneg %p105
        %p573 = pneg %p102
        %p574 = pneg %p126
        %p575 = pneg %p123
        %p576 = pneg %p147
        %p577 = pneg %p144
        %p578 = pneg %p168
        %p579 = pneg %p165
        %p580 = pneg %p189
        %p581 = pneg %p186
        %p582 = pneg %p210
        %p583 = pneg %p207
        %p584 = pneg %p231
        %p585 = pneg %p228
        %p586 = pneg %p252
        %p587 = pneg %p249
        %p588 = pneg %p273
        %p589 = pneg %p270
        %p590 = pneg %p294
        %p591 = pneg %p291
        %p592 = pneg %p315
        %p593 = pneg %p312
        %p594 = pneg %p336
        %p595 = pneg %p333
        %p596 = pneg %p357
        %p597 = pneg %p354
        %p598 = pneg %p383
        %p599 = pneg %p380
        %s600 = sand.u32 %s370, 1
        %s601 = scalar_lea.sflag [#allocation3], %s600
        %s602 = sand.u32 %s370, 1
        %s603 = smul.addr %s602, 48
        %s604 = scalar_lea.vmem [#allocation5], %s603
        %p605 = pneg %p409
        %p606 = pneg %p406
        %s607 = sand.u32 %s37, 1
        %s608 = scalar_lea.sflag [#allocation7], %s607
        %s609 = sand.u32 %s396, 1
        %s610 = smul.addr %s609, 24
        %s611 = scalar_lea.vmem [#allocation6], %s610
        %p612 = pneg %p435
        %p613 = pneg %p432
        %s614 = sand.u32 %s37, 1
        %s615 = scalar_lea.sflag [#allocation7], %s614
        %s616 = sand.u32 %s422, 1
        %s617 = smul.addr %s616, 12
        %s618 = scalar_lea.vmem [#allocation8], %s617
        %p619 = pneg %p461
        %p620 = pneg %p458
        %s621 = smul.u32 3, %s37
        %p622 = scmp.lt.s32.totalorder %s621, 5
        %s623 = scalar_select %p622, %s621, 5
        %s624 = smul.addr %s623, 2
        %s625 = scalar_lea.vmem %s18, %s624
        %s626 = smul.u32 3, %s37
        %p627 = scmp.lt.s32.totalorder %s626, 5
        %s628 = scalar_select %p627, %s626, 5
        %s629 = smul.addr %s628, 2
        %s630 = smul.addr %s629, 8
        %s631 = scalar_lea.vmem %s1, %s630
        %s632 = smul.u32 3, %s37
        %p633 = scmp.lt.s32.totalorder %s37, 1
        %s634 = scalar_select %p633, %s37, 1
        %s635 = smul.addr %s634, 2
        %s636 = smul.addr %s635, 8
        %s637 = scalar_lea.vmem %s2, %s636
        %s638 = smul.u32 3, %s37
        %s639 = smul.u32 3, %s37
        %s640 = smul.u32 3, %s37
        %s641 = smul.u32 3, %s37
        %p642 = scmp.lt.s32.totalorder %s641, 5
        %s643 = scalar_select %p642, %s641, 5
        %s644 = smul.addr %s643, 2
        %s645 = scalar_lea.vmem %s18, %s644
        %s646 = smul.u32 3, %s37
        %v647 = vld [vmem:[%s637] sm:$0xff]
        %v648 = vld [vmem:[%s637 + $0x8] sm:$0xff]
        %v649 = vsub.f32 1.0, %v647
        %v650 = vsub.f32 1.0, %v648
        %v651 = vld [vmem:[%s3] sm:$0xff]
        %v652 = vld [vmem:[%s4] sm:$0xff]
        %v653 = vld [vmem:[%s4 + $0x8] sm:$0xff]
        %v654 = vld [vmem:[%s5] sm:$0xf]
        %v655 = vld [vmem:[%s6] sm:$0xff]
        %v656 = vld [vmem:[%s7] sm:$0x3]
        %v657 = vld [vmem:[%s8] sm:$0xf]
        %v658 = vld [vmem:[%s9] sm:$0xff]
        %v659 = vld [vmem:[%s9 + $0x8] sm:$0xff]
        %v660 = vld [vmem:[%s10] sm:$0xff]
        %v661 = vld [vmem:[%s11] sm:$0xff]
        %v662 = vld [vmem:[%s12] sm:$0xf]
        %v663 = vld [vmem:[%s13] sm:$0xf]
        %v664 = vld [vmem:[%s14] sm:$0x3]
        %s665 = smul.u32 %s37, 3
        %s666 = sld [smem:[#allocation2 + %s665]]
        %v667 = vld [vmem:[%s631] sm:$0xff]
        %v668 = vld [vmem:[%s631 + $0x8] sm:$0xff]
        %v669 = vmul.f32 %v647, %v667
        %v670 = vmul.f32 %v648, %v668
        %v671 = vstv %s666
        %v672 = vmul.f32 %v649, %v671
        %v673 = vmul.f32 %v650, %v671
        %v674 = vadd.f32 %v669, %v672
        %v675 = vadd.f32 %v670, %v673
        %vm676 = vcmask 130048
        %v678 = vsel %vm676, %v651, 0
        %680 = vmatprep.subr.mxu0 0.0
        %681 = vmatpush1.msra.mxu0 0.0
        %682 = vmatprep.subr.mxu0 0.0
        %683 = vmatpush1.msra.mxu0 0.0
        %684 = vmatprep.subr.mxu0 0.0
        %685 = vmatpush1.msra.mxu0 0.0
        %686 = vmatprep.subr.mxu0 0.0
        %687 = vmatpush1.msra.mxu0 0.0
        %688 = vmatprep.subr.mxu0 0.0
        %689 = vmatpush1.msra.mxu0 0.0
        %690 = vmatprep.subr.mxu0 0.0
        %691 = vmatpush1.msra.mxu0 0.0
        %692 = vmatprep.subr.mxu0 0.0
        %693 = vmatpush1.msra.mxu0 0.0
        %694 = vmatprep.subr.mxu0 0.0
        %695 = vmatpush1.msra.mxu0 0.0
        %696 = vmatprep.subr.mxu0 0.0
        %697 = vmatpush1.msra.mxu0 0.0
        %698 = vmatprep.subr.mxu0 0.0
        %699 = vmatpush1.msra.mxu0 0.0
        %700 = vmatprep.subr.mxu0 0.0
        %701 = vmatpush1.msra.mxu0 0.0
        %702 = vmatprep.subr.mxu0 0.0
        %703 = vmatpush1.msra.mxu0 0.0
        %704 = vmatprep.subr.mxu0 0.0
        %705 = vmatpush1.msra.mxu0 0.0
        %706 = vmatprep.subr.mxu0 0.0
        %707 = vmatpush1.msra.mxu0 0.0
        %708 = vmatprep.subr.mxu0 0.0
        %709 = vmatpush1.msra.mxu0 %v675
        %710 = vmatprep.subr.mxu0 0.0
        %711 = vmatpush1.msra.mxu0 %v674
        %712 = vmatprep.subr.mxu0 0.0
        %713 = vmatpush2.msra.mxu0 0.0
        %714 = vmatprep.subr.mxu0 0.0
        %715 = vmatpush2.msra.mxu0 0.0
        %716 = vmatprep.subr.mxu0 0.0
        %717 = vmatpush2.msra.mxu0 0.0
        %718 = vmatprep.subr.mxu0 0.0
        %719 = vmatpush2.msra.mxu0 0.0
        %720 = vmatprep.subr.mxu0 0.0
        %721 = vmatpush2.msra.mxu0 0.0
        %722 = vmatprep.subr.mxu0 0.0
        %723 = vmatpush2.msra.mxu0 0.0
        %724 = vmatprep.subr.mxu0 0.0
        %725 = vmatpush2.msra.mxu0 0.0
        %726 = vmatprep.subr.mxu0 0.0
        %727 = vmatpush2.msra.mxu0 0.0
        %728 = vmatprep.subr.mxu0 0.0
        %729 = vmatpush2.msra.mxu0 0.0
        %730 = vmatprep.subr.mxu0 0.0
        %731 = vmatpush2.msra.mxu0 0.0
        %732 = vmatprep.subr.mxu0 0.0
        %733 = vmatpush2.msra.mxu0 0.0
        %734 = vmatprep.subr.mxu0 0.0
        %735 = vmatpush2.msra.mxu0 0.0
        %736 = vmatprep.subr.mxu0 0.0
        %737 = vmatpush2.msra.mxu0 0.0
        %738 = vmatprep.subr.mxu0 0.0
        %739 = vmatpush2.msra.mxu0 0.0
        %740 = vmatprep.subr.mxu0 0.0
        %741 = vmatpush2.msra.mxu0 0.0
        %742 = vmatprep.subr.mxu0 0.0
        %743 = vmatpush2.msra.mxu0 0.0
        %744 = vmatprep.mubr.f32.mxu0 0.0
        %745 = vmatmul.mubr.f32.gmra.mxu0 %v678
        %v746 = vpop.f32.mrf.mxu0
        %v747 = vadd.f32 0.0, %v746
        %v748 = vpop.f32.mrf.mxu0
        %749 = vdwg.mxu0
        %v751 = vsel %vm676, %v747, 0
        %753 = vmatprep.subr.mxu0 0.0
        %754 = vmatpush1.msra.mxu0 0.0
        %755 = vmatprep.subr.mxu0 0.0
        %756 = vmatpush1.msra.mxu0 0.0
        %757 = vmatprep.subr.mxu0 0.0
        %758 = vmatpush1.msra.mxu0 0.0
        %759 = vmatprep.subr.mxu0 0.0
        %760 = vmatpush1.msra.mxu0 0.0
        %761 = vmatprep.subr.mxu0 0.0
        %762 = vmatpush1.msra.mxu0 0.0
        %763 = vmatprep.subr.mxu0 0.0
        %764 = vmatpush1.msra.mxu0 0.0
        %765 = vmatprep.subr.mxu0 0.0
        %766 = vmatpush1.msra.mxu0 0.0
        %767 = vmatprep.subr.mxu0 0.0
        %768 = vmatpush1.msra.mxu0 0.0
        %769 = vmatprep.subr.mxu0 0.0
        %770 = vmatpush1.msra.mxu0 0.0
        %771 = vmatprep.subr.mxu0 0.0
        %772 = vmatpush1.msra.mxu0 0.0
        %773 = vmatprep.subr.mxu0 0.0
        %774 = vmatpush1.msra.mxu0 0.0
        %775 = vmatprep.subr.mxu0 0.0
        %776 = vmatpush1.msra.mxu0 0.0
        %777 = vmatprep.subr.mxu0 0.0
        %778 = vmatpush1.msra.mxu0 0.0
        %779 = vmatprep.subr.mxu0 0.0
        %780 = vmatpush1.msra.mxu0 0.0
        %781 = vmatprep.subr.mxu0 0.0
        %782 = vmatpush1.msra.mxu0 %v653
        %783 = vmatprep.subr.mxu0 0.0
        %784 = vmatpush1.msra.mxu0 %v652
        %785 = vmatprep.subr.mxu0 0.0
        %786 = vmatpush2.msra.mxu0 0.0
        %787 = vmatprep.subr.mxu0 0.0
        %788 = vmatpush2.msra.mxu0 0.0
        %789 = vmatprep.subr.mxu0 0.0
        %790 = vmatpush2.msra.mxu0 0.0
        %791 = vmatprep.subr.mxu0 0.0
        %792 = vmatpush2.msra.mxu0 0.0
        %793 = vmatprep.subr.mxu0 0.0
        %794 = vmatpush2.msra.mxu0 0.0
        %795 = vmatprep.subr.mxu0 0.0
        %796 = vmatpush2.msra.mxu0 0.0
        %797 = vmatprep.subr.mxu0 0.0
        %798 = vmatpush2.msra.mxu0 0.0
        %799 = vmatprep.subr.mxu0 0.0
        %800 = vmatpush2.msra.mxu0 0.0
        %801 = vmatprep.subr.mxu0 0.0
        %802 = vmatpush2.msra.mxu0 0.0
        %803 = vmatprep.subr.mxu0 0.0
        %804 = vmatpush2.msra.mxu0 0.0
        %805 = vmatprep.subr.mxu0 0.0
        %806 = vmatpush2.msra.mxu0 0.0
        %807 = vmatprep.subr.mxu0 0.0
        %808 = vmatpush2.msra.mxu0 0.0
        %809 = vmatprep.subr.mxu0 0.0
        %810 = vmatpush2.msra.mxu0 0.0
        %811 = vmatprep.subr.mxu0 0.0
        %812 = vmatpush2.msra.mxu0 0.0
        %813 = vmatprep.subr.mxu0 0.0
        %814 = vmatpush2.msra.mxu0 0.0
        %815 = vmatprep.subr.mxu0 0.0
        %816 = vmatpush2.msra.mxu0 0.0
        %817 = vmatprep.mubr.f32.mxu0 0.0
        %818 = vmatmul.mubr.f32.gmra.mxu0 %v751
        %v819 = vpop.f32.mrf.mxu0
        %v820 = vadd.f32 0.0, %v819
        %v821 = vpop.f32.mrf.mxu0
        %822 = vdwg.mxu0
        %vm823 = vcmask 64512
        %v825 = vsel %vm823, %v658, 0
        %v828 = vsel %vm823, %v659, 0
        %830 = vmatprep.subr.mxu0 0.0
        %831 = vmatpush1.msra.mxu0 0.0
        %832 = vmatprep.subr.mxu0 0.0
        %833 = vmatpush1.msra.mxu0 0.0
        %834 = vmatprep.subr.mxu0 0.0
        %835 = vmatpush1.msra.mxu0 0.0
        %836 = vmatprep.subr.mxu0 0.0
        %837 = vmatpush1.msra.mxu0 0.0
        %838 = vmatprep.subr.mxu0 0.0
        %839 = vmatpush1.msra.mxu0 0.0
        %840 = vmatprep.subr.mxu0 0.0
        %841 = vmatpush1.msra.mxu0 0.0
        %842 = vmatprep.subr.mxu0 0.0
        %843 = vmatpush1.msra.mxu0 0.0
        %844 = vmatprep.subr.mxu0 0.0
        %845 = vmatpush1.msra.mxu0 0.0
        %846 = vmatprep.subr.mxu0 0.0
        %847 = vmatpush1.msra.mxu0 0.0
        %848 = vmatprep.subr.mxu0 0.0
        %849 = vmatpush1.msra.mxu0 0.0
        %850 = vmatprep.subr.mxu0 0.0
        %851 = vmatpush1.msra.mxu0 0.0
        %852 = vmatprep.subr.mxu0 0.0
        %853 = vmatpush1.msra.mxu0 0.0
        %854 = vmatprep.subr.mxu0 0.0
        %855 = vmatpush1.msra.mxu0 0.0
        %856 = vmatprep.subr.mxu0 0.0
        %857 = vmatpush1.msra.mxu0 0.0
        %858 = vmatprep.subr.mxu0 0.0
        %859 = vmatpush1.msra.mxu0 0.0
        %860 = vmatprep.subr.mxu0 0.0
        %861 = vmatpush1.msra.mxu0 %v820
        %862 = vmatprep.subr.mxu0 0.0
        %863 = vmatpush2.msra.mxu0 0.0
        %864 = vmatprep.subr.mxu0 0.0
        %865 = vmatpush2.msra.mxu0 0.0
        %866 = vmatprep.subr.mxu0 0.0
        %867 = vmatpush2.msra.mxu0 0.0
        %868 = vmatprep.subr.mxu0 0.0
        %869 = vmatpush2.msra.mxu0 0.0
        %870 = vmatprep.subr.mxu0 0.0
        %871 = vmatpush2.msra.mxu0 0.0
        %872 = vmatprep.subr.mxu0 0.0
        %873 = vmatpush2.msra.mxu0 0.0
        %874 = vmatprep.subr.mxu0 0.0
        %875 = vmatpush2.msra.mxu0 0.0
        %876 = vmatprep.subr.mxu0 0.0
        %877 = vmatpush2.msra.mxu0 0.0
        %878 = vmatprep.subr.mxu0 0.0
        %879 = vmatpush2.msra.mxu0 0.0
        %880 = vmatprep.subr.mxu0 0.0
        %881 = vmatpush2.msra.mxu0 0.0
        %882 = vmatprep.subr.mxu0 0.0
        %883 = vmatpush2.msra.mxu0 0.0
        %884 = vmatprep.subr.mxu0 0.0
        %885 = vmatpush2.msra.mxu0 0.0
        %886 = vmatprep.subr.mxu0 0.0
        %887 = vmatpush2.msra.mxu0 0.0
        %888 = vmatprep.subr.mxu0 0.0
        %889 = vmatpush2.msra.mxu0 0.0
        %890 = vmatprep.subr.mxu0 0.0
        %891 = vmatpush2.msra.mxu0 0.0
        %892 = vmatprep.subr.mxu0 0.0
        %893 = vmatpush2.msra.mxu0 0.0
        %894 = vmatprep.mubr.f32.mxu0 0.0
        %895 = vmatmul.mubr.f32.gmra.mxu0 %v825
        %v896 = vpop.f32.mrf.mxu0
        %v897 = vadd.f32 0.0, %v896
        %v898 = vpop.f32.mrf.mxu0
        %899 = vmatprep.mubr.f32.mxu0 0.0
        %900 = vmatmul.mubr.f32.gmra.mxu0 %v828
        %v901 = vpop.f32.mrf.mxu0
        %v902 = vadd.f32 0.0, %v901
        %v903 = vpop.f32.mrf.mxu0
        %904 = vdwg.mxu0
        %v906 = vsel %vm823, %v897, 0
        %v909 = vsel %vm823, %v902, 0
        %911 = vmatprep.subr.mxu0 0.0
        %912 = vmatpush1.msra.mxu0 0.0
        %913 = vmatprep.subr.mxu0 0.0
        %914 = vmatpush1.msra.mxu0 0.0
        %915 = vmatprep.subr.mxu0 0.0
        %916 = vmatpush1.msra.mxu0 0.0
        %917 = vmatprep.subr.mxu0 0.0
        %918 = vmatpush1.msra.mxu0 0.0
        %919 = vmatprep.subr.mxu0 0.0
        %920 = vmatpush1.msra.mxu0 0.0
        %921 = vmatprep.subr.mxu0 0.0
        %922 = vmatpush1.msra.mxu0 0.0
        %923 = vmatprep.subr.mxu0 0.0
        %924 = vmatpush1.msra.mxu0 0.0
        %925 = vmatprep.subr.mxu0 0.0
        %926 = vmatpush1.msra.mxu0 0.0
        %927 = vmatprep.subr.mxu0 0.0
        %928 = vmatpush1.msra.mxu0 0.0
        %929 = vmatprep.subr.mxu0 0.0
        %930 = vmatpush1.msra.mxu0 0.0
        %931 = vmatprep.subr.mxu0 0.0
        %932 = vmatpush1.msra.mxu0 0.0
        %933 = vmatprep.subr.mxu0 0.0
        %934 = vmatpush1.msra.mxu0 0.0
        %935 = vmatprep.subr.mxu0 0.0
        %936 = vmatpush1.msra.mxu0 0.0
        %937 = vmatprep.subr.mxu0 0.0
        %938 = vmatpush1.msra.mxu0 0.0
        %939 = vmatprep.subr.mxu0 0.0
        %940 = vmatpush1.msra.mxu0 0.0
        %941 = vmatprep.subr.mxu0 0.0
        %942 = vmatpush1.msra.mxu0 %v660
        %943 = vmatprep.subr.mxu0 0.0
        %944 = vmatpush2.msra.mxu0 0.0
        %945 = vmatprep.subr.mxu0 0.0
        %946 = vmatpush2.msra.mxu0 0.0
        %947 = vmatprep.subr.mxu0 0.0
        %948 = vmatpush2.msra.mxu0 0.0
        %949 = vmatprep.subr.mxu0 0.0
        %950 = vmatpush2.msra.mxu0 0.0
        %951 = vmatprep.subr.mxu0 0.0
        %952 = vmatpush2.msra.mxu0 0.0
        %953 = vmatprep.subr.mxu0 0.0
        %954 = vmatpush2.msra.mxu0 0.0
        %955 = vmatprep.subr.mxu0 0.0
        %956 = vmatpush2.msra.mxu0 0.0
        %957 = vmatprep.subr.mxu0 0.0
        %958 = vmatpush2.msra.mxu0 0.0
        %959 = vmatprep.subr.mxu0 0.0
        %960 = vmatpush2.msra.mxu0 0.0
        %961 = vmatprep.subr.mxu0 0.0
        %962 = vmatpush2.msra.mxu0 0.0
        %963 = vmatprep.subr.mxu0 0.0
        %964 = vmatpush2.msra.mxu0 0.0
        %965 = vmatprep.subr.mxu0 0.0
        %966 = vmatpush2.msra.mxu0 0.0
        %967 = vmatprep.subr.mxu0 0.0
        %968 = vmatpush2.msra.mxu0 0.0
        %969 = vmatprep.subr.mxu0 0.0
        %970 = vmatpush2.msra.mxu0 0.0
        %971 = vmatprep.subr.mxu0 0.0
        %972 = vmatpush2.msra.mxu0 0.0
        %973 = vmatprep.subr.mxu0 0.0
        %974 = vmatpush2.msra.mxu0 0.0
        %975 = vmatprep.mubr.f32.mxu0 0.0
        %976 = vmatmul.mubr.f32.gmra.mxu0 %v906
        %v977 = vpop.f32.mrf.mxu0
        %v978 = vadd.f32 0.0, %v977
        %v979 = vpop.f32.mrf.mxu0
        %980 = vmatprep.mubr.f32.mxu0 0.0
        %981 = vmatmul.mubr.f32.gmra.mxu0 %v909
        %v982 = vpop.f32.mrf.mxu0
        %v983 = vadd.f32 0.0, %v982
        %v984 = vpop.f32.mrf.mxu0
        %985 = vdwg.mxu0
        %v986 = vsub.f32 %v674, %v978
        %v987 = vsub.f32 %v675, %v983
        %v988 = vmul.f32 %v986, 4.0
        %v989 = vmul.f32 %v987, 4.0
        %v990 = vmax.f32 %v988, -1.0
        %v991 = vmax.f32 %v989, -1.0
        %v992 = vmin.f32 %v990, 1.0
        %v993 = vmin.f32 %v991, 1.0
        %994 = vst.msk [vmem:[%s604] sm:$0xff] %vm676, %v992
        %995 = vst.msk [vmem:[%s604 + $0x8] sm:$0xff] %vm676, %v993
        %v997 = vsel %vm823, %v654, 0
        %999 = vmatprep.subr.mxu0 0.0
        %1000 = vmatpush1.msra.mxu0 0.0
        %1001 = vmatprep.subr.mxu0 0.0
        %1002 = vmatpush1.msra.mxu0 0.0
        %1003 = vmatprep.subr.mxu0 0.0
        %1004 = vmatpush1.msra.mxu0 0.0
        %1005 = vmatprep.subr.mxu0 0.0
        %1006 = vmatpush1.msra.mxu0 0.0
        %1007 = vmatprep.subr.mxu0 0.0
        %1008 = vmatpush1.msra.mxu0 0.0
        %1009 = vmatprep.subr.mxu0 0.0
        %1010 = vmatpush1.msra.mxu0 0.0
        %1011 = vmatprep.subr.mxu0 0.0
        %1012 = vmatpush1.msra.mxu0 0.0
        %1013 = vmatprep.subr.mxu0 0.0
        %1014 = vmatpush1.msra.mxu0 0.0
        %1015 = vmatprep.subr.mxu0 0.0
        %1016 = vmatpush1.msra.mxu0 0.0
        %1017 = vmatprep.subr.mxu0 0.0
        %1018 = vmatpush1.msra.mxu0 0.0
        %1019 = vmatprep.subr.mxu0 0.0
        %1020 = vmatpush1.msra.mxu0 0.0
        %1021 = vmatprep.subr.mxu0 0.0
        %1022 = vmatpush1.msra.mxu0 0.0
        %1023 = vmatprep.subr.mxu0 0.0
        %1024 = vmatpush1.msra.mxu0 0.0
        %1025 = vmatprep.subr.mxu0 0.0
        %1026 = vmatpush1.msra.mxu0 0.0
        %1027 = vmatprep.subr.mxu0 0.0
        %1028 = vmatpush1.msra.mxu0 0.0
        %1029 = vmatprep.subr.mxu0 0.0
        %1030 = vmatpush1.msra.mxu0 %v820
        %1031 = vmatprep.subr.mxu0 0.0
        %1032 = vmatpush2.msra.mxu0 0.0
        %1033 = vmatprep.subr.mxu0 0.0
        %1034 = vmatpush2.msra.mxu0 0.0
        %1035 = vmatprep.subr.mxu0 0.0
        %1036 = vmatpush2.msra.mxu0 0.0
        %1037 = vmatprep.subr.mxu0 0.0
        %1038 = vmatpush2.msra.mxu0 0.0
        %1039 = vmatprep.subr.mxu0 0.0
        %1040 = vmatpush2.msra.mxu0 0.0
        %1041 = vmatprep.subr.mxu0 0.0
        %1042 = vmatpush2.msra.mxu0 0.0
        %1043 = vmatprep.subr.mxu0 0.0
        %1044 = vmatpush2.msra.mxu0 0.0
        %1045 = vmatprep.subr.mxu0 0.0
        %1046 = vmatpush2.msra.mxu0 0.0
        %1047 = vmatprep.subr.mxu0 0.0
        %1048 = vmatpush2.msra.mxu0 0.0
        %1049 = vmatprep.subr.mxu0 0.0
        %1050 = vmatpush2.msra.mxu0 0.0
        %1051 = vmatprep.subr.mxu0 0.0
        %1052 = vmatpush2.msra.mxu0 0.0
        %1053 = vmatprep.subr.mxu0 0.0
        %1054 = vmatpush2.msra.mxu0 0.0
        %1055 = vmatprep.subr.mxu0 0.0
        %1056 = vmatpush2.msra.mxu0 0.0
        %1057 = vmatprep.subr.mxu0 0.0
        %1058 = vmatpush2.msra.mxu0 0.0
        %1059 = vmatprep.subr.mxu0 0.0
        %1060 = vmatpush2.msra.mxu0 0.0
        %1061 = vmatprep.subr.mxu0 0.0
        %1062 = vmatpush2.msra.mxu0 0.0
        %1063 = vmatprep.mubr.f32.mxu0 0.0
        %1064 = vmatmul.mubr.f32.gmra.mxu0 %v997
        %v1065 = vpop.f32.mrf.mxu0
        %v1066 = vadd.f32 0.0, %v1065
        %v1067 = vpop.f32.mrf.mxu0
        %1068 = vdwg.mxu0
        %v1070 = vsel %vm823, %v1066, 0
        %1072 = vmatprep.subr.mxu0 0.0
        %1073 = vmatpush1.msra.mxu0 0.0
        %1074 = vmatprep.subr.mxu0 0.0
        %1075 = vmatpush1.msra.mxu0 0.0
        %1076 = vmatprep.subr.mxu0 0.0
        %1077 = vmatpush1.msra.mxu0 0.0
        %1078 = vmatprep.subr.mxu0 0.0
        %1079 = vmatpush1.msra.mxu0 0.0
        %1080 = vmatprep.subr.mxu0 0.0
        %1081 = vmatpush1.msra.mxu0 0.0
        %1082 = vmatprep.subr.mxu0 0.0
        %1083 = vmatpush1.msra.mxu0 0.0
        %1084 = vmatprep.subr.mxu0 0.0
        %1085 = vmatpush1.msra.mxu0 0.0
        %1086 = vmatprep.subr.mxu0 0.0
        %1087 = vmatpush1.msra.mxu0 0.0
        %1088 = vmatprep.subr.mxu0 0.0
        %1089 = vmatpush1.msra.mxu0 0.0
        %1090 = vmatprep.subr.mxu0 0.0
        %1091 = vmatpush1.msra.mxu0 0.0
        %1092 = vmatprep.subr.mxu0 0.0
        %1093 = vmatpush1.msra.mxu0 0.0
        %1094 = vmatprep.subr.mxu0 0.0
        %1095 = vmatpush1.msra.mxu0 0.0
        %1096 = vmatprep.subr.mxu0 0.0
        %1097 = vmatpush1.msra.mxu0 0.0
        %1098 = vmatprep.subr.mxu0 0.0
        %1099 = vmatpush1.msra.mxu0 0.0
        %1100 = vmatprep.subr.mxu0 0.0
        %1101 = vmatpush1.msra.mxu0 0.0
        %1102 = vmatprep.subr.mxu0 0.0
        %1103 = vmatpush1.msra.mxu0 %v655
        %1104 = vmatprep.subr.mxu0 0.0
        %1105 = vmatpush2.msra.mxu0 0.0
        %1106 = vmatprep.subr.mxu0 0.0
        %1107 = vmatpush2.msra.mxu0 0.0
        %1108 = vmatprep.subr.mxu0 0.0
        %1109 = vmatpush2.msra.mxu0 0.0
        %1110 = vmatprep.subr.mxu0 0.0
        %1111 = vmatpush2.msra.mxu0 0.0
        %1112 = vmatprep.subr.mxu0 0.0
        %1113 = vmatpush2.msra.mxu0 0.0
        %1114 = vmatprep.subr.mxu0 0.0
        %1115 = vmatpush2.msra.mxu0 0.0
        %1116 = vmatprep.subr.mxu0 0.0
        %1117 = vmatpush2.msra.mxu0 0.0
        %1118 = vmatprep.subr.mxu0 0.0
        %1119 = vmatpush2.msra.mxu0 0.0
        %1120 = vmatprep.subr.mxu0 0.0
        %1121 = vmatpush2.msra.mxu0 0.0
        %1122 = vmatprep.subr.mxu0 0.0
        %1123 = vmatpush2.msra.mxu0 0.0
        %1124 = vmatprep.subr.mxu0 0.0
        %1125 = vmatpush2.msra.mxu0 0.0
        %1126 = vmatprep.subr.mxu0 0.0
        %1127 = vmatpush2.msra.mxu0 0.0
        %1128 = vmatprep.subr.mxu0 0.0
        %1129 = vmatpush2.msra.mxu0 0.0
        %1130 = vmatprep.subr.mxu0 0.0
        %1131 = vmatpush2.msra.mxu0 0.0
        %1132 = vmatprep.subr.mxu0 0.0
        %1133 = vmatpush2.msra.mxu0 0.0
        %1134 = vmatprep.subr.mxu0 0.0
        %1135 = vmatpush2.msra.mxu0 0.0
        %1136 = vmatprep.mubr.f32.mxu0 0.0
        %1137 = vmatmul.mubr.f32.gmra.mxu0 %v1070
        %v1138 = vpop.f32.mrf.mxu0
        %v1139 = vadd.f32 0.0, %v1138
        %v1140 = vpop.f32.mrf.mxu0
        %1141 = vdwg.mxu0
        %vm1142 = vcmask 31744
        %v1144 = vsel %vm1142, %v661, 0
        %vm1146 = vcmask 1043456
        %v1148 = vsel %vm1146, %v1139, 0
        %1150 = vmatprep.subr.mxu0 0.0
        %1151 = vmatpush1.msra.mxu0 0.0
        %1152 = vmatprep.subr.mxu0 0.0
        %1153 = vmatpush1.msra.mxu0 0.0
        %1154 = vmatprep.subr.mxu0 0.0
        %1155 = vmatpush1.msra.mxu0 0.0
        %1156 = vmatprep.subr.mxu0 0.0
        %1157 = vmatpush1.msra.mxu0 0.0
        %1158 = vmatprep.subr.mxu0 0.0
        %1159 = vmatpush1.msra.mxu0 0.0
        %1160 = vmatprep.subr.mxu0 0.0
        %1161 = vmatpush1.msra.mxu0 0.0
        %1162 = vmatprep.subr.mxu0 0.0
        %1163 = vmatpush1.msra.mxu0 0.0
        %1164 = vmatprep.subr.mxu0 0.0
        %1165 = vmatpush1.msra.mxu0 0.0
        %1166 = vmatprep.subr.mxu0 0.0
        %1167 = vmatpush1.msra.mxu0 0.0
        %1168 = vmatprep.subr.mxu0 0.0
        %1169 = vmatpush1.msra.mxu0 0.0
        %1170 = vmatprep.subr.mxu0 0.0
        %1171 = vmatpush1.msra.mxu0 0.0
        %1172 = vmatprep.subr.mxu0 0.0
        %1173 = vmatpush1.msra.mxu0 0.0
        %1174 = vmatprep.subr.mxu0 0.0
        %1175 = vmatpush1.msra.mxu0 0.0
        %1176 = vmatprep.subr.mxu0 0.0
        %1177 = vmatpush1.msra.mxu0 0.0
        %1178 = vmatprep.subr.mxu0 0.0
        %1179 = vmatpush1.msra.mxu0 0.0
        %1180 = vmatprep.subr.mxu0 0.0
        %1181 = vmatpush1.msra.mxu0 %v1148
        %1182 = vmatprep.subr.mxu0 0.0
        %1183 = vmatpush2.msra.mxu0 0.0
        %1184 = vmatprep.subr.mxu0 0.0
        %1185 = vmatpush2.msra.mxu0 0.0
        %1186 = vmatprep.subr.mxu0 0.0
        %1187 = vmatpush2.msra.mxu0 0.0
        %1188 = vmatprep.subr.mxu0 0.0
        %1189 = vmatpush2.msra.mxu0 0.0
        %1190 = vmatprep.subr.mxu0 0.0
        %1191 = vmatpush2.msra.mxu0 0.0
        %1192 = vmatprep.subr.mxu0 0.0
        %1193 = vmatpush2.msra.mxu0 0.0
        %1194 = vmatprep.subr.mxu0 0.0
        %1195 = vmatpush2.msra.mxu0 0.0
        %1196 = vmatprep.subr.mxu0 0.0
        %1197 = vmatpush2.msra.mxu0 0.0
        %1198 = vmatprep.subr.mxu0 0.0
        %1199 = vmatpush2.msra.mxu0 0.0
        %1200 = vmatprep.subr.mxu0 0.0
        %1201 = vmatpush2.msra.mxu0 0.0
        %1202 = vmatprep.subr.mxu0 0.0
        %1203 = vmatpush2.msra.mxu0 0.0
        %1204 = vmatprep.subr.mxu0 0.0
        %1205 = vmatpush2.msra.mxu0 0.0
        %1206 = vmatprep.subr.mxu0 0.0
        %1207 = vmatpush2.msra.mxu0 0.0
        %1208 = vmatprep.subr.mxu0 0.0
        %1209 = vmatpush2.msra.mxu0 0.0
        %1210 = vmatprep.subr.mxu0 0.0
        %1211 = vmatpush2.msra.mxu0 0.0
        %1212 = vmatprep.subr.mxu0 0.0
        %1213 = vmatpush2.msra.mxu0 0.0
        %1214 = vmatprep.mubr.f32.mxu0 0.0
        %1215 = vmatmul.mubr.f32.gmra.mxu0 %v1144
        %v1216 = vpop.f32.mrf.mxu0
        %v1217 = vadd.f32 0.0, %v1216
        %v1218 = vpop.f32.mrf.mxu0
        %1219 = vdwg.mxu0
        %v1221 = vsel %vm1142, %v1217, 0
        %v1224 = vsel %vm1146, %v662, 0
        %1226 = vmatprep.subr.mxu0 0.0
        %1227 = vmatpush1.msra.mxu0 0.0
        %1228 = vmatprep.subr.mxu0 0.0
        %1229 = vmatpush1.msra.mxu0 0.0
        %1230 = vmatprep.subr.mxu0 0.0
        %1231 = vmatpush1.msra.mxu0 0.0
        %1232 = vmatprep.subr.mxu0 0.0
        %1233 = vmatpush1.msra.mxu0 0.0
        %1234 = vmatprep.subr.mxu0 0.0
        %1235 = vmatpush1.msra.mxu0 0.0
        %1236 = vmatprep.subr.mxu0 0.0
        %1237 = vmatpush1.msra.mxu0 0.0
        %1238 = vmatprep.subr.mxu0 0.0
        %1239 = vmatpush1.msra.mxu0 0.0
        %1240 = vmatprep.subr.mxu0 0.0
        %1241 = vmatpush1.msra.mxu0 0.0
        %1242 = vmatprep.subr.mxu0 0.0
        %1243 = vmatpush1.msra.mxu0 0.0
        %1244 = vmatprep.subr.mxu0 0.0
        %1245 = vmatpush1.msra.mxu0 0.0
        %1246 = vmatprep.subr.mxu0 0.0
        %1247 = vmatpush1.msra.mxu0 0.0
        %1248 = vmatprep.subr.mxu0 0.0
        %1249 = vmatpush1.msra.mxu0 0.0
        %1250 = vmatprep.subr.mxu0 0.0
        %1251 = vmatpush1.msra.mxu0 0.0
        %1252 = vmatprep.subr.mxu0 0.0
        %1253 = vmatpush1.msra.mxu0 0.0
        %1254 = vmatprep.subr.mxu0 0.0
        %1255 = vmatpush1.msra.mxu0 0.0
        %1256 = vmatprep.subr.mxu0 0.0
        %1257 = vmatpush1.msra.mxu0 %v1224
        %1258 = vmatprep.subr.mxu0 0.0
        %1259 = vmatpush2.msra.mxu0 0.0
        %1260 = vmatprep.subr.mxu0 0.0
        %1261 = vmatpush2.msra.mxu0 0.0
        %1262 = vmatprep.subr.mxu0 0.0
        %1263 = vmatpush2.msra.mxu0 0.0
        %1264 = vmatprep.subr.mxu0 0.0
        %1265 = vmatpush2.msra.mxu0 0.0
        %1266 = vmatprep.subr.mxu0 0.0
        %1267 = vmatpush2.msra.mxu0 0.0
        %1268 = vmatprep.subr.mxu0 0.0
        %1269 = vmatpush2.msra.mxu0 0.0
        %1270 = vmatprep.subr.mxu0 0.0
        %1271 = vmatpush2.msra.mxu0 0.0
        %1272 = vmatprep.subr.mxu0 0.0
        %1273 = vmatpush2.msra.mxu0 0.0
        %1274 = vmatprep.subr.mxu0 0.0
        %1275 = vmatpush2.msra.mxu0 0.0
        %1276 = vmatprep.subr.mxu0 0.0
        %1277 = vmatpush2.msra.mxu0 0.0
        %1278 = vmatprep.subr.mxu0 0.0
        %1279 = vmatpush2.msra.mxu0 0.0
        %1280 = vmatprep.subr.mxu0 0.0
        %1281 = vmatpush2.msra.mxu0 0.0
        %1282 = vmatprep.subr.mxu0 0.0
        %1283 = vmatpush2.msra.mxu0 0.0
        %1284 = vmatprep.subr.mxu0 0.0
        %1285 = vmatpush2.msra.mxu0 0.0
        %1286 = vmatprep.subr.mxu0 0.0
        %1287 = vmatpush2.msra.mxu0 0.0
        %1288 = vmatprep.subr.mxu0 0.0
        %1289 = vmatpush2.msra.mxu0 0.0
        %1290 = vmatprep.mubr.f32.mxu0 0.0
        %1291 = vmatmul.mubr.f32.gmra.mxu0 %v1221
        %v1292 = vpop.f32.mrf.mxu0
        %v1293 = vadd.f32 0.0, %v1292
        %v1294 = vpop.f32.mrf.mxu0
        %1295 = vdwg.mxu0
        %v1296 = vsub.f32 %v820, %v1293
        %v1297 = vmul.f32 %v1296, 4.0
        %v1298 = vmax.f32 %v1297, -1.0
        %v1299 = vmin.f32 %v1298, 1.0
        %1300 = vst.msk [vmem:[%s611] sm:$0xff] %vm823, %v1299
        %v1302 = vsel %vm1142, %v656, 0
        %1304 = vmatprep.subr.mxu0 0.0
        %1305 = vmatpush1.msra.mxu0 0.0
        %1306 = vmatprep.subr.mxu0 0.0
        %1307 = vmatpush1.msra.mxu0 0.0
        %1308 = vmatprep.subr.mxu0 0.0
        %1309 = vmatpush1.msra.mxu0 0.0
        %1310 = vmatprep.subr.mxu0 0.0
        %1311 = vmatpush1.msra.mxu0 0.0
        %1312 = vmatprep.subr.mxu0 0.0
        %1313 = vmatpush1.msra.mxu0 0.0
        %1314 = vmatprep.subr.mxu0 0.0
        %1315 = vmatpush1.msra.mxu0 0.0
        %1316 = vmatprep.subr.mxu0 0.0
        %1317 = vmatpush1.msra.mxu0 0.0
        %1318 = vmatprep.subr.mxu0 0.0
        %1319 = vmatpush1.msra.mxu0 0.0
        %1320 = vmatprep.subr.mxu0 0.0
        %1321 = vmatpush1.msra.mxu0 0.0
        %1322 = vmatprep.subr.mxu0 0.0
        %1323 = vmatpush1.msra.mxu0 0.0
        %1324 = vmatprep.subr.mxu0 0.0
        %1325 = vmatpush1.msra.mxu0 0.0
        %1326 = vmatprep.subr.mxu0 0.0
        %1327 = vmatpush1.msra.mxu0 0.0
        %1328 = vmatprep.subr.mxu0 0.0
        %1329 = vmatpush1.msra.mxu0 0.0
        %1330 = vmatprep.subr.mxu0 0.0
        %1331 = vmatpush1.msra.mxu0 0.0
        %1332 = vmatprep.subr.mxu0 0.0
        %1333 = vmatpush1.msra.mxu0 0.0
        %1334 = vmatprep.subr.mxu0 0.0
        %1335 = vmatpush1.msra.mxu0 %v1148
        %1336 = vmatprep.subr.mxu0 0.0
        %1337 = vmatpush2.msra.mxu0 0.0
        %1338 = vmatprep.subr.mxu0 0.0
        %1339 = vmatpush2.msra.mxu0 0.0
        %1340 = vmatprep.subr.mxu0 0.0
        %1341 = vmatpush2.msra.mxu0 0.0
        %1342 = vmatprep.subr.mxu0 0.0
        %1343 = vmatpush2.msra.mxu0 0.0
        %1344 = vmatprep.subr.mxu0 0.0
        %1345 = vmatpush2.msra.mxu0 0.0
        %1346 = vmatprep.subr.mxu0 0.0
        %1347 = vmatpush2.msra.mxu0 0.0
        %1348 = vmatprep.subr.mxu0 0.0
        %1349 = vmatpush2.msra.mxu0 0.0
        %1350 = vmatprep.subr.mxu0 0.0
        %1351 = vmatpush2.msra.mxu0 0.0
        %1352 = vmatprep.subr.mxu0 0.0
        %1353 = vmatpush2.msra.mxu0 0.0
        %1354 = vmatprep.subr.mxu0 0.0
        %1355 = vmatpush2.msra.mxu0 0.0
        %1356 = vmatprep.subr.mxu0 0.0
        %1357 = vmatpush2.msra.mxu0 0.0
        %1358 = vmatprep.subr.mxu0 0.0
        %1359 = vmatpush2.msra.mxu0 0.0
        %1360 = vmatprep.subr.mxu0 0.0
        %1361 = vmatpush2.msra.mxu0 0.0
        %1362 = vmatprep.subr.mxu0 0.0
        %1363 = vmatpush2.msra.mxu0 0.0
        %1364 = vmatprep.subr.mxu0 0.0
        %1365 = vmatpush2.msra.mxu0 0.0
        %1366 = vmatprep.subr.mxu0 0.0
        %1367 = vmatpush2.msra.mxu0 0.0
        %1368 = vmatprep.mubr.f32.mxu0 0.0
        %1369 = vmatmul.mubr.f32.gmra.mxu0 %v1302
        %v1370 = vpop.f32.mrf.mxu0
        %v1371 = vadd.f32 0.0, %v1370
        %v1372 = vpop.f32.mrf.mxu0
        %1373 = vdwg.mxu0
        %v1375 = vsel %vm1142, %v1371, 0
        %v1378 = vsel %vm1146, %v657, 0
        %1380 = vmatprep.subr.mxu0 0.0
        %1381 = vmatpush1.msra.mxu0 0.0
        %1382 = vmatprep.subr.mxu0 0.0
        %1383 = vmatpush1.msra.mxu0 0.0
        %1384 = vmatprep.subr.mxu0 0.0
        %1385 = vmatpush1.msra.mxu0 0.0
        %1386 = vmatprep.subr.mxu0 0.0
        %1387 = vmatpush1.msra.mxu0 0.0
        %1388 = vmatprep.subr.mxu0 0.0
        %1389 = vmatpush1.msra.mxu0 0.0
        %1390 = vmatprep.subr.mxu0 0.0
        %1391 = vmatpush1.msra.mxu0 0.0
        %1392 = vmatprep.subr.mxu0 0.0
        %1393 = vmatpush1.msra.mxu0 0.0
        %1394 = vmatprep.subr.mxu0 0.0
        %1395 = vmatpush1.msra.mxu0 0.0
        %1396 = vmatprep.subr.mxu0 0.0
        %1397 = vmatpush1.msra.mxu0 0.0
        %1398 = vmatprep.subr.mxu0 0.0
        %1399 = vmatpush1.msra.mxu0 0.0
        %1400 = vmatprep.subr.mxu0 0.0
        %1401 = vmatpush1.msra.mxu0 0.0
        %1402 = vmatprep.subr.mxu0 0.0
        %1403 = vmatpush1.msra.mxu0 0.0
        %1404 = vmatprep.subr.mxu0 0.0
        %1405 = vmatpush1.msra.mxu0 0.0
        %1406 = vmatprep.subr.mxu0 0.0
        %1407 = vmatpush1.msra.mxu0 0.0
        %1408 = vmatprep.subr.mxu0 0.0
        %1409 = vmatpush1.msra.mxu0 0.0
        %1410 = vmatprep.subr.mxu0 0.0
        %1411 = vmatpush1.msra.mxu0 %v1378
        %1412 = vmatprep.subr.mxu0 0.0
        %1413 = vmatpush2.msra.mxu0 0.0
        %1414 = vmatprep.subr.mxu0 0.0
        %1415 = vmatpush2.msra.mxu0 0.0
        %1416 = vmatprep.subr.mxu0 0.0
        %1417 = vmatpush2.msra.mxu0 0.0
        %1418 = vmatprep.subr.mxu0 0.0
        %1419 = vmatpush2.msra.mxu0 0.0
        %1420 = vmatprep.subr.mxu0 0.0
        %1421 = vmatpush2.msra.mxu0 0.0
        %1422 = vmatprep.subr.mxu0 0.0
        %1423 = vmatpush2.msra.mxu0 0.0
        %1424 = vmatprep.subr.mxu0 0.0
        %1425 = vmatpush2.msra.mxu0 0.0
        %1426 = vmatprep.subr.mxu0 0.0
        %1427 = vmatpush2.msra.mxu0 0.0
        %1428 = vmatprep.subr.mxu0 0.0
        %1429 = vmatpush2.msra.mxu0 0.0
        %1430 = vmatprep.subr.mxu0 0.0
        %1431 = vmatpush2.msra.mxu0 0.0
        %1432 = vmatprep.subr.mxu0 0.0
        %1433 = vmatpush2.msra.mxu0 0.0
        %1434 = vmatprep.subr.mxu0 0.0
        %1435 = vmatpush2.msra.mxu0 0.0
        %1436 = vmatprep.subr.mxu0 0.0
        %1437 = vmatpush2.msra.mxu0 0.0
        %1438 = vmatprep.subr.mxu0 0.0
        %1439 = vmatpush2.msra.mxu0 0.0
        %1440 = vmatprep.subr.mxu0 0.0
        %1441 = vmatpush2.msra.mxu0 0.0
        %1442 = vmatprep.subr.mxu0 0.0
        %1443 = vmatpush2.msra.mxu0 0.0
        %1444 = vmatprep.mubr.f32.mxu0 0.0
        %1445 = vmatmul.mubr.f32.gmra.mxu0 %v1375
        %v1446 = vpop.f32.mrf.mxu0
        %v1447 = vadd.f32 0.0, %v1446
        %v1448 = vpop.f32.mrf.mxu0
        %1449 = vdwg.mxu0
        %vm1450 = vcmask 15360
        %v1452 = vsel %vm1450, %v663, 0
        %vm1454 = vcmask 1041408
        %v1456 = vsel %vm1454, %v1447, 0
        %1458 = vmatprep.subr.mxu0 0.0
        %1459 = vmatpush1.msra.mxu0 0.0
        %1460 = vmatprep.subr.mxu0 0.0
        %1461 = vmatpush1.msra.mxu0 0.0
        %1462 = vmatprep.subr.mxu0 0.0
        %1463 = vmatpush1.msra.mxu0 0.0
        %1464 = vmatprep.subr.mxu0 0.0
        %1465 = vmatpush1.msra.mxu0 0.0
        %1466 = vmatprep.subr.mxu0 0.0
        %1467 = vmatpush1.msra.mxu0 0.0
        %1468 = vmatprep.subr.mxu0 0.0
        %1469 = vmatpush1.msra.mxu0 0.0
        %1470 = vmatprep.subr.mxu0 0.0
        %1471 = vmatpush1.msra.mxu0 0.0
        %1472 = vmatprep.subr.mxu0 0.0
        %1473 = vmatpush1.msra.mxu0 0.0
        %1474 = vmatprep.subr.mxu0 0.0
        %1475 = vmatpush1.msra.mxu0 0.0
        %1476 = vmatprep.subr.mxu0 0.0
        %1477 = vmatpush1.msra.mxu0 0.0
        %1478 = vmatprep.subr.mxu0 0.0
        %1479 = vmatpush1.msra.mxu0 0.0
        %1480 = vmatprep.subr.mxu0 0.0
        %1481 = vmatpush1.msra.mxu0 0.0
        %1482 = vmatprep.subr.mxu0 0.0
        %1483 = vmatpush1.msra.mxu0 0.0
        %1484 = vmatprep.subr.mxu0 0.0
        %1485 = vmatpush1.msra.mxu0 0.0
        %1486 = vmatprep.subr.mxu0 0.0
        %1487 = vmatpush1.msra.mxu0 0.0
        %1488 = vmatprep.subr.mxu0 0.0
        %1489 = vmatpush1.msra.mxu0 %v1456
        %1490 = vmatprep.subr.mxu0 0.0
        %1491 = vmatpush2.msra.mxu0 0.0
        %1492 = vmatprep.subr.mxu0 0.0
        %1493 = vmatpush2.msra.mxu0 0.0
        %1494 = vmatprep.subr.mxu0 0.0
        %1495 = vmatpush2.msra.mxu0 0.0
        %1496 = vmatprep.subr.mxu0 0.0
        %1497 = vmatpush2.msra.mxu0 0.0
        %1498 = vmatprep.subr.mxu0 0.0
        %1499 = vmatpush2.msra.mxu0 0.0
        %1500 = vmatprep.subr.mxu0 0.0
        %1501 = vmatpush2.msra.mxu0 0.0
        %1502 = vmatprep.subr.mxu0 0.0
        %1503 = vmatpush2.msra.mxu0 0.0
        %1504 = vmatprep.subr.mxu0 0.0
        %1505 = vmatpush2.msra.mxu0 0.0
        %1506 = vmatprep.subr.mxu0 0.0
        %1507 = vmatpush2.msra.mxu0 0.0
        %1508 = vmatprep.subr.mxu0 0.0
        %1509 = vmatpush2.msra.mxu0 0.0
        %1510 = vmatprep.subr.mxu0 0.0
        %1511 = vmatpush2.msra.mxu0 0.0
        %1512 = vmatprep.subr.mxu0 0.0
        %1513 = vmatpush2.msra.mxu0 0.0
        %1514 = vmatprep.subr.mxu0 0.0
        %1515 = vmatpush2.msra.mxu0 0.0
        %1516 = vmatprep.subr.mxu0 0.0
        %1517 = vmatpush2.msra.mxu0 0.0
        %1518 = vmatprep.subr.mxu0 0.0
        %1519 = vmatpush2.msra.mxu0 0.0
        %1520 = vmatprep.subr.mxu0 0.0
        %1521 = vmatpush2.msra.mxu0 0.0
        %1522 = vmatprep.mubr.f32.mxu0 0.0
        %1523 = vmatmul.mubr.f32.gmra.mxu0 %v1452
        %v1524 = vpop.f32.mrf.mxu0
        %v1525 = vadd.f32 0.0, %v1524
        %v1526 = vpop.f32.mrf.mxu0
        %1527 = vdwg.mxu0
        %v1529 = vsel %vm1450, %v1525, 0
        %v1532 = vsel %vm1454, %v664, 0
        %1534 = vmatprep.subr.mxu0 0.0
        %1535 = vmatpush1.msra.mxu0 0.0
        %1536 = vmatprep.subr.mxu0 0.0
        %1537 = vmatpush1.msra.mxu0 0.0
        %1538 = vmatprep.subr.mxu0 0.0
        %1539 = vmatpush1.msra.mxu0 0.0
        %1540 = vmatprep.subr.mxu0 0.0
        %1541 = vmatpush1.msra.mxu0 0.0
        %1542 = vmatprep.subr.mxu0 0.0
        %1543 = vmatpush1.msra.mxu0 0.0
        %1544 = vmatprep.subr.mxu0 0.0
        %1545 = vmatpush1.msra.mxu0 0.0
        %1546 = vmatprep.subr.mxu0 0.0
        %1547 = vmatpush1.msra.mxu0 0.0
        %1548 = vmatprep.subr.mxu0 0.0
        %1549 = vmatpush1.msra.mxu0 0.0
        %1550 = vmatprep.subr.mxu0 0.0
        %1551 = vmatpush1.msra.mxu0 0.0
        %1552 = vmatprep.subr.mxu0 0.0
        %1553 = vmatpush1.msra.mxu0 0.0
        %1554 = vmatprep.subr.mxu0 0.0
        %1555 = vmatpush1.msra.mxu0 0.0
        %1556 = vmatprep.subr.mxu0 0.0
        %1557 = vmatpush1.msra.mxu0 0.0
        %1558 = vmatprep.subr.mxu0 0.0
        %1559 = vmatpush1.msra.mxu0 0.0
        %1560 = vmatprep.subr.mxu0 0.0
        %1561 = vmatpush1.msra.mxu0 0.0
        %1562 = vmatprep.subr.mxu0 0.0
        %1563 = vmatpush1.msra.mxu0 0.0
        %1564 = vmatprep.subr.mxu0 0.0
        %1565 = vmatpush1.msra.mxu0 %v1532
        %1566 = vmatprep.subr.mxu0 0.0
        %1567 = vmatpush2.msra.mxu0 0.0
        %1568 = vmatprep.subr.mxu0 0.0
        %1569 = vmatpush2.msra.mxu0 0.0
        %1570 = vmatprep.subr.mxu0 0.0
        %1571 = vmatpush2.msra.mxu0 0.0
        %1572 = vmatprep.subr.mxu0 0.0
        %1573 = vmatpush2.msra.mxu0 0.0
        %1574 = vmatprep.subr.mxu0 0.0
        %1575 = vmatpush2.msra.mxu0 0.0
        %1576 = vmatprep.subr.mxu0 0.0
        %1577 = vmatpush2.msra.mxu0 0.0
        %1578 = vmatprep.subr.mxu0 0.0
        %1579 = vmatpush2.msra.mxu0 0.0
        %1580 = vmatprep.subr.mxu0 0.0
        %1581 = vmatpush2.msra.mxu0 0.0
        %1582 = vmatprep.subr.mxu0 0.0
        %1583 = vmatpush2.msra.mxu0 0.0
        %1584 = vmatprep.subr.mxu0 0.0
        %1585 = vmatpush2.msra.mxu0 0.0
        %1586 = vmatprep.subr.mxu0 0.0
        %1587 = vmatpush2.msra.mxu0 0.0
        %1588 = vmatprep.subr.mxu0 0.0
        %1589 = vmatpush2.msra.mxu0 0.0
        %1590 = vmatprep.subr.mxu0 0.0
        %1591 = vmatpush2.msra.mxu0 0.0
        %1592 = vmatprep.subr.mxu0 0.0
        %1593 = vmatpush2.msra.mxu0 0.0
        %1594 = vmatprep.subr.mxu0 0.0
        %1595 = vmatpush2.msra.mxu0 0.0
        %1596 = vmatprep.subr.mxu0 0.0
        %1597 = vmatpush2.msra.mxu0 0.0
        %1598 = vmatprep.mubr.f32.mxu0 0.0
        %1599 = vmatmul.mubr.f32.gmra.mxu0 %v1529
        %v1600 = vpop.f32.mrf.mxu0
        %v1601 = vadd.f32 0.0, %v1600
        %v1602 = vpop.f32.mrf.mxu0
        %1603 = vdwg.mxu0
        %v1604 = vsub.f32 %v1139, %v1601
        %v1605 = vmul.f32 %v1604, 4.0
        %v1606 = vmax.f32 %v1605, -1.0
        %v1607 = vmin.f32 %v1606, 1.0
        %vm1608 = vcmask 27648
        %1609 = vst.msk [vmem:[%s618] sm:$0xf] %vm1608, %v1607
        %vm1610 = vcmask 9216
        %1611 = vst.msk [vmem:[%s645] sm:$0x3] %vm1610, %v1447
        %s1612 = sadd.s32 %s665, 1
        %s1613 = sld [smem:[#allocation2 + %s1612]]
        %s1614 = scalar_lea.vmem %s631, 16
        %v1615 = vld [vmem:[%s1614] sm:$0xff]
        %v1616 = vld [vmem:[%s1614 + $0x8] sm:$0xff]
        %v1617 = vmul.f32 %v647, %v1615
        %v1618 = vmul.f32 %v648, %v1616
        %v1619 = vstv %s1613
        %v1620 = vmul.f32 %v649, %v1619
        %v1621 = vmul.f32 %v650, %v1619
        %v1622 = vadd.f32 %v1617, %v1620
        %v1623 = vadd.f32 %v1618, %v1621
        %1624 = vmatprep.subr.mxu0 0.0
        %1625 = vmatpush1.msra.mxu0 0.0
        %1626 = vmatprep.subr.mxu0 0.0
        %1627 = vmatpush1.msra.mxu0 0.0
        %1628 = vmatprep.subr.mxu0 0.0
        %1629 = vmatpush1.msra.mxu0 0.0
        %1630 = vmatprep.subr.mxu0 0.0
        %1631 = vmatpush1.msra.mxu0 0.0
        %1632 = vmatprep.subr.mxu0 0.0
        %1633 = vmatpush1.msra.mxu0 0.0
        %1634 = vmatprep.subr.mxu0 0.0
        %1635 = vmatpush1.msra.mxu0 0.0
        %1636 = vmatprep.subr.mxu0 0.0
        %1637 = vmatpush1.msra.mxu0 0.0
        %1638 = vmatprep.subr.mxu0 0.0
        %1639 = vmatpush1.msra.mxu0 0.0
        %1640 = vmatprep.subr.mxu0 0.0
        %1641 = vmatpush1.msra.mxu0 0.0
        %1642 = vmatprep.subr.mxu0 0.0
        %1643 = vmatpush1.msra.mxu0 0.0
        %1644 = vmatprep.subr.mxu0 0.0
        %1645 = vmatpush1.msra.mxu0 0.0
        %1646 = vmatprep.subr.mxu0 0.0
        %1647 = vmatpush1.msra.mxu0 0.0
        %1648 = vmatprep.subr.mxu0 0.0
        %1649 = vmatpush1.msra.mxu0 0.0
        %1650 = vmatprep.subr.mxu0 0.0
        %1651 = vmatpush1.msra.mxu0 0.0
        %1652 = vmatprep.subr.mxu0 0.0
        %1653 = vmatpush1.msra.mxu0 %v1623
        %1654 = vmatprep.subr.mxu0 0.0
        %1655 = vmatpush1.msra.mxu0 %v1622
        %1656 = vmatprep.subr.mxu0 0.0
        %1657 = vmatpush2.msra.mxu0 0.0
        %1658 = vmatprep.subr.mxu0 0.0
        %1659 = vmatpush2.msra.mxu0 0.0
        %1660 = vmatprep.subr.mxu0 0.0
        %1661 = vmatpush2.msra.mxu0 0.0
        %1662 = vmatprep.subr.mxu0 0.0
        %1663 = vmatpush2.msra.mxu0 0.0
        %1664 = vmatprep.subr.mxu0 0.0
        %1665 = vmatpush2.msra.mxu0 0.0
        %1666 = vmatprep.subr.mxu0 0.0
        %1667 = vmatpush2.msra.mxu0 0.0
        %1668 = vmatprep.subr.mxu0 0.0
        %1669 = vmatpush2.msra.mxu0 0.0
        %1670 = vmatprep.subr.mxu0 0.0
        %1671 = vmatpush2.msra.mxu0 0.0
        %1672 = vmatprep.subr.mxu0 0.0
        %1673 = vmatpush2.msra.mxu0 0.0
        %1674 = vmatprep.subr.mxu0 0.0
        %1675 = vmatpush2.msra.mxu0 0.0
        %1676 = vmatprep.subr.mxu0 0.0
        %1677 = vmatpush2.msra.mxu0 0.0
        %1678 = vmatprep.subr.mxu0 0.0
        %1679 = vmatpush2.msra.mxu0 0.0
        %1680 = vmatprep.subr.mxu0 0.0
        %1681 = vmatpush2.msra.mxu0 0.0
        %1682 = vmatprep.subr.mxu0 0.0
        %1683 = vmatpush2.msra.mxu0 0.0
        %1684 = vmatprep.subr.mxu0 0.0
        %1685 = vmatpush2.msra.mxu0 0.0
        %1686 = vmatprep.subr.mxu0 0.0
        %1687 = vmatpush2.msra.mxu0 0.0
        %1688 = vmatprep.mubr.f32.mxu0 0.0
        %1689 = vmatmul.mubr.f32.gmra.mxu0 %v678
        %v1690 = vpop.f32.mrf.mxu0
        %v1691 = vadd.f32 0.0, %v1690
        %v1692 = vpop.f32.mrf.mxu0
        %1693 = vdwg.mxu0
        %v1695 = vsel %vm676, %v1691, 0
        %1697 = vmatprep.subr.mxu0 0.0
        %1698 = vmatpush1.msra.mxu0 0.0
        %1699 = vmatprep.subr.mxu0 0.0
        %1700 = vmatpush1.msra.mxu0 0.0
        %1701 = vmatprep.subr.mxu0 0.0
        %1702 = vmatpush1.msra.mxu0 0.0
        %1703 = vmatprep.subr.mxu0 0.0
        %1704 = vmatpush1.msra.mxu0 0.0
        %1705 = vmatprep.subr.mxu0 0.0
        %1706 = vmatpush1.msra.mxu0 0.0
        %1707 = vmatprep.subr.mxu0 0.0
        %1708 = vmatpush1.msra.mxu0 0.0
        %1709 = vmatprep.subr.mxu0 0.0
        %1710 = vmatpush1.msra.mxu0 0.0
        %1711 = vmatprep.subr.mxu0 0.0
        %1712 = vmatpush1.msra.mxu0 0.0
        %1713 = vmatprep.subr.mxu0 0.0
        %1714 = vmatpush1.msra.mxu0 0.0
        %1715 = vmatprep.subr.mxu0 0.0
        %1716 = vmatpush1.msra.mxu0 0.0
        %1717 = vmatprep.subr.mxu0 0.0
        %1718 = vmatpush1.msra.mxu0 0.0
        %1719 = vmatprep.subr.mxu0 0.0
        %1720 = vmatpush1.msra.mxu0 0.0
        %1721 = vmatprep.subr.mxu0 0.0
        %1722 = vmatpush1.msra.mxu0 0.0
        %1723 = vmatprep.subr.mxu0 0.0
        %1724 = vmatpush1.msra.mxu0 0.0
        %1725 = vmatprep.subr.mxu0 0.0
        %1726 = vmatpush1.msra.mxu0 %v653
        %1727 = vmatprep.subr.mxu0 0.0
        %1728 = vmatpush1.msra.mxu0 %v652
        %1729 = vmatprep.subr.mxu0 0.0
        %1730 = vmatpush2.msra.mxu0 0.0
        %1731 = vmatprep.subr.mxu0 0.0
        %1732 = vmatpush2.msra.mxu0 0.0
        %1733 = vmatprep.subr.mxu0 0.0
        %1734 = vmatpush2.msra.mxu0 0.0
        %1735 = vmatprep.subr.mxu0 0.0
        %1736 = vmatpush2.msra.mxu0 0.0
        %1737 = vmatprep.subr.mxu0 0.0
        %1738 = vmatpush2.msra.mxu0 0.0
        %1739 = vmatprep.subr.mxu0 0.0
        %1740 = vmatpush2.msra.mxu0 0.0
        %1741 = vmatprep.subr.mxu0 0.0
        %1742 = vmatpush2.msra.mxu0 0.0
        %1743 = vmatprep.subr.mxu0 0.0
        %1744 = vmatpush2.msra.mxu0 0.0
        %1745 = vmatprep.subr.mxu0 0.0
        %1746 = vmatpush2.msra.mxu0 0.0
        %1747 = vmatprep.subr.mxu0 0.0
        %1748 = vmatpush2.msra.mxu0 0.0
        %1749 = vmatprep.subr.mxu0 0.0
        %1750 = vmatpush2.msra.mxu0 0.0
        %1751 = vmatprep.subr.mxu0 0.0
        %1752 = vmatpush2.msra.mxu0 0.0
        %1753 = vmatprep.subr.mxu0 0.0
        %1754 = vmatpush2.msra.mxu0 0.0
        %1755 = vmatprep.subr.mxu0 0.0
        %1756 = vmatpush2.msra.mxu0 0.0
        %1757 = vmatprep.subr.mxu0 0.0
        %1758 = vmatpush2.msra.mxu0 0.0
        %1759 = vmatprep.subr.mxu0 0.0
        %1760 = vmatpush2.msra.mxu0 0.0
        %1761 = vmatprep.mubr.f32.mxu0 0.0
        %1762 = vmatmul.mubr.f32.gmra.mxu0 %v1695
        %v1763 = vpop.f32.mrf.mxu0
        %v1764 = vadd.f32 0.0, %v1763
        %v1765 = vpop.f32.mrf.mxu0
        %1766 = vdwg.mxu0
        %1767 = vmatprep.subr.mxu0 0.0
        %1768 = vmatpush1.msra.mxu0 0.0
        %1769 = vmatprep.subr.mxu0 0.0
        %1770 = vmatpush1.msra.mxu0 0.0
        %1771 = vmatprep.subr.mxu0 0.0
        %1772 = vmatpush1.msra.mxu0 0.0
        %1773 = vmatprep.subr.mxu0 0.0
        %1774 = vmatpush1.msra.mxu0 0.0
        %1775 = vmatprep.subr.mxu0 0.0
        %1776 = vmatpush1.msra.mxu0 0.0
        %1777 = vmatprep.subr.mxu0 0.0
        %1778 = vmatpush1.msra.mxu0 0.0
        %1779 = vmatprep.subr.mxu0 0.0
        %1780 = vmatpush1.msra.mxu0 0.0
        %1781 = vmatprep.subr.mxu0 0.0
        %1782 = vmatpush1.msra.mxu0 0.0
        %1783 = vmatprep.subr.mxu0 0.0
        %1784 = vmatpush1.msra.mxu0 0.0
        %1785 = vmatprep.subr.mxu0 0.0
        %1786 = vmatpush1.msra.mxu0 0.0
        %1787 = vmatprep.subr.mxu0 0.0
        %1788 = vmatpush1.msra.mxu0 0.0
        %1789 = vmatprep.subr.mxu0 0.0
        %1790 = vmatpush1.msra.mxu0 0.0
        %1791 = vmatprep.subr.mxu0 0.0
        %1792 = vmatpush1.msra.mxu0 0.0
        %1793 = vmatprep.subr.mxu0 0.0
        %1794 = vmatpush1.msra.mxu0 0.0
        %1795 = vmatprep.subr.mxu0 0.0
        %1796 = vmatpush1.msra.mxu0 0.0
        %1797 = vmatprep.subr.mxu0 0.0
        %1798 = vmatpush1.msra.mxu0 %v1764
        %1799 = vmatprep.subr.mxu0 0.0
        %1800 = vmatpush2.msra.mxu0 0.0
        %1801 = vmatprep.subr.mxu0 0.0
        %1802 = vmatpush2.msra.mxu0 0.0
        %1803 = vmatprep.subr.mxu0 0.0
        %1804 = vmatpush2.msra.mxu0 0.0
        %1805 = vmatprep.subr.mxu0 0.0
        %1806 = vmatpush2.msra.mxu0 0.0
        %1807 = vmatprep.subr.mxu0 0.0
        %1808 = vmatpush2.msra.mxu0 0.0
        %1809 = vmatprep.subr.mxu0 0.0
        %1810 = vmatpush2.msra.mxu0 0.0
        %1811 = vmatprep.subr.mxu0 0.0
        %1812 = vmatpush2.msra.mxu0 0.0
        %1813 = vmatprep.subr.mxu0 0.0
        %1814 = vmatpush2.msra.mxu0 0.0
        %1815 = vmatprep.subr.mxu0 0.0
        %1816 = vmatpush2.msra.mxu0 0.0
        %1817 = vmatprep.subr.mxu0 0.0
        %1818 = vmatpush2.msra.mxu0 0.0
        %1819 = vmatprep.subr.mxu0 0.0
        %1820 = vmatpush2.msra.mxu0 0.0
        %1821 = vmatprep.subr.mxu0 0.0
        %1822 = vmatpush2.msra.mxu0 0.0
        %1823 = vmatprep.subr.mxu0 0.0
        %1824 = vmatpush2.msra.mxu0 0.0
        %1825 = vmatprep.subr.mxu0 0.0
        %1826 = vmatpush2.msra.mxu0 0.0
        %1827 = vmatprep.subr.mxu0 0.0
        %1828 = vmatpush2.msra.mxu0 0.0
        %1829 = vmatprep.subr.mxu0 0.0
        %1830 = vmatpush2.msra.mxu0 0.0
        %1831 = vmatprep.mubr.f32.mxu0 0.0
        %1832 = vmatmul.mubr.f32.gmra.mxu0 %v825
        %v1833 = vpop.f32.mrf.mxu0
        %v1834 = vadd.f32 0.0, %v1833
        %v1835 = vpop.f32.mrf.mxu0
        %1836 = vmatprep.mubr.f32.mxu0 0.0
        %1837 = vmatmul.mubr.f32.gmra.mxu0 %v828
        %v1838 = vpop.f32.mrf.mxu0
        %v1839 = vadd.f32 0.0, %v1838
        %v1840 = vpop.f32.mrf.mxu0
        %1841 = vdwg.mxu0
        %v1843 = vsel %vm823, %v1834, 0
        %v1846 = vsel %vm823, %v1839, 0
        %1848 = vmatprep.subr.mxu0 0.0
        %1849 = vmatpush1.msra.mxu0 0.0
        %1850 = vmatprep.subr.mxu0 0.0
        %1851 = vmatpush1.msra.mxu0 0.0
        %1852 = vmatprep.subr.mxu0 0.0
        %1853 = vmatpush1.msra.mxu0 0.0
        %1854 = vmatprep.subr.mxu0 0.0
        %1855 = vmatpush1.msra.mxu0 0.0
        %1856 = vmatprep.subr.mxu0 0.0
        %1857 = vmatpush1.msra.mxu0 0.0
        %1858 = vmatprep.subr.mxu0 0.0
        %1859 = vmatpush1.msra.mxu0 0.0
        %1860 = vmatprep.subr.mxu0 0.0
        %1861 = vmatpush1.msra.mxu0 0.0
        %1862 = vmatprep.subr.mxu0 0.0
        %1863 = vmatpush1.msra.mxu0 0.0
        %1864 = vmatprep.subr.mxu0 0.0
        %1865 = vmatpush1.msra.mxu0 0.0
        %1866 = vmatprep.subr.mxu0 0.0
        %1867 = vmatpush1.msra.mxu0 0.0
        %1868 = vmatprep.subr.mxu0 0.0
        %1869 = vmatpush1.msra.mxu0 0.0
        %1870 = vmatprep.subr.mxu0 0.0
        %1871 = vmatpush1.msra.mxu0 0.0
        %1872 = vmatprep.subr.mxu0 0.0
        %1873 = vmatpush1.msra.mxu0 0.0
        %1874 = vmatprep.subr.mxu0 0.0
        %1875 = vmatpush1.msra.mxu0 0.0
        %1876 = vmatprep.subr.mxu0 0.0
        %1877 = vmatpush1.msra.mxu0 0.0
        %1878 = vmatprep.subr.mxu0 0.0
        %1879 = vmatpush1.msra.mxu0 %v660
        %1880 = vmatprep.subr.mxu0 0.0
        %1881 = vmatpush2.msra.mxu0 0.0
        %1882 = vmatprep.subr.mxu0 0.0
        %1883 = vmatpush2.msra.mxu0 0.0
        %1884 = vmatprep.subr.mxu0 0.0
        %1885 = vmatpush2.msra.mxu0 0.0
        %1886 = vmatprep.subr.mxu0 0.0
        %1887 = vmatpush2.msra.mxu0 0.0
        %1888 = vmatprep.subr.mxu0 0.0
        %1889 = vmatpush2.msra.mxu0 0.0
        %1890 = vmatprep.subr.mxu0 0.0
        %1891 = vmatpush2.msra.mxu0 0.0
        %1892 = vmatprep.subr.mxu0 0.0
        %1893 = vmatpush2.msra.mxu0 0.0
        %1894 = vmatprep.subr.mxu0 0.0
        %1895 = vmatpush2.msra.mxu0 0.0
        %1896 = vmatprep.subr.mxu0 0.0
        %1897 = vmatpush2.msra.mxu0 0.0
        %1898 = vmatprep.subr.mxu0 0.0
        %1899 = vmatpush2.msra.mxu0 0.0
        %1900 = vmatprep.subr.mxu0 0.0
        %1901 = vmatpush2.msra.mxu0 0.0
        %1902 = vmatprep.subr.mxu0 0.0
        %1903 = vmatpush2.msra.mxu0 0.0
        %1904 = vmatprep.subr.mxu0 0.0
        %1905 = vmatpush2.msra.mxu0 0.0
        %1906 = vmatprep.subr.mxu0 0.0
        %1907 = vmatpush2.msra.mxu0 0.0
        %1908 = vmatprep.subr.mxu0 0.0
        %1909 = vmatpush2.msra.mxu0 0.0
        %1910 = vmatprep.subr.mxu0 0.0
        %1911 = vmatpush2.msra.mxu0 0.0
        %1912 = vmatprep.mubr.f32.mxu0 0.0
        %1913 = vmatmul.mubr.f32.gmra.mxu0 %v1843
        %v1914 = vpop.f32.mrf.mxu0
        %v1915 = vadd.f32 0.0, %v1914
        %v1916 = vpop.f32.mrf.mxu0
        %1917 = vmatprep.mubr.f32.mxu0 0.0
        %1918 = vmatmul.mubr.f32.gmra.mxu0 %v1846
        %v1919 = vpop.f32.mrf.mxu0
        %v1920 = vadd.f32 0.0, %v1919
        %v1921 = vpop.f32.mrf.mxu0
        %1922 = vdwg.mxu0
        %v1923 = vsub.f32 %v1622, %v1915
        %v1924 = vsub.f32 %v1623, %v1920
        %v1925 = vmul.f32 %v1923, 4.0
        %v1926 = vmul.f32 %v1924, 4.0
        %v1927 = vmax.f32 %v1925, -1.0
        %v1928 = vmax.f32 %v1926, -1.0
        %v1929 = vmin.f32 %v1927, 1.0
        %v1930 = vmin.f32 %v1928, 1.0
        %s1931 = scalar_lea.vmem %s604, 16 [#allocation5]
        %1932 = vst.msk [vmem:[%s1931] sm:$0xff] %vm676, %v1929
        %1933 = vst.msk [vmem:[%s1931 + $0x8] sm:$0xff] %vm676, %v1930
        %1934 = vmatprep.subr.mxu0 0.0
        %1935 = vmatpush1.msra.mxu0 0.0
        %1936 = vmatprep.subr.mxu0 0.0
        %1937 = vmatpush1.msra.mxu0 0.0
        %1938 = vmatprep.subr.mxu0 0.0
        %1939 = vmatpush1.msra.mxu0 0.0
        %1940 = vmatprep.subr.mxu0 0.0
        %1941 = vmatpush1.msra.mxu0 0.0
        %1942 = vmatprep.subr.mxu0 0.0
        %1943 = vmatpush1.msra.mxu0 0.0
        %1944 = vmatprep.subr.mxu0 0.0
        %1945 = vmatpush1.msra.mxu0 0.0
        %1946 = vmatprep.subr.mxu0 0.0
        %1947 = vmatpush1.msra.mxu0 0.0
        %1948 = vmatprep.subr.mxu0 0.0
        %1949 = vmatpush1.msra.mxu0 0.0
        %1950 = vmatprep.subr.mxu0 0.0
        %1951 = vmatpush1.msra.mxu0 0.0
        %1952 = vmatprep.subr.mxu0 0.0
        %1953 = vmatpush1.msra.mxu0 0.0
        %1954 = vmatprep.subr.mxu0 0.0
        %1955 = vmatpush1.msra.mxu0 0.0
        %1956 = vmatprep.subr.mxu0 0.0
        %1957 = vmatpush1.msra.mxu0 0.0
        %1958 = vmatprep.subr.mxu0 0.0
        %1959 = vmatpush1.msra.mxu0 0.0
        %1960 = vmatprep.subr.mxu0 0.0
        %1961 = vmatpush1.msra.mxu0 0.0
        %1962 = vmatprep.subr.mxu0 0.0
        %1963 = vmatpush1.msra.mxu0 0.0
        %1964 = vmatprep.subr.mxu0 0.0
        %1965 = vmatpush1.msra.mxu0 %v1764
        %1966 = vmatprep.subr.mxu0 0.0
        %1967 = vmatpush2.msra.mxu0 0.0
        %1968 = vmatprep.subr.mxu0 0.0
        %1969 = vmatpush2.msra.mxu0 0.0
        %1970 = vmatprep.subr.mxu0 0.0
        %1971 = vmatpush2.msra.mxu0 0.0
        %1972 = vmatprep.subr.mxu0 0.0
        %1973 = vmatpush2.msra.mxu0 0.0
        %1974 = vmatprep.subr.mxu0 0.0
        %1975 = vmatpush2.msra.mxu0 0.0
        %1976 = vmatprep.subr.mxu0 0.0
        %1977 = vmatpush2.msra.mxu0 0.0
        %1978 = vmatprep.subr.mxu0 0.0
        %1979 = vmatpush2.msra.mxu0 0.0
        %1980 = vmatprep.subr.mxu0 0.0
        %1981 = vmatpush2.msra.mxu0 0.0
        %1982 = vmatprep.subr.mxu0 0.0
        %1983 = vmatpush2.msra.mxu0 0.0
        %1984 = vmatprep.subr.mxu0 0.0
        %1985 = vmatpush2.msra.mxu0 0.0
        %1986 = vmatprep.subr.mxu0 0.0
        %1987 = vmatpush2.msra.mxu0 0.0
        %1988 = vmatprep.subr.mxu0 0.0
        %1989 = vmatpush2.msra.mxu0 0.0
        %1990 = vmatprep.subr.mxu0 0.0
        %1991 = vmatpush2.msra.mxu0 0.0
        %1992 = vmatprep.subr.mxu0 0.0
        %1993 = vmatpush2.msra.mxu0 0.0
        %1994 = vmatprep.subr.mxu0 0.0
        %1995 = vmatpush2.msra.mxu0 0.0
        %1996 = vmatprep.subr.mxu0 0.0
        %1997 = vmatpush2.msra.mxu0 0.0
        %1998 = vmatprep.mubr.f32.mxu0 0.0
        %1999 = vmatmul.mubr.f32.gmra.mxu0 %v997
        %v2000 = vpop.f32.mrf.mxu0
        %v2001 = vadd.f32 0.0, %v2000
        %v2002 = vpop.f32.mrf.mxu0
        %2003 = vdwg.mxu0
        %v2005 = vsel %vm823, %v2001, 0
        %2007 = vmatprep.subr.mxu0 0.0
        %2008 = vmatpush1.msra.mxu0 0.0
        %2009 = vmatprep.subr.mxu0 0.0
        %2010 = vmatpush1.msra.mxu0 0.0
        %2011 = vmatprep.subr.mxu0 0.0
        %2012 = vmatpush1.msra.mxu0 0.0
        %2013 = vmatprep.subr.mxu0 0.0
        %2014 = vmatpush1.msra.mxu0 0.0
        %2015 = vmatprep.subr.mxu0 0.0
        %2016 = vmatpush1.msra.mxu0 0.0
        %2017 = vmatprep.subr.mxu0 0.0
        %2018 = vmatpush1.msra.mxu0 0.0
        %2019 = vmatprep.subr.mxu0 0.0
        %2020 = vmatpush1.msra.mxu0 0.0
        %2021 = vmatprep.subr.mxu0 0.0
        %2022 = vmatpush1.msra.mxu0 0.0
        %2023 = vmatprep.subr.mxu0 0.0
        %2024 = vmatpush1.msra.mxu0 0.0
        %2025 = vmatprep.subr.mxu0 0.0
        %2026 = vmatpush1.msra.mxu0 0.0
        %2027 = vmatprep.subr.mxu0 0.0
        %2028 = vmatpush1.msra.mxu0 0.0
        %2029 = vmatprep.subr.mxu0 0.0
        %2030 = vmatpush1.msra.mxu0 0.0
        %2031 = vmatprep.subr.mxu0 0.0
        %2032 = vmatpush1.msra.mxu0 0.0
        %2033 = vmatprep.subr.mxu0 0.0
        %2034 = vmatpush1.msra.mxu0 0.0
        %2035 = vmatprep.subr.mxu0 0.0
        %2036 = vmatpush1.msra.mxu0 0.0
        %2037 = vmatprep.subr.mxu0 0.0
        %2038 = vmatpush1.msra.mxu0 %v655
        %2039 = vmatprep.subr.mxu0 0.0
        %2040 = vmatpush2.msra.mxu0 0.0
        %2041 = vmatprep.subr.mxu0 0.0
        %2042 = vmatpush2.msra.mxu0 0.0
        %2043 = vmatprep.subr.mxu0 0.0
        %2044 = vmatpush2.msra.mxu0 0.0
        %2045 = vmatprep.subr.mxu0 0.0
        %2046 = vmatpush2.msra.mxu0 0.0
        %2047 = vmatprep.subr.mxu0 0.0
        %2048 = vmatpush2.msra.mxu0 0.0
        %2049 = vmatprep.subr.mxu0 0.0
        %2050 = vmatpush2.msra.mxu0 0.0
        %2051 = vmatprep.subr.mxu0 0.0
        %2052 = vmatpush2.msra.mxu0 0.0
        %2053 = vmatprep.subr.mxu0 0.0
        %2054 = vmatpush2.msra.mxu0 0.0
        %2055 = vmatprep.subr.mxu0 0.0
        %2056 = vmatpush2.msra.mxu0 0.0
        %2057 = vmatprep.subr.mxu0 0.0
        %2058 = vmatpush2.msra.mxu0 0.0
        %2059 = vmatprep.subr.mxu0 0.0
        %2060 = vmatpush2.msra.mxu0 0.0
        %2061 = vmatprep.subr.mxu0 0.0
        %2062 = vmatpush2.msra.mxu0 0.0
        %2063 = vmatprep.subr.mxu0 0.0
        %2064 = vmatpush2.msra.mxu0 0.0
        %2065 = vmatprep.subr.mxu0 0.0
        %2066 = vmatpush2.msra.mxu0 0.0
        %2067 = vmatprep.subr.mxu0 0.0
        %2068 = vmatpush2.msra.mxu0 0.0
        %2069 = vmatprep.subr.mxu0 0.0
        %2070 = vmatpush2.msra.mxu0 0.0
        %2071 = vmatprep.mubr.f32.mxu0 0.0
        %2072 = vmatmul.mubr.f32.gmra.mxu0 %v2005
        %v2073 = vpop.f32.mrf.mxu0
        %v2074 = vadd.f32 0.0, %v2073
        %v2075 = vpop.f32.mrf.mxu0
        %2076 = vdwg.mxu0
        %v2078 = vsel %vm1146, %v2074, 0
        %2080 = vmatprep.subr.mxu0 0.0
        %2081 = vmatpush1.msra.mxu0 0.0
        %2082 = vmatprep.subr.mxu0 0.0
        %2083 = vmatpush1.msra.mxu0 0.0
        %2084 = vmatprep.subr.mxu0 0.0
        %2085 = vmatpush1.msra.mxu0 0.0
        %2086 = vmatprep.subr.mxu0 0.0
        %2087 = vmatpush1.msra.mxu0 0.0
        %2088 = vmatprep.subr.mxu0 0.0
        %2089 = vmatpush1.msra.mxu0 0.0
        %2090 = vmatprep.subr.mxu0 0.0
        %2091 = vmatpush1.msra.mxu0 0.0
        %2092 = vmatprep.subr.mxu0 0.0
        %2093 = vmatpush1.msra.mxu0 0.0
        %2094 = vmatprep.subr.mxu0 0.0
        %2095 = vmatpush1.msra.mxu0 0.0
        %2096 = vmatprep.subr.mxu0 0.0
        %2097 = vmatpush1.msra.mxu0 0.0
        %2098 = vmatprep.subr.mxu0 0.0
        %2099 = vmatpush1.msra.mxu0 0.0
        %2100 = vmatprep.subr.mxu0 0.0
        %2101 = vmatpush1.msra.mxu0 0.0
        %2102 = vmatprep.subr.mxu0 0.0
        %2103 = vmatpush1.msra.mxu0 0.0
        %2104 = vmatprep.subr.mxu0 0.0
        %2105 = vmatpush1.msra.mxu0 0.0
        %2106 = vmatprep.subr.mxu0 0.0
        %2107 = vmatpush1.msra.mxu0 0.0
        %2108 = vmatprep.subr.mxu0 0.0
        %2109 = vmatpush1.msra.mxu0 0.0
        %2110 = vmatprep.subr.mxu0 0.0
        %2111 = vmatpush1.msra.mxu0 %v2078
        %2112 = vmatprep.subr.mxu0 0.0
        %2113 = vmatpush2.msra.mxu0 0.0
        %2114 = vmatprep.subr.mxu0 0.0
        %2115 = vmatpush2.msra.mxu0 0.0
        %2116 = vmatprep.subr.mxu0 0.0
        %2117 = vmatpush2.msra.mxu0 0.0
        %2118 = vmatprep.subr.mxu0 0.0
        %2119 = vmatpush2.msra.mxu0 0.0
        %2120 = vmatprep.subr.mxu0 0.0
        %2121 = vmatpush2.msra.mxu0 0.0
        %2122 = vmatprep.subr.mxu0 0.0
        %2123 = vmatpush2.msra.mxu0 0.0
        %2124 = vmatprep.subr.mxu0 0.0
        %2125 = vmatpush2.msra.mxu0 0.0
        %2126 = vmatprep.subr.mxu0 0.0
        %2127 = vmatpush2.msra.mxu0 0.0
        %2128 = vmatprep.subr.mxu0 0.0
        %2129 = vmatpush2.msra.mxu0 0.0
        %2130 = vmatprep.subr.mxu0 0.0
        %2131 = vmatpush2.msra.mxu0 0.0
        %2132 = vmatprep.subr.mxu0 0.0
        %2133 = vmatpush2.msra.mxu0 0.0
        %2134 = vmatprep.subr.mxu0 0.0
        %2135 = vmatpush2.msra.mxu0 0.0
        %2136 = vmatprep.subr.mxu0 0.0
        %2137 = vmatpush2.msra.mxu0 0.0
        %2138 = vmatprep.subr.mxu0 0.0
        %2139 = vmatpush2.msra.mxu0 0.0
        %2140 = vmatprep.subr.mxu0 0.0
        %2141 = vmatpush2.msra.mxu0 0.0
        %2142 = vmatprep.subr.mxu0 0.0
        %2143 = vmatpush2.msra.mxu0 0.0
        %2144 = vmatprep.mubr.f32.mxu0 0.0
        %2145 = vmatmul.mubr.f32.gmra.mxu0 %v1144
        %v2146 = vpop.f32.mrf.mxu0
        %v2147 = vadd.f32 0.0, %v2146
        %v2148 = vpop.f32.mrf.mxu0
        %2149 = vdwg.mxu0
        %v2151 = vsel %vm1142, %v2147, 0
        %2153 = vmatprep.subr.mxu0 0.0
        %2154 = vmatpush1.msra.mxu0 0.0
        %2155 = vmatprep.subr.mxu0 0.0
        %2156 = vmatpush1.msra.mxu0 0.0
        %2157 = vmatprep.subr.mxu0 0.0
        %2158 = vmatpush1.msra.mxu0 0.0
        %2159 = vmatprep.subr.mxu0 0.0
        %2160 = vmatpush1.msra.mxu0 0.0
        %2161 = vmatprep.subr.mxu0 0.0
        %2162 = vmatpush1.msra.mxu0 0.0
        %2163 = vmatprep.subr.mxu0 0.0
        %2164 = vmatpush1.msra.mxu0 0.0
        %2165 = vmatprep.subr.mxu0 0.0
        %2166 = vmatpush1.msra.mxu0 0.0
        %2167 = vmatprep.subr.mxu0 0.0
        %2168 = vmatpush1.msra.mxu0 0.0
        %2169 = vmatprep.subr.mxu0 0.0
        %2170 = vmatpush1.msra.mxu0 0.0
        %2171 = vmatprep.subr.mxu0 0.0
        %2172 = vmatpush1.msra.mxu0 0.0
        %2173 = vmatprep.subr.mxu0 0.0
        %2174 = vmatpush1.msra.mxu0 0.0
        %2175 = vmatprep.subr.mxu0 0.0
        %2176 = vmatpush1.msra.mxu0 0.0
        %2177 = vmatprep.subr.mxu0 0.0
        %2178 = vmatpush1.msra.mxu0 0.0
        %2179 = vmatprep.subr.mxu0 0.0
        %2180 = vmatpush1.msra.mxu0 0.0
        %2181 = vmatprep.subr.mxu0 0.0
        %2182 = vmatpush1.msra.mxu0 0.0
        %2183 = vmatprep.subr.mxu0 0.0
        %2184 = vmatpush1.msra.mxu0 %v1224
        %2185 = vmatprep.subr.mxu0 0.0
        %2186 = vmatpush2.msra.mxu0 0.0
        %2187 = vmatprep.subr.mxu0 0.0
        %2188 = vmatpush2.msra.mxu0 0.0
        %2189 = vmatprep.subr.mxu0 0.0
        %2190 = vmatpush2.msra.mxu0 0.0
        %2191 = vmatprep.subr.mxu0 0.0
        %2192 = vmatpush2.msra.mxu0 0.0
        %2193 = vmatprep.subr.mxu0 0.0
        %2194 = vmatpush2.msra.mxu0 0.0
        %2195 = vmatprep.subr.mxu0 0.0
        %2196 = vmatpush2.msra.mxu0 0.0
        %2197 = vmatprep.subr.mxu0 0.0
        %2198 = vmatpush2.msra.mxu0 0.0
        %2199 = vmatprep.subr.mxu0 0.0
        %2200 = vmatpush2.msra.mxu0 0.0
        %2201 = vmatprep.subr.mxu0 0.0
        %2202 = vmatpush2.msra.mxu0 0.0
        %2203 = vmatprep.subr.mxu0 0.0
        %2204 = vmatpush2.msra.mxu0 0.0
        %2205 = vmatprep.subr.mxu0 0.0
        %2206 = vmatpush2.msra.mxu0 0.0
        %2207 = vmatprep.subr.mxu0 0.0
        %2208 = vmatpush2.msra.mxu0 0.0
        %2209 = vmatprep.subr.mxu0 0.0
        %2210 = vmatpush2.msra.mxu0 0.0
        %2211 = vmatprep.subr.mxu0 0.0
        %2212 = vmatpush2.msra.mxu0 0.0
        %2213 = vmatprep.subr.mxu0 0.0
        %2214 = vmatpush2.msra.mxu0 0.0
        %2215 = vmatprep.subr.mxu0 0.0
        %2216 = vmatpush2.msra.mxu0 0.0
        %2217 = vmatprep.mubr.f32.mxu0 0.0
        %2218 = vmatmul.mubr.f32.gmra.mxu0 %v2151
        %v2219 = vpop.f32.mrf.mxu0
        %v2220 = vadd.f32 0.0, %v2219
        %v2221 = vpop.f32.mrf.mxu0
        %2222 = vdwg.mxu0
        %v2223 = vsub.f32 %v1764, %v2220
        %v2224 = vmul.f32 %v2223, 4.0
        %v2225 = vmax.f32 %v2224, -1.0
        %v2226 = vmin.f32 %v2225, 1.0
        %s2227 = scalar_lea.vmem %s611, 8 [#allocation6]
        %2228 = vst.msk [vmem:[%s2227] sm:$0xff] %vm823, %v2226
        %2229 = vmatprep.subr.mxu0 0.0
        %2230 = vmatpush1.msra.mxu0 0.0
        %2231 = vmatprep.subr.mxu0 0.0
        %2232 = vmatpush1.msra.mxu0 0.0
        %2233 = vmatprep.subr.mxu0 0.0
        %2234 = vmatpush1.msra.mxu0 0.0
        %2235 = vmatprep.subr.mxu0 0.0
        %2236 = vmatpush1.msra.mxu0 0.0
        %2237 = vmatprep.subr.mxu0 0.0
        %2238 = vmatpush1.msra.mxu0 0.0
        %2239 = vmatprep.subr.mxu0 0.0
        %2240 = vmatpush1.msra.mxu0 0.0
        %2241 = vmatprep.subr.mxu0 0.0
        %2242 = vmatpush1.msra.mxu0 0.0
        %2243 = vmatprep.subr.mxu0 0.0
        %2244 = vmatpush1.msra.mxu0 0.0
        %2245 = vmatprep.subr.mxu0 0.0
        %2246 = vmatpush1.msra.mxu0 0.0
        %2247 = vmatprep.subr.mxu0 0.0
        %2248 = vmatpush1.msra.mxu0 0.0
        %2249 = vmatprep.subr.mxu0 0.0
        %2250 = vmatpush1.msra.mxu0 0.0
        %2251 = vmatprep.subr.mxu0 0.0
        %2252 = vmatpush1.msra.mxu0 0.0
        %2253 = vmatprep.subr.mxu0 0.0
        %2254 = vmatpush1.msra.mxu0 0.0
        %2255 = vmatprep.subr.mxu0 0.0
        %2256 = vmatpush1.msra.mxu0 0.0
        %2257 = vmatprep.subr.mxu0 0.0
        %2258 = vmatpush1.msra.mxu0 0.0
        %2259 = vmatprep.subr.mxu0 0.0
        %2260 = vmatpush1.msra.mxu0 %v2078
        %2261 = vmatprep.subr.mxu0 0.0
        %2262 = vmatpush2.msra.mxu0 0.0
        %2263 = vmatprep.subr.mxu0 0.0
        %2264 = vmatpush2.msra.mxu0 0.0
        %2265 = vmatprep.subr.mxu0 0.0
        %2266 = vmatpush2.msra.mxu0 0.0
        %2267 = vmatprep.subr.mxu0 0.0
        %2268 = vmatpush2.msra.mxu0 0.0
        %2269 = vmatprep.subr.mxu0 0.0
        %2270 = vmatpush2.msra.mxu0 0.0
        %2271 = vmatprep.subr.mxu0 0.0
        %2272 = vmatpush2.msra.mxu0 0.0
        %2273 = vmatprep.subr.mxu0 0.0
        %2274 = vmatpush2.msra.mxu0 0.0
        %2275 = vmatprep.subr.mxu0 0.0
        %2276 = vmatpush2.msra.mxu0 0.0
        %2277 = vmatprep.subr.mxu0 0.0
        %2278 = vmatpush2.msra.mxu0 0.0
        %2279 = vmatprep.subr.mxu0 0.0
        %2280 = vmatpush2.msra.mxu0 0.0
        %2281 = vmatprep.subr.mxu0 0.0
        %2282 = vmatpush2.msra.mxu0 0.0
        %2283 = vmatprep.subr.mxu0 0.0
        %2284 = vmatpush2.msra.mxu0 0.0
        %2285 = vmatprep.subr.mxu0 0.0
        %2286 = vmatpush2.msra.mxu0 0.0
        %2287 = vmatprep.subr.mxu0 0.0
        %2288 = vmatpush2.msra.mxu0 0.0
        %2289 = vmatprep.subr.mxu0 0.0
        %2290 = vmatpush2.msra.mxu0 0.0
        %2291 = vmatprep.subr.mxu0 0.0
        %2292 = vmatpush2.msra.mxu0 0.0
        %2293 = vmatprep.mubr.f32.mxu0 0.0
        %2294 = vmatmul.mubr.f32.gmra.mxu0 %v1302
        %v2295 = vpop.f32.mrf.mxu0
        %v2296 = vadd.f32 0.0, %v2295
        %v2297 = vpop.f32.mrf.mxu0
        %2298 = vdwg.mxu0
        %v2300 = vsel %vm1142, %v2296, 0
        %2302 = vmatprep.subr.mxu0 0.0
        %2303 = vmatpush1.msra.mxu0 0.0
        %2304 = vmatprep.subr.mxu0 0.0
        %2305 = vmatpush1.msra.mxu0 0.0
        %2306 = vmatprep.subr.mxu0 0.0
        %2307 = vmatpush1.msra.mxu0 0.0
        %2308 = vmatprep.subr.mxu0 0.0
        %2309 = vmatpush1.msra.mxu0 0.0
        %2310 = vmatprep.subr.mxu0 0.0
        %2311 = vmatpush1.msra.mxu0 0.0
        %2312 = vmatprep.subr.mxu0 0.0
        %2313 = vmatpush1.msra.mxu0 0.0
        %2314 = vmatprep.subr.mxu0 0.0
        %2315 = vmatpush1.msra.mxu0 0.0
        %2316 = vmatprep.subr.mxu0 0.0
        %2317 = vmatpush1.msra.mxu0 0.0
        %2318 = vmatprep.subr.mxu0 0.0
        %2319 = vmatpush1.msra.mxu0 0.0
        %2320 = vmatprep.subr.mxu0 0.0
        %2321 = vmatpush1.msra.mxu0 0.0
        %2322 = vmatprep.subr.mxu0 0.0
        %2323 = vmatpush1.msra.mxu0 0.0
        %2324 = vmatprep.subr.mxu0 0.0
        %2325 = vmatpush1.msra.mxu0 0.0
        %2326 = vmatprep.subr.mxu0 0.0
        %2327 = vmatpush1.msra.mxu0 0.0
        %2328 = vmatprep.subr.mxu0 0.0
        %2329 = vmatpush1.msra.mxu0 0.0
        %2330 = vmatprep.subr.mxu0 0.0
        %2331 = vmatpush1.msra.mxu0 0.0
        %2332 = vmatprep.subr.mxu0 0.0
        %2333 = vmatpush1.msra.mxu0 %v1378
        %2334 = vmatprep.subr.mxu0 0.0
        %2335 = vmatpush2.msra.mxu0 0.0
        %2336 = vmatprep.subr.mxu0 0.0
        %2337 = vmatpush2.msra.mxu0 0.0
        %2338 = vmatprep.subr.mxu0 0.0
        %2339 = vmatpush2.msra.mxu0 0.0
        %2340 = vmatprep.subr.mxu0 0.0
        %2341 = vmatpush2.msra.mxu0 0.0
        %2342 = vmatprep.subr.mxu0 0.0
        %2343 = vmatpush2.msra.mxu0 0.0
        %2344 = vmatprep.subr.mxu0 0.0
        %2345 = vmatpush2.msra.mxu0 0.0
        %2346 = vmatprep.subr.mxu0 0.0
        %2347 = vmatpush2.msra.mxu0 0.0
        %2348 = vmatprep.subr.mxu0 0.0
        %2349 = vmatpush2.msra.mxu0 0.0
        %2350 = vmatprep.subr.mxu0 0.0
        %2351 = vmatpush2.msra.mxu0 0.0
        %2352 = vmatprep.subr.mxu0 0.0
        %2353 = vmatpush2.msra.mxu0 0.0
        %2354 = vmatprep.subr.mxu0 0.0
        %2355 = vmatpush2.msra.mxu0 0.0
        %2356 = vmatprep.subr.mxu0 0.0
        %2357 = vmatpush2.msra.mxu0 0.0
        %2358 = vmatprep.subr.mxu0 0.0
        %2359 = vmatpush2.msra.mxu0 0.0
        %2360 = vmatprep.subr.mxu0 0.0
        %2361 = vmatpush2.msra.mxu0 0.0
        %2362 = vmatprep.subr.mxu0 0.0
        %2363 = vmatpush2.msra.mxu0 0.0
        %2364 = vmatprep.subr.mxu0 0.0
        %2365 = vmatpush2.msra.mxu0 0.0
        %2366 = vmatprep.mubr.f32.mxu0 0.0
        %2367 = vmatmul.mubr.f32.gmra.mxu0 %v2300
        %v2368 = vpop.f32.mrf.mxu0
        %v2369 = vadd.f32 0.0, %v2368
        %v2370 = vpop.f32.mrf.mxu0
        %2371 = vdwg.mxu0
        %v2373 = vsel %vm1454, %v2369, 0
        %2375 = vmatprep.subr.mxu0 0.0
        %2376 = vmatpush1.msra.mxu0 0.0
        %2377 = vmatprep.subr.mxu0 0.0
        %2378 = vmatpush1.msra.mxu0 0.0
        %2379 = vmatprep.subr.mxu0 0.0
        %2380 = vmatpush1.msra.mxu0 0.0
        %2381 = vmatprep.subr.mxu0 0.0
        %2382 = vmatpush1.msra.mxu0 0.0
        %2383 = vmatprep.subr.mxu0 0.0
        %2384 = vmatpush1.msra.mxu0 0.0
        %2385 = vmatprep.subr.mxu0 0.0
        %2386 = vmatpush1.msra.mxu0 0.0
        %2387 = vmatprep.subr.mxu0 0.0
        %2388 = vmatpush1.msra.mxu0 0.0
        %2389 = vmatprep.subr.mxu0 0.0
        %2390 = vmatpush1.msra.mxu0 0.0
        %2391 = vmatprep.subr.mxu0 0.0
        %2392 = vmatpush1.msra.mxu0 0.0
        %2393 = vmatprep.subr.mxu0 0.0
        %2394 = vmatpush1.msra.mxu0 0.0
        %2395 = vmatprep.subr.mxu0 0.0
        %2396 = vmatpush1.msra.mxu0 0.0
        %2397 = vmatprep.subr.mxu0 0.0
        %2398 = vmatpush1.msra.mxu0 0.0
        %2399 = vmatprep.subr.mxu0 0.0
        %2400 = vmatpush1.msra.mxu0 0.0
        %2401 = vmatprep.subr.mxu0 0.0
        %2402 = vmatpush1.msra.mxu0 0.0
        %2403 = vmatprep.subr.mxu0 0.0
        %2404 = vmatpush1.msra.mxu0 0.0
        %2405 = vmatprep.subr.mxu0 0.0
        %2406 = vmatpush1.msra.mxu0 %v2373
        %2407 = vmatprep.subr.mxu0 0.0
        %2408 = vmatpush2.msra.mxu0 0.0
        %2409 = vmatprep.subr.mxu0 0.0
        %2410 = vmatpush2.msra.mxu0 0.0
        %2411 = vmatprep.subr.mxu0 0.0
        %2412 = vmatpush2.msra.mxu0 0.0
        %2413 = vmatprep.subr.mxu0 0.0
        %2414 = vmatpush2.msra.mxu0 0.0
        %2415 = vmatprep.subr.mxu0 0.0
        %2416 = vmatpush2.msra.mxu0 0.0
        %2417 = vmatprep.subr.mxu0 0.0
        %2418 = vmatpush2.msra.mxu0 0.0
        %2419 = vmatprep.subr.mxu0 0.0
        %2420 = vmatpush2.msra.mxu0 0.0
        %2421 = vmatprep.subr.mxu0 0.0
        %2422 = vmatpush2.msra.mxu0 0.0
        %2423 = vmatprep.subr.mxu0 0.0
        %2424 = vmatpush2.msra.mxu0 0.0
        %2425 = vmatprep.subr.mxu0 0.0
        %2426 = vmatpush2.msra.mxu0 0.0
        %2427 = vmatprep.subr.mxu0 0.0
        %2428 = vmatpush2.msra.mxu0 0.0
        %2429 = vmatprep.subr.mxu0 0.0
        %2430 = vmatpush2.msra.mxu0 0.0
        %2431 = vmatprep.subr.mxu0 0.0
        %2432 = vmatpush2.msra.mxu0 0.0
        %2433 = vmatprep.subr.mxu0 0.0
        %2434 = vmatpush2.msra.mxu0 0.0
        %2435 = vmatprep.subr.mxu0 0.0
        %2436 = vmatpush2.msra.mxu0 0.0
        %2437 = vmatprep.subr.mxu0 0.0
        %2438 = vmatpush2.msra.mxu0 0.0
        %2439 = vmatprep.mubr.f32.mxu0 0.0
        %2440 = vmatmul.mubr.f32.gmra.mxu0 %v1452
        %v2441 = vpop.f32.mrf.mxu0
        %v2442 = vadd.f32 0.0, %v2441
        %v2443 = vpop.f32.mrf.mxu0
        %2444 = vdwg.mxu0
        %v2446 = vsel %vm1450, %v2442, 0
        %2448 = vmatprep.subr.mxu0 0.0
        %2449 = vmatpush1.msra.mxu0 0.0
        %2450 = vmatprep.subr.mxu0 0.0
        %2451 = vmatpush1.msra.mxu0 0.0
        %2452 = vmatprep.subr.mxu0 0.0
        %2453 = vmatpush1.msra.mxu0 0.0
        %2454 = vmatprep.subr.mxu0 0.0
        %2455 = vmatpush1.msra.mxu0 0.0
        %2456 = vmatprep.subr.mxu0 0.0
        %2457 = vmatpush1.msra.mxu0 0.0
        %2458 = vmatprep.subr.mxu0 0.0
        %2459 = vmatpush1.msra.mxu0 0.0
        %2460 = vmatprep.subr.mxu0 0.0
        %2461 = vmatpush1.msra.mxu0 0.0
        %2462 = vmatprep.subr.mxu0 0.0
        %2463 = vmatpush1.msra.mxu0 0.0
        %2464 = vmatprep.subr.mxu0 0.0
        %2465 = vmatpush1.msra.mxu0 0.0
        %2466 = vmatprep.subr.mxu0 0.0
        %2467 = vmatpush1.msra.mxu0 0.0
        %2468 = vmatprep.subr.mxu0 0.0
        %2469 = vmatpush1.msra.mxu0 0.0
        %2470 = vmatprep.subr.mxu0 0.0
        %2471 = vmatpush1.msra.mxu0 0.0
        %2472 = vmatprep.subr.mxu0 0.0
        %2473 = vmatpush1.msra.mxu0 0.0
        %2474 = vmatprep.subr.mxu0 0.0
        %2475 = vmatpush1.msra.mxu0 0.0
        %2476 = vmatprep.subr.mxu0 0.0
        %2477 = vmatpush1.msra.mxu0 0.0
        %2478 = vmatprep.subr.mxu0 0.0
        %2479 = vmatpush1.msra.mxu0 %v1532
        %2480 = vmatprep.subr.mxu0 0.0
        %2481 = vmatpush2.msra.mxu0 0.0
        %2482 = vmatprep.subr.mxu0 0.0
        %2483 = vmatpush2.msra.mxu0 0.0
        %2484 = vmatprep.subr.mxu0 0.0
        %2485 = vmatpush2.msra.mxu0 0.0
        %2486 = vmatprep.subr.mxu0 0.0
        %2487 = vmatpush2.msra.mxu0 0.0
        %2488 = vmatprep.subr.mxu0 0.0
        %2489 = vmatpush2.msra.mxu0 0.0
        %2490 = vmatprep.subr.mxu0 0.0
        %2491 = vmatpush2.msra.mxu0 0.0
        %2492 = vmatprep.subr.mxu0 0.0
        %2493 = vmatpush2.msra.mxu0 0.0
        %2494 = vmatprep.subr.mxu0 0.0
        %2495 = vmatpush2.msra.mxu0 0.0
        %2496 = vmatprep.subr.mxu0 0.0
        %2497 = vmatpush2.msra.mxu0 0.0
        %2498 = vmatprep.subr.mxu0 0.0
        %2499 = vmatpush2.msra.mxu0 0.0
        %2500 = vmatprep.subr.mxu0 0.0
        %2501 = vmatpush2.msra.mxu0 0.0
        %2502 = vmatprep.subr.mxu0 0.0
        %2503 = vmatpush2.msra.mxu0 0.0
        %2504 = vmatprep.subr.mxu0 0.0
        %2505 = vmatpush2.msra.mxu0 0.0
        %2506 = vmatprep.subr.mxu0 0.0
        %2507 = vmatpush2.msra.mxu0 0.0
        %2508 = vmatprep.subr.mxu0 0.0
        %2509 = vmatpush2.msra.mxu0 0.0
        %2510 = vmatprep.subr.mxu0 0.0
        %2511 = vmatpush2.msra.mxu0 0.0
        %2512 = vmatprep.mubr.f32.mxu0 0.0
        %2513 = vmatmul.mubr.f32.gmra.mxu0 %v2446
        %v2514 = vpop.f32.mrf.mxu0
        %v2515 = vadd.f32 0.0, %v2514
        %v2516 = vpop.f32.mrf.mxu0
        %2517 = vdwg.mxu0
        %v2518 = vsub.f32 %v2074, %v2515
        %v2519 = vmul.f32 %v2518, 4.0
        %v2520 = vmax.f32 %v2519, -1.0
        %v2521 = vmin.f32 %v2520, 1.0
        %s2522 = scalar_lea.vmem %s618, 4 [#allocation8]
        %2523 = vst.msk [vmem:[%s2522] sm:$0xf] %vm1608, %v2521
        %s2524 = scalar_lea.vmem %s645, 2
        %2525 = vst.msk [vmem:[%s2524] sm:$0x3] %vm1610, %v2369
        %s2526 = sadd.s32 %s665, 2
        %s2527 = sld [smem:[#allocation2 + %s2526]]
        %s2528 = scalar_lea.vmem %s631, 32
        %v2529 = vld [vmem:[%s2528] sm:$0xff]
        %v2530 = vld [vmem:[%s2528 + $0x8] sm:$0xff]
        %v2531 = vmul.f32 %v647, %v2529
        %v2532 = vmul.f32 %v648, %v2530
        %v2533 = vstv %s2527
        %v2534 = vmul.f32 %v649, %v2533
        %v2535 = vmul.f32 %v650, %v2533
        %v2536 = vadd.f32 %v2531, %v2534
        %v2537 = vadd.f32 %v2532, %v2535
        %2538 = vmatprep.subr.mxu0 0.0
        %2539 = vmatpush1.msra.mxu0 0.0
        %2540 = vmatprep.subr.mxu0 0.0
        %2541 = vmatpush1.msra.mxu0 0.0
        %2542 = vmatprep.subr.mxu0 0.0
        %2543 = vmatpush1.msra.mxu0 0.0
        %2544 = vmatprep.subr.mxu0 0.0
        %2545 = vmatpush1.msra.mxu0 0.0
        %2546 = vmatprep.subr.mxu0 0.0
        %2547 = vmatpush1.msra.mxu0 0.0
        %2548 = vmatprep.subr.mxu0 0.0
        %2549 = vmatpush1.msra.mxu0 0.0
        %2550 = vmatprep.subr.mxu0 0.0
        %2551 = vmatpush1.msra.mxu0 0.0
        %2552 = vmatprep.subr.mxu0 0.0
        %2553 = vmatpush1.msra.mxu0 0.0
        %2554 = vmatprep.subr.mxu0 0.0
        %2555 = vmatpush1.msra.mxu0 0.0
        %2556 = vmatprep.subr.mxu0 0.0
        %2557 = vmatpush1.msra.mxu0 0.0
        %2558 = vmatprep.subr.mxu0 0.0
        %2559 = vmatpush1.msra.mxu0 0.0
        %2560 = vmatprep.subr.mxu0 0.0
        %2561 = vmatpush1.msra.mxu0 0.0
        %2562 = vmatprep.subr.mxu0 0.0
        %2563 = vmatpush1.msra.mxu0 0.0
        %2564 = vmatprep.subr.mxu0 0.0
        %2565 = vmatpush1.msra.mxu0 0.0
        %2566 = vmatprep.subr.mxu0 0.0
        %2567 = vmatpush1.msra.mxu0 %v2537
        %2568 = vmatprep.subr.mxu0 0.0
        %2569 = vmatpush1.msra.mxu0 %v2536
        %2570 = vmatprep.subr.mxu0 0.0
        %2571 = vmatpush2.msra.mxu0 0.0
        %2572 = vmatprep.subr.mxu0 0.0
        %2573 = vmatpush2.msra.mxu0 0.0
        %2574 = vmatprep.subr.mxu0 0.0
        %2575 = vmatpush2.msra.mxu0 0.0
        %2576 = vmatprep.subr.mxu0 0.0
        %2577 = vmatpush2.msra.mxu0 0.0
        %2578 = vmatprep.subr.mxu0 0.0
        %2579 = vmatpush2.msra.mxu0 0.0
        %2580 = vmatprep.subr.mxu0 0.0
        %2581 = vmatpush2.msra.mxu0 0.0
        %2582 = vmatprep.subr.mxu0 0.0
        %2583 = vmatpush2.msra.mxu0 0.0
        %2584 = vmatprep.subr.mxu0 0.0
        %2585 = vmatpush2.msra.mxu0 0.0
        %2586 = vmatprep.subr.mxu0 0.0
        %2587 = vmatpush2.msra.mxu0 0.0
        %2588 = vmatprep.subr.mxu0 0.0
        %2589 = vmatpush2.msra.mxu0 0.0
        %2590 = vmatprep.subr.mxu0 0.0
        %2591 = vmatpush2.msra.mxu0 0.0
        %2592 = vmatprep.subr.mxu0 0.0
        %2593 = vmatpush2.msra.mxu0 0.0
        %2594 = vmatprep.subr.mxu0 0.0
        %2595 = vmatpush2.msra.mxu0 0.0
        %2596 = vmatprep.subr.mxu0 0.0
        %2597 = vmatpush2.msra.mxu0 0.0
        %2598 = vmatprep.subr.mxu0 0.0
        %2599 = vmatpush2.msra.mxu0 0.0
        %2600 = vmatprep.subr.mxu0 0.0
        %2601 = vmatpush2.msra.mxu0 0.0
        %2602 = vmatprep.mubr.f32.mxu0 0.0
        %2603 = vmatmul.mubr.f32.gmra.mxu0 %v678
        %v2604 = vpop.f32.mrf.mxu0
        %v2605 = vadd.f32 0.0, %v2604
        %v2606 = vpop.f32.mrf.mxu0
        %2607 = vdwg.mxu0
        %v2609 = vsel %vm676, %v2605, 0
        %2611 = vmatprep.subr.mxu0 0.0
        %2612 = vmatpush1.msra.mxu0 0.0
        %2613 = vmatprep.subr.mxu0 0.0
        %2614 = vmatpush1.msra.mxu0 0.0
        %2615 = vmatprep.subr.mxu0 0.0
        %2616 = vmatpush1.msra.mxu0 0.0
        %2617 = vmatprep.subr.mxu0 0.0
        %2618 = vmatpush1.msra.mxu0 0.0
        %2619 = vmatprep.subr.mxu0 0.0
        %2620 = vmatpush1.msra.mxu0 0.0
        %2621 = vmatprep.subr.mxu0 0.0
        %2622 = vmatpush1.msra.mxu0 0.0
        %2623 = vmatprep.subr.mxu0 0.0
        %2624 = vmatpush1.msra.mxu0 0.0
        %2625 = vmatprep.subr.mxu0 0.0
        %2626 = vmatpush1.msra.mxu0 0.0
        %2627 = vmatprep.subr.mxu0 0.0
        %2628 = vmatpush1.msra.mxu0 0.0
        %2629 = vmatprep.subr.mxu0 0.0
        %2630 = vmatpush1.msra.mxu0 0.0
        %2631 = vmatprep.subr.mxu0 0.0
        %2632 = vmatpush1.msra.mxu0 0.0
        %2633 = vmatprep.subr.mxu0 0.0
        %2634 = vmatpush1.msra.mxu0 0.0
        %2635 = vmatprep.subr.mxu0 0.0
        %2636 = vmatpush1.msra.mxu0 0.0
        %2637 = vmatprep.subr.mxu0 0.0
        %2638 = vmatpush1.msra.mxu0 0.0
        %2639 = vmatprep.subr.mxu0 0.0
        %2640 = vmatpush1.msra.mxu0 %v653
        %2641 = vmatprep.subr.mxu0 0.0
        %2642 = vmatpush1.msra.mxu0 %v652
        %2643 = vmatprep.subr.mxu0 0.0
        %2644 = vmatpush2.msra.mxu0 0.0
        %2645 = vmatprep.subr.mxu0 0.0
        %2646 = vmatpush2.msra.mxu0 0.0
        %2647 = vmatprep.subr.mxu0 0.0
        %2648 = vmatpush2.msra.mxu0 0.0
        %2649 = vmatprep.subr.mxu0 0.0
        %2650 = vmatpush2.msra.mxu0 0.0
        %2651 = vmatprep.subr.mxu0 0.0
        %2652 = vmatpush2.msra.mxu0 0.0
        %2653 = vmatprep.subr.mxu0 0.0
        %2654 = vmatpush2.msra.mxu0 0.0
        %2655 = vmatprep.subr.mxu0 0.0
        %2656 = vmatpush2.msra.mxu0 0.0
        %2657 = vmatprep.subr.mxu0 0.0
        %2658 = vmatpush2.msra.mxu0 0.0
        %2659 = vmatprep.subr.mxu0 0.0
        %2660 = vmatpush2.msra.mxu0 0.0
        %2661 = vmatprep.subr.mxu0 0.0
        %2662 = vmatpush2.msra.mxu0 0.0
        %2663 = vmatprep.subr.mxu0 0.0
        %2664 = vmatpush2.msra.mxu0 0.0
        %2665 = vmatprep.subr.mxu0 0.0
        %2666 = vmatpush2.msra.mxu0 0.0
        %2667 = vmatprep.subr.mxu0 0.0
        %2668 = vmatpush2.msra.mxu0 0.0
        %2669 = vmatprep.subr.mxu0 0.0
        %2670 = vmatpush2.msra.mxu0 0.0
        %2671 = vmatprep.subr.mxu0 0.0
        %2672 = vmatpush2.msra.mxu0 0.0
        %2673 = vmatprep.subr.mxu0 0.0
        %2674 = vmatpush2.msra.mxu0 0.0
        %2675 = vmatprep.mubr.f32.mxu0 0.0
        %2676 = vmatmul.mubr.f32.gmra.mxu0 %v2609
        %v2677 = vpop.f32.mrf.mxu0
        %v2678 = vadd.f32 0.0, %v2677
        %v2679 = vpop.f32.mrf.mxu0
        %2680 = vdwg.mxu0
        %2681 = vmatprep.subr.mxu0 0.0
        %2682 = vmatpush1.msra.mxu0 0.0
        %2683 = vmatprep.subr.mxu0 0.0
        %2684 = vmatpush1.msra.mxu0 0.0
        %2685 = vmatprep.subr.mxu0 0.0
        %2686 = vmatpush1.msra.mxu0 0.0
        %2687 = vmatprep.subr.mxu0 0.0
        %2688 = vmatpush1.msra.mxu0 0.0
        %2689 = vmatprep.subr.mxu0 0.0
        %2690 = vmatpush1.msra.mxu0 0.0
        %2691 = vmatprep.subr.mxu0 0.0
        %2692 = vmatpush1.msra.mxu0 0.0
        %2693 = vmatprep.subr.mxu0 0.0
        %2694 = vmatpush1.msra.mxu0 0.0
        %2695 = vmatprep.subr.mxu0 0.0
        %2696 = vmatpush1.msra.mxu0 0.0
        %2697 = vmatprep.subr.mxu0 0.0
        %2698 = vmatpush1.msra.mxu0 0.0
        %2699 = vmatprep.subr.mxu0 0.0
        %2700 = vmatpush1.msra.mxu0 0.0
        %2701 = vmatprep.subr.mxu0 0.0
        %2702 = vmatpush1.msra.mxu0 0.0
        %2703 = vmatprep.subr.mxu0 0.0
        %2704 = vmatpush1.msra.mxu0 0.0
        %2705 = vmatprep.subr.mxu0 0.0
        %2706 = vmatpush1.msra.mxu0 0.0
        %2707 = vmatprep.subr.mxu0 0.0
        %2708 = vmatpush1.msra.mxu0 0.0
        %2709 = vmatprep.subr.mxu0 0.0
        %2710 = vmatpush1.msra.mxu0 0.0
        %2711 = vmatprep.subr.mxu0 0.0
        %2712 = vmatpush1.msra.mxu0 %v2678
        %2713 = vmatprep.subr.mxu0 0.0
        %2714 = vmatpush2.msra.mxu0 0.0
        %2715 = vmatprep.subr.mxu0 0.0
        %2716 = vmatpush2.msra.mxu0 0.0
        %2717 = vmatprep.subr.mxu0 0.0
        %2718 = vmatpush2.msra.mxu0 0.0
        %2719 = vmatprep.subr.mxu0 0.0
        %2720 = vmatpush2.msra.mxu0 0.0
        %2721 = vmatprep.subr.mxu0 0.0
        %2722 = vmatpush2.msra.mxu0 0.0
        %2723 = vmatprep.subr.mxu0 0.0
        %2724 = vmatpush2.msra.mxu0 0.0
        %2725 = vmatprep.subr.mxu0 0.0
        %2726 = vmatpush2.msra.mxu0 0.0
        %2727 = vmatprep.subr.mxu0 0.0
        %2728 = vmatpush2.msra.mxu0 0.0
        %2729 = vmatprep.subr.mxu0 0.0
        %2730 = vmatpush2.msra.mxu0 0.0
        %2731 = vmatprep.subr.mxu0 0.0
        %2732 = vmatpush2.msra.mxu0 0.0
        %2733 = vmatprep.subr.mxu0 0.0
        %2734 = vmatpush2.msra.mxu0 0.0
        %2735 = vmatprep.subr.mxu0 0.0
        %2736 = vmatpush2.msra.mxu0 0.0
        %2737 = vmatprep.subr.mxu0 0.0
        %2738 = vmatpush2.msra.mxu0 0.0
        %2739 = vmatprep.subr.mxu0 0.0
        %2740 = vmatpush2.msra.mxu0 0.0
        %2741 = vmatprep.subr.mxu0 0.0
        %2742 = vmatpush2.msra.mxu0 0.0
        %2743 = vmatprep.subr.mxu0 0.0
        %2744 = vmatpush2.msra.mxu0 0.0
        %2745 = vmatprep.mubr.f32.mxu0 0.0
        %2746 = vmatmul.mubr.f32.gmra.mxu0 %v825
        %v2747 = vpop.f32.mrf.mxu0
        %v2748 = vadd.f32 0.0, %v2747
        %v2749 = vpop.f32.mrf.mxu0
        %2750 = vmatprep.mubr.f32.mxu0 0.0
        %2751 = vmatmul.mubr.f32.gmra.mxu0 %v828
        %v2752 = vpop.f32.mrf.mxu0
        %v2753 = vadd.f32 0.0, %v2752
        %v2754 = vpop.f32.mrf.mxu0
        %2755 = vdwg.mxu0
        %v2757 = vsel %vm823, %v2748, 0
        %v2760 = vsel %vm823, %v2753, 0
        %2762 = vmatprep.subr.mxu0 0.0
        %2763 = vmatpush1.msra.mxu0 0.0
        %2764 = vmatprep.subr.mxu0 0.0
        %2765 = vmatpush1.msra.mxu0 0.0
        %2766 = vmatprep.subr.mxu0 0.0
        %2767 = vmatpush1.msra.mxu0 0.0
        %2768 = vmatprep.subr.mxu0 0.0
        %2769 = vmatpush1.msra.mxu0 0.0
        %2770 = vmatprep.subr.mxu0 0.0
        %2771 = vmatpush1.msra.mxu0 0.0
        %2772 = vmatprep.subr.mxu0 0.0
        %2773 = vmatpush1.msra.mxu0 0.0
        %2774 = vmatprep.subr.mxu0 0.0
        %2775 = vmatpush1.msra.mxu0 0.0
        %2776 = vmatprep.subr.mxu0 0.0
        %2777 = vmatpush1.msra.mxu0 0.0
        %2778 = vmatprep.subr.mxu0 0.0
        %2779 = vmatpush1.msra.mxu0 0.0
        %2780 = vmatprep.subr.mxu0 0.0
        %2781 = vmatpush1.msra.mxu0 0.0
        %2782 = vmatprep.subr.mxu0 0.0
        %2783 = vmatpush1.msra.mxu0 0.0
        %2784 = vmatprep.subr.mxu0 0.0
        %2785 = vmatpush1.msra.mxu0 0.0
        %2786 = vmatprep.subr.mxu0 0.0
        %2787 = vmatpush1.msra.mxu0 0.0
        %2788 = vmatprep.subr.mxu0 0.0
        %2789 = vmatpush1.msra.mxu0 0.0
        %2790 = vmatprep.subr.mxu0 0.0
        %2791 = vmatpush1.msra.mxu0 0.0
        %2792 = vmatprep.subr.mxu0 0.0
        %2793 = vmatpush1.msra.mxu0 %v660
        %2794 = vmatprep.subr.mxu0 0.0
        %2795 = vmatpush2.msra.mxu0 0.0
        %2796 = vmatprep.subr.mxu0 0.0
        %2797 = vmatpush2.msra.mxu0 0.0
        %2798 = vmatprep.subr.mxu0 0.0
        %2799 = vmatpush2.msra.mxu0 0.0
        %2800 = vmatprep.subr.mxu0 0.0
        %2801 = vmatpush2.msra.mxu0 0.0
        %2802 = vmatprep.subr.mxu0 0.0
        %2803 = vmatpush2.msra.mxu0 0.0
        %2804 = vmatprep.subr.mxu0 0.0
        %2805 = vmatpush2.msra.mxu0 0.0
        %2806 = vmatprep.subr.mxu0 0.0
        %2807 = vmatpush2.msra.mxu0 0.0
        %2808 = vmatprep.subr.mxu0 0.0
        %2809 = vmatpush2.msra.mxu0 0.0
        %2810 = vmatprep.subr.mxu0 0.0
        %2811 = vmatpush2.msra.mxu0 0.0
        %2812 = vmatprep.subr.mxu0 0.0
        %2813 = vmatpush2.msra.mxu0 0.0
        %2814 = vmatprep.subr.mxu0 0.0
        %2815 = vmatpush2.msra.mxu0 0.0
        %2816 = vmatprep.subr.mxu0 0.0
        %2817 = vmatpush2.msra.mxu0 0.0
        %2818 = vmatprep.subr.mxu0 0.0
        %2819 = vmatpush2.msra.mxu0 0.0
        %2820 = vmatprep.subr.mxu0 0.0
        %2821 = vmatpush2.msra.mxu0 0.0
        %2822 = vmatprep.subr.mxu0 0.0
        %2823 = vmatpush2.msra.mxu0 0.0
        %2824 = vmatprep.subr.mxu0 0.0
        %2825 = vmatpush2.msra.mxu0 0.0
        %2826 = vmatprep.mubr.f32.mxu0 0.0
        %2827 = vmatmul.mubr.f32.gmra.mxu0 %v2757
        %v2828 = vpop.f32.mrf.mxu0
        %v2829 = vadd.f32 0.0, %v2828
        %v2830 = vpop.f32.mrf.mxu0
        %2831 = vmatprep.mubr.f32.mxu0 0.0
        %2832 = vmatmul.mubr.f32.gmra.mxu0 %v2760
        %v2833 = vpop.f32.mrf.mxu0
        %v2834 = vadd.f32 0.0, %v2833
        %v2835 = vpop.f32.mrf.mxu0
        %2836 = vdwg.mxu0
        %v2837 = vsub.f32 %v2536, %v2829
        %v2838 = vsub.f32 %v2537, %v2834
        %v2839 = vmul.f32 %v2837, 4.0
        %v2840 = vmul.f32 %v2838, 4.0
        %v2841 = vmax.f32 %v2839, -1.0
        %v2842 = vmax.f32 %v2840, -1.0
        %v2843 = vmin.f32 %v2841, 1.0
        %v2844 = vmin.f32 %v2842, 1.0
        %s2845 = scalar_lea.vmem %s604, 32 [#allocation5]
        %2846 = vst.msk [vmem:[%s2845] sm:$0xff] %vm676, %v2843
        %2847 = vst.msk [vmem:[%s2845 + $0x8] sm:$0xff] %vm676, %v2844
        %2848 = vmatprep.subr.mxu0 0.0
        %2849 = vmatpush1.msra.mxu0 0.0
        %2850 = vmatprep.subr.mxu0 0.0
        %2851 = vmatpush1.msra.mxu0 0.0
        %2852 = vmatprep.subr.mxu0 0.0
        %2853 = vmatpush1.msra.mxu0 0.0
        %2854 = vmatprep.subr.mxu0 0.0
        %2855 = vmatpush1.msra.mxu0 0.0
        %2856 = vmatprep.subr.mxu0 0.0
        %2857 = vmatpush1.msra.mxu0 0.0
        %2858 = vmatprep.subr.mxu0 0.0
        %2859 = vmatpush1.msra.mxu0 0.0
        %2860 = vmatprep.subr.mxu0 0.0
        %2861 = vmatpush1.msra.mxu0 0.0
        %2862 = vmatprep.subr.mxu0 0.0
        %2863 = vmatpush1.msra.mxu0 0.0
        %2864 = vmatprep.subr.mxu0 0.0
        %2865 = vmatpush1.msra.mxu0 0.0
        %2866 = vmatprep.subr.mxu0 0.0
        %2867 = vmatpush1.msra.mxu0 0.0
        %2868 = vmatprep.subr.mxu0 0.0
        %2869 = vmatpush1.msra.mxu0 0.0
        %2870 = vmatprep.subr.mxu0 0.0
        %2871 = vmatpush1.msra.mxu0 0.0
        %2872 = vmatprep.subr.mxu0 0.0
        %2873 = vmatpush1.msra.mxu0 0.0
        %2874 = vmatprep.subr.mxu0 0.0
        %2875 = vmatpush1.msra.mxu0 0.0
        %2876 = vmatprep.subr.mxu0 0.0
        %2877 = vmatpush1.msra.mxu0 0.0
        %2878 = vmatprep.subr.mxu0 0.0
        %2879 = vmatpush1.msra.mxu0 %v2678
        %2880 = vmatprep.subr.mxu0 0.0
        %2881 = vmatpush2.msra.mxu0 0.0
        %2882 = vmatprep.subr.mxu0 0.0
        %2883 = vmatpush2.msra.mxu0 0.0
        %2884 = vmatprep.subr.mxu0 0.0
        %2885 = vmatpush2.msra.mxu0 0.0
        %2886 = vmatprep.subr.mxu0 0.0
        %2887 = vmatpush2.msra.mxu0 0.0
        %2888 = vmatprep.subr.mxu0 0.0
        %2889 = vmatpush2.msra.mxu0 0.0
        %2890 = vmatprep.subr.mxu0 0.0
        %2891 = vmatpush2.msra.mxu0 0.0
        %2892 = vmatprep.subr.mxu0 0.0
        %2893 = vmatpush2.msra.mxu0 0.0
        %2894 = vmatprep.subr.mxu0 0.0
        %2895 = vmatpush2.msra.mxu0 0.0
        %2896 = vmatprep.subr.mxu0 0.0
        %2897 = vmatpush2.msra.mxu0 0.0
        %2898 = vmatprep.subr.mxu0 0.0
        %2899 = vmatpush2.msra.mxu0 0.0
        %2900 = vmatprep.subr.mxu0 0.0
        %2901 = vmatpush2.msra.mxu0 0.0
        %2902 = vmatprep.subr.mxu0 0.0
        %2903 = vmatpush2.msra.mxu0 0.0
        %2904 = vmatprep.subr.mxu0 0.0
        %2905 = vmatpush2.msra.mxu0 0.0
        %2906 = vmatprep.subr.mxu0 0.0
        %2907 = vmatpush2.msra.mxu0 0.0
        %2908 = vmatprep.subr.mxu0 0.0
        %2909 = vmatpush2.msra.mxu0 0.0
        %2910 = vmatprep.subr.mxu0 0.0
        %2911 = vmatpush2.msra.mxu0 0.0
        %2912 = vmatprep.mubr.f32.mxu0 0.0
        %2913 = vmatmul.mubr.f32.gmra.mxu0 %v997
        %v2914 = vpop.f32.mrf.mxu0
        %v2915 = vadd.f32 0.0, %v2914
        %v2916 = vpop.f32.mrf.mxu0
        %2917 = vdwg.mxu0
        %v2919 = vsel %vm823, %v2915, 0
        %2921 = vmatprep.subr.mxu0 0.0
        %2922 = vmatpush1.msra.mxu0 0.0
        %2923 = vmatprep.subr.mxu0 0.0
        %2924 = vmatpush1.msra.mxu0 0.0
        %2925 = vmatprep.subr.mxu0 0.0
        %2926 = vmatpush1.msra.mxu0 0.0
        %2927 = vmatprep.subr.mxu0 0.0
        %2928 = vmatpush1.msra.mxu0 0.0
        %2929 = vmatprep.subr.mxu0 0.0
        %2930 = vmatpush1.msra.mxu0 0.0
        %2931 = vmatprep.subr.mxu0 0.0
        %2932 = vmatpush1.msra.mxu0 0.0
        %2933 = vmatprep.subr.mxu0 0.0
        %2934 = vmatpush1.msra.mxu0 0.0
        %2935 = vmatprep.subr.mxu0 0.0
        %2936 = vmatpush1.msra.mxu0 0.0
        %2937 = vmatprep.subr.mxu0 0.0
        %2938 = vmatpush1.msra.mxu0 0.0
        %2939 = vmatprep.subr.mxu0 0.0
        %2940 = vmatpush1.msra.mxu0 0.0
        %2941 = vmatprep.subr.mxu0 0.0
        %2942 = vmatpush1.msra.mxu0 0.0
        %2943 = vmatprep.subr.mxu0 0.0
        %2944 = vmatpush1.msra.mxu0 0.0
        %2945 = vmatprep.subr.mxu0 0.0
        %2946 = vmatpush1.msra.mxu0 0.0
        %2947 = vmatprep.subr.mxu0 0.0
        %2948 = vmatpush1.msra.mxu0 0.0
        %2949 = vmatprep.subr.mxu0 0.0
        %2950 = vmatpush1.msra.mxu0 0.0
        %2951 = vmatprep.subr.mxu0 0.0
        %2952 = vmatpush1.msra.mxu0 %v655
        %2953 = vmatprep.subr.mxu0 0.0
        %2954 = vmatpush2.msra.mxu0 0.0
        %2955 = vmatprep.subr.mxu0 0.0
        %2956 = vmatpush2.msra.mxu0 0.0
        %2957 = vmatprep.subr.mxu0 0.0
        %2958 = vmatpush2.msra.mxu0 0.0
        %2959 = vmatprep.subr.mxu0 0.0
        %2960 = vmatpush2.msra.mxu0 0.0
        %2961 = vmatprep.subr.mxu0 0.0
        %2962 = vmatpush2.msra.mxu0 0.0
        %2963 = vmatprep.subr.mxu0 0.0
        %2964 = vmatpush2.msra.mxu0 0.0
        %2965 = vmatprep.subr.mxu0 0.0
        %2966 = vmatpush2.msra.mxu0 0.0
        %2967 = vmatprep.subr.mxu0 0.0
        %2968 = vmatpush2.msra.mxu0 0.0
        %2969 = vmatprep.subr.mxu0 0.0
        %2970 = vmatpush2.msra.mxu0 0.0
        %2971 = vmatprep.subr.mxu0 0.0
        %2972 = vmatpush2.msra.mxu0 0.0
        %2973 = vmatprep.subr.mxu0 0.0
        %2974 = vmatpush2.msra.mxu0 0.0
        %2975 = vmatprep.subr.mxu0 0.0
        %2976 = vmatpush2.msra.mxu0 0.0
        %2977 = vmatprep.subr.mxu0 0.0
        %2978 = vmatpush2.msra.mxu0 0.0
        %2979 = vmatprep.subr.mxu0 0.0
        %2980 = vmatpush2.msra.mxu0 0.0
        %2981 = vmatprep.subr.mxu0 0.0
        %2982 = vmatpush2.msra.mxu0 0.0
        %2983 = vmatprep.subr.mxu0 0.0
        %2984 = vmatpush2.msra.mxu0 0.0
        %2985 = vmatprep.mubr.f32.mxu0 0.0
        %2986 = vmatmul.mubr.f32.gmra.mxu0 %v2919
        %v2987 = vpop.f32.mrf.mxu0
        %v2988 = vadd.f32 0.0, %v2987
        %v2989 = vpop.f32.mrf.mxu0
        %2990 = vdwg.mxu0
        %v2992 = vsel %vm1146, %v2988, 0
        %2994 = vmatprep.subr.mxu0 0.0
        %2995 = vmatpush1.msra.mxu0 0.0
        %2996 = vmatprep.subr.mxu0 0.0
        %2997 = vmatpush1.msra.mxu0 0.0
        %2998 = vmatprep.subr.mxu0 0.0
        %2999 = vmatpush1.msra.mxu0 0.0
        %3000 = vmatprep.subr.mxu0 0.0
        %3001 = vmatpush1.msra.mxu0 0.0
        %3002 = vmatprep.subr.mxu0 0.0
        %3003 = vmatpush1.msra.mxu0 0.0
        %3004 = vmatprep.subr.mxu0 0.0
        %3005 = vmatpush1.msra.mxu0 0.0
        %3006 = vmatprep.subr.mxu0 0.0
        %3007 = vmatpush1.msra.mxu0 0.0
        %3008 = vmatprep.subr.mxu0 0.0
        %3009 = vmatpush1.msra.mxu0 0.0
        %3010 = vmatprep.subr.mxu0 0.0
        %3011 = vmatpush1.msra.mxu0 0.0
        %3012 = vmatprep.subr.mxu0 0.0
        %3013 = vmatpush1.msra.mxu0 0.0
        %3014 = vmatprep.subr.mxu0 0.0
        %3015 = vmatpush1.msra.mxu0 0.0
        %3016 = vmatprep.subr.mxu0 0.0
        %3017 = vmatpush1.msra.mxu0 0.0
        %3018 = vmatprep.subr.mxu0 0.0
        %3019 = vmatpush1.msra.mxu0 0.0
        %3020 = vmatprep.subr.mxu0 0.0
        %3021 = vmatpush1.msra.mxu0 0.0
        %3022 = vmatprep.subr.mxu0 0.0
        %3023 = vmatpush1.msra.mxu0 0.0
        %3024 = vmatprep.subr.mxu0 0.0
        %3025 = vmatpush1.msra.mxu0 %v2992
        %3026 = vmatprep.subr.mxu0 0.0
        %3027 = vmatpush2.msra.mxu0 0.0
        %3028 = vmatprep.subr.mxu0 0.0
        %3029 = vmatpush2.msra.mxu0 0.0
        %3030 = vmatprep.subr.mxu0 0.0
        %3031 = vmatpush2.msra.mxu0 0.0
        %3032 = vmatprep.subr.mxu0 0.0
        %3033 = vmatpush2.msra.mxu0 0.0
        %3034 = vmatprep.subr.mxu0 0.0
        %3035 = vmatpush2.msra.mxu0 0.0
        %3036 = vmatprep.subr.mxu0 0.0
        %3037 = vmatpush2.msra.mxu0 0.0
        %3038 = vmatprep.subr.mxu0 0.0
        %3039 = vmatpush2.msra.mxu0 0.0
        %3040 = vmatprep.subr.mxu0 0.0
        %3041 = vmatpush2.msra.mxu0 0.0
        %3042 = vmatprep.subr.mxu0 0.0
        %3043 = vmatpush2.msra.mxu0 0.0
        %3044 = vmatprep.subr.mxu0 0.0
        %3045 = vmatpush2.msra.mxu0 0.0
        %3046 = vmatprep.subr.mxu0 0.0
        %3047 = vmatpush2.msra.mxu0 0.0
        %3048 = vmatprep.subr.mxu0 0.0
        %3049 = vmatpush2.msra.mxu0 0.0
        %3050 = vmatprep.subr.mxu0 0.0
        %3051 = vmatpush2.msra.mxu0 0.0
        %3052 = vmatprep.subr.mxu0 0.0
        %3053 = vmatpush2.msra.mxu0 0.0
        %3054 = vmatprep.subr.mxu0 0.0
        %3055 = vmatpush2.msra.mxu0 0.0
        %3056 = vmatprep.subr.mxu0 0.0
        %3057 = vmatpush2.msra.mxu0 0.0
        %3058 = vmatprep.mubr.f32.mxu0 0.0
        %3059 = vmatmul.mubr.f32.gmra.mxu0 %v1144
        %v3060 = vpop.f32.mrf.mxu0
        %v3061 = vadd.f32 0.0, %v3060
        %v3062 = vpop.f32.mrf.mxu0
        %3063 = vdwg.mxu0
        %v3065 = vsel %vm1142, %v3061, 0
        %3067 = vmatprep.subr.mxu0 0.0
        %3068 = vmatpush1.msra.mxu0 0.0
        %3069 = vmatprep.subr.mxu0 0.0
        %3070 = vmatpush1.msra.mxu0 0.0
        %3071 = vmatprep.subr.mxu0 0.0
        %3072 = vmatpush1.msra.mxu0 0.0
        %3073 = vmatprep.subr.mxu0 0.0
        %3074 = vmatpush1.msra.mxu0 0.0
        %3075 = vmatprep.subr.mxu0 0.0
        %3076 = vmatpush1.msra.mxu0 0.0
        %3077 = vmatprep.subr.mxu0 0.0
        %3078 = vmatpush1.msra.mxu0 0.0
        %3079 = vmatprep.subr.mxu0 0.0
        %3080 = vmatpush1.msra.mxu0 0.0
        %3081 = vmatprep.subr.mxu0 0.0
        %3082 = vmatpush1.msra.mxu0 0.0
        %3083 = vmatprep.subr.mxu0 0.0
        %3084 = vmatpush1.msra.mxu0 0.0
        %3085 = vmatprep.subr.mxu0 0.0
        %3086 = vmatpush1.msra.mxu0 0.0
        %3087 = vmatprep.subr.mxu0 0.0
        %3088 = vmatpush1.msra.mxu0 0.0
        %3089 = vmatprep.subr.mxu0 0.0
        %3090 = vmatpush1.msra.mxu0 0.0
        %3091 = vmatprep.subr.mxu0 0.0
        %3092 = vmatpush1.msra.mxu0 0.0
        %3093 = vmatprep.subr.mxu0 0.0
        %3094 = vmatpush1.msra.mxu0 0.0
        %3095 = vmatprep.subr.mxu0 0.0
        %3096 = vmatpush1.msra.mxu0 0.0
        %3097 = vmatprep.subr.mxu0 0.0
        %3098 = vmatpush1.msra.mxu0 %v1224
        %3099 = vmatprep.subr.mxu0 0.0
        %3100 = vmatpush2.msra.mxu0 0.0
        %3101 = vmatprep.subr.mxu0 0.0
        %3102 = vmatpush2.msra.mxu0 0.0
        %3103 = vmatprep.subr.mxu0 0.0
        %3104 = vmatpush2.msra.mxu0 0.0
        %3105 = vmatprep.subr.mxu0 0.0
        %3106 = vmatpush2.msra.mxu0 0.0
        %3107 = vmatprep.subr.mxu0 0.0
        %3108 = vmatpush2.msra.mxu0 0.0
        %3109 = vmatprep.subr.mxu0 0.0
        %3110 = vmatpush2.msra.mxu0 0.0
        %3111 = vmatprep.subr.mxu0 0.0
        %3112 = vmatpush2.msra.mxu0 0.0
        %3113 = vmatprep.subr.mxu0 0.0
        %3114 = vmatpush2.msra.mxu0 0.0
        %3115 = vmatprep.subr.mxu0 0.0
        %3116 = vmatpush2.msra.mxu0 0.0
        %3117 = vmatprep.subr.mxu0 0.0
        %3118 = vmatpush2.msra.mxu0 0.0
        %3119 = vmatprep.subr.mxu0 0.0
        %3120 = vmatpush2.msra.mxu0 0.0
        %3121 = vmatprep.subr.mxu0 0.0
        %3122 = vmatpush2.msra.mxu0 0.0
        %3123 = vmatprep.subr.mxu0 0.0
        %3124 = vmatpush2.msra.mxu0 0.0
        %3125 = vmatprep.subr.mxu0 0.0
        %3126 = vmatpush2.msra.mxu0 0.0
        %3127 = vmatprep.subr.mxu0 0.0
        %3128 = vmatpush2.msra.mxu0 0.0
        %3129 = vmatprep.subr.mxu0 0.0
        %3130 = vmatpush2.msra.mxu0 0.0
        %3131 = vmatprep.mubr.f32.mxu0 0.0
        %3132 = vmatmul.mubr.f32.gmra.mxu0 %v3065
        %v3133 = vpop.f32.mrf.mxu0
        %v3134 = vadd.f32 0.0, %v3133
        %v3135 = vpop.f32.mrf.mxu0
        %3136 = vdwg.mxu0
        %v3137 = vsub.f32 %v2678, %v3134
        %v3138 = vmul.f32 %v3137, 4.0
        %v3139 = vmax.f32 %v3138, -1.0
        %v3140 = vmin.f32 %v3139, 1.0
        %s3141 = scalar_lea.vmem %s611, 16 [#allocation6]
        %3142 = vst.msk [vmem:[%s3141] sm:$0xff] %vm823, %v3140
        %3143 = vmatprep.subr.mxu0 0.0
        %3144 = vmatpush1.msra.mxu0 0.0
        %3145 = vmatprep.subr.mxu0 0.0
        %3146 = vmatpush1.msra.mxu0 0.0
        %3147 = vmatprep.subr.mxu0 0.0
        %3148 = vmatpush1.msra.mxu0 0.0
        %3149 = vmatprep.subr.mxu0 0.0
        %3150 = vmatpush1.msra.mxu0 0.0
        %3151 = vmatprep.subr.mxu0 0.0
        %3152 = vmatpush1.msra.mxu0 0.0
        %3153 = vmatprep.subr.mxu0 0.0
        %3154 = vmatpush1.msra.mxu0 0.0
        %3155 = vmatprep.subr.mxu0 0.0
        %3156 = vmatpush1.msra.mxu0 0.0
        %3157 = vmatprep.subr.mxu0 0.0
        %3158 = vmatpush1.msra.mxu0 0.0
        %3159 = vmatprep.subr.mxu0 0.0
        %3160 = vmatpush1.msra.mxu0 0.0
        %3161 = vmatprep.subr.mxu0 0.0
        %3162 = vmatpush1.msra.mxu0 0.0
        %3163 = vmatprep.subr.mxu0 0.0
        %3164 = vmatpush1.msra.mxu0 0.0
        %3165 = vmatprep.subr.mxu0 0.0
        %3166 = vmatpush1.msra.mxu0 0.0
        %3167 = vmatprep.subr.mxu0 0.0
        %3168 = vmatpush1.msra.mxu0 0.0
        %3169 = vmatprep.subr.mxu0 0.0
        %3170 = vmatpush1.msra.mxu0 0.0
        %3171 = vmatprep.subr.mxu0 0.0
        %3172 = vmatpush1.msra.mxu0 0.0
        %3173 = vmatprep.subr.mxu0 0.0
        %3174 = vmatpush1.msra.mxu0 %v2992
        %3175 = vmatprep.subr.mxu0 0.0
        %3176 = vmatpush2.msra.mxu0 0.0
        %3177 = vmatprep.subr.mxu0 0.0
        %3178 = vmatpush2.msra.mxu0 0.0
        %3179 = vmatprep.subr.mxu0 0.0
        %3180 = vmatpush2.msra.mxu0 0.0
        %3181 = vmatprep.subr.mxu0 0.0
        %3182 = vmatpush2.msra.mxu0 0.0
        %3183 = vmatprep.subr.mxu0 0.0
        %3184 = vmatpush2.msra.mxu0 0.0
        %3185 = vmatprep.subr.mxu0 0.0
        %3186 = vmatpush2.msra.mxu0 0.0
        %3187 = vmatprep.subr.mxu0 0.0
        %3188 = vmatpush2.msra.mxu0 0.0
        %3189 = vmatprep.subr.mxu0 0.0
        %3190 = vmatpush2.msra.mxu0 0.0
        %3191 = vmatprep.subr.mxu0 0.0
        %3192 = vmatpush2.msra.mxu0 0.0
        %3193 = vmatprep.subr.mxu0 0.0
        %3194 = vmatpush2.msra.mxu0 0.0
        %3195 = vmatprep.subr.mxu0 0.0
        %3196 = vmatpush2.msra.mxu0 0.0
        %3197 = vmatprep.subr.mxu0 0.0
        %3198 = vmatpush2.msra.mxu0 0.0
        %3199 = vmatprep.subr.mxu0 0.0
        %3200 = vmatpush2.msra.mxu0 0.0
        %3201 = vmatprep.subr.mxu0 0.0
        %3202 = vmatpush2.msra.mxu0 0.0
        %3203 = vmatprep.subr.mxu0 0.0
        %3204 = vmatpush2.msra.mxu0 0.0
        %3205 = vmatprep.subr.mxu0 0.0
        %3206 = vmatpush2.msra.mxu0 0.0
        %3207 = vmatprep.mubr.f32.mxu0 0.0
        %3208 = vmatmul.mubr.f32.gmra.mxu0 %v1302
        %v3209 = vpop.f32.mrf.mxu0
        %v3210 = vadd.f32 0.0, %v3209
        %v3211 = vpop.f32.mrf.mxu0
        %3212 = vdwg.mxu0
        %v3214 = vsel %vm1142, %v3210, 0
        %3216 = vmatprep.subr.mxu0 0.0
        %3217 = vmatpush1.msra.mxu0 0.0
        %3218 = vmatprep.subr.mxu0 0.0
        %3219 = vmatpush1.msra.mxu0 0.0
        %3220 = vmatprep.subr.mxu0 0.0
        %3221 = vmatpush1.msra.mxu0 0.0
        %3222 = vmatprep.subr.mxu0 0.0
        %3223 = vmatpush1.msra.mxu0 0.0
        %3224 = vmatprep.subr.mxu0 0.0
        %3225 = vmatpush1.msra.mxu0 0.0
        %3226 = vmatprep.subr.mxu0 0.0
        %3227 = vmatpush1.msra.mxu0 0.0
        %3228 = vmatprep.subr.mxu0 0.0
        %3229 = vmatpush1.msra.mxu0 0.0
        %3230 = vmatprep.subr.mxu0 0.0
        %3231 = vmatpush1.msra.mxu0 0.0
        %3232 = vmatprep.subr.mxu0 0.0
        %3233 = vmatpush1.msra.mxu0 0.0
        %3234 = vmatprep.subr.mxu0 0.0
        %3235 = vmatpush1.msra.mxu0 0.0
        %3236 = vmatprep.subr.mxu0 0.0
        %3237 = vmatpush1.msra.mxu0 0.0
        %3238 = vmatprep.subr.mxu0 0.0
        %3239 = vmatpush1.msra.mxu0 0.0
        %3240 = vmatprep.subr.mxu0 0.0
        %3241 = vmatpush1.msra.mxu0 0.0
        %3242 = vmatprep.subr.mxu0 0.0
        %3243 = vmatpush1.msra.mxu0 0.0
        %3244 = vmatprep.subr.mxu0 0.0
        %3245 = vmatpush1.msra.mxu0 0.0
        %3246 = vmatprep.subr.mxu0 0.0
        %3247 = vmatpush1.msra.mxu0 %v1378
        %3248 = vmatprep.subr.mxu0 0.0
        %3249 = vmatpush2.msra.mxu0 0.0
        %3250 = vmatprep.subr.mxu0 0.0
        %3251 = vmatpush2.msra.mxu0 0.0
        %3252 = vmatprep.subr.mxu0 0.0
        %3253 = vmatpush2.msra.mxu0 0.0
        %3254 = vmatprep.subr.mxu0 0.0
        %3255 = vmatpush2.msra.mxu0 0.0
        %3256 = vmatprep.subr.mxu0 0.0
        %3257 = vmatpush2.msra.mxu0 0.0
        %3258 = vmatprep.subr.mxu0 0.0
        %3259 = vmatpush2.msra.mxu0 0.0
        %3260 = vmatprep.subr.mxu0 0.0
        %3261 = vmatpush2.msra.mxu0 0.0
        %3262 = vmatprep.subr.mxu0 0.0
        %3263 = vmatpush2.msra.mxu0 0.0
        %3264 = vmatprep.subr.mxu0 0.0
        %3265 = vmatpush2.msra.mxu0 0.0
        %3266 = vmatprep.subr.mxu0 0.0
        %3267 = vmatpush2.msra.mxu0 0.0
        %3268 = vmatprep.subr.mxu0 0.0
        %3269 = vmatpush2.msra.mxu0 0.0
        %3270 = vmatprep.subr.mxu0 0.0
        %3271 = vmatpush2.msra.mxu0 0.0
        %3272 = vmatprep.subr.mxu0 0.0
        %3273 = vmatpush2.msra.mxu0 0.0
        %3274 = vmatprep.subr.mxu0 0.0
        %3275 = vmatpush2.msra.mxu0 0.0
        %3276 = vmatprep.subr.mxu0 0.0
        %3277 = vmatpush2.msra.mxu0 0.0
        %3278 = vmatprep.subr.mxu0 0.0
        %3279 = vmatpush2.msra.mxu0 0.0
        %3280 = vmatprep.mubr.f32.mxu0 0.0
        %3281 = vmatmul.mubr.f32.gmra.mxu0 %v3214
        %v3282 = vpop.f32.mrf.mxu0
        %v3283 = vadd.f32 0.0, %v3282
        %v3284 = vpop.f32.mrf.mxu0
        %3285 = vdwg.mxu0
        %v3287 = vsel %vm1454, %v3283, 0
        %3289 = vmatprep.subr.mxu0 0.0
        %3290 = vmatpush1.msra.mxu0 0.0
        %3291 = vmatprep.subr.mxu0 0.0
        %3292 = vmatpush1.msra.mxu0 0.0
        %3293 = vmatprep.subr.mxu0 0.0
        %3294 = vmatpush1.msra.mxu0 0.0
        %3295 = vmatprep.subr.mxu0 0.0
        %3296 = vmatpush1.msra.mxu0 0.0
        %3297 = vmatprep.subr.mxu0 0.0
        %3298 = vmatpush1.msra.mxu0 0.0
        %3299 = vmatprep.subr.mxu0 0.0
        %3300 = vmatpush1.msra.mxu0 0.0
        %3301 = vmatprep.subr.mxu0 0.0
        %3302 = vmatpush1.msra.mxu0 0.0
        %3303 = vmatprep.subr.mxu0 0.0
        %3304 = vmatpush1.msra.mxu0 0.0
        %3305 = vmatprep.subr.mxu0 0.0
        %3306 = vmatpush1.msra.mxu0 0.0
        %3307 = vmatprep.subr.mxu0 0.0
        %3308 = vmatpush1.msra.mxu0 0.0
        %3309 = vmatprep.subr.mxu0 0.0
        %3310 = vmatpush1.msra.mxu0 0.0
        %3311 = vmatprep.subr.mxu0 0.0
        %3312 = vmatpush1.msra.mxu0 0.0
        %3313 = vmatprep.subr.mxu0 0.0
        %3314 = vmatpush1.msra.mxu0 0.0
        %3315 = vmatprep.subr.mxu0 0.0
        %3316 = vmatpush1.msra.mxu0 0.0
        %3317 = vmatprep.subr.mxu0 0.0
        %3318 = vmatpush1.msra.mxu0 0.0
        %3319 = vmatprep.subr.mxu0 0.0
        %3320 = vmatpush1.msra.mxu0 %v3287
        %3321 = vmatprep.subr.mxu0 0.0
        %3322 = vmatpush2.msra.mxu0 0.0
        %3323 = vmatprep.subr.mxu0 0.0
        %3324 = vmatpush2.msra.mxu0 0.0
        %3325 = vmatprep.subr.mxu0 0.0
        %3326 = vmatpush2.msra.mxu0 0.0
        %3327 = vmatprep.subr.mxu0 0.0
        %3328 = vmatpush2.msra.mxu0 0.0
        %3329 = vmatprep.subr.mxu0 0.0
        %3330 = vmatpush2.msra.mxu0 0.0
        %3331 = vmatprep.subr.mxu0 0.0
        %3332 = vmatpush2.msra.mxu0 0.0
        %3333 = vmatprep.subr.mxu0 0.0
        %3334 = vmatpush2.msra.mxu0 0.0
        %3335 = vmatprep.subr.mxu0 0.0
        %3336 = vmatpush2.msra.mxu0 0.0
        %3337 = vmatprep.subr.mxu0 0.0
        %3338 = vmatpush2.msra.mxu0 0.0
        %3339 = vmatprep.subr.mxu0 0.0
        %3340 = vmatpush2.msra.mxu0 0.0
        %3341 = vmatprep.subr.mxu0 0.0
        %3342 = vmatpush2.msra.mxu0 0.0
        %3343 = vmatprep.subr.mxu0 0.0
        %3344 = vmatpush2.msra.mxu0 0.0
        %3345 = vmatprep.subr.mxu0 0.0
        %3346 = vmatpush2.msra.mxu0 0.0
        %3347 = vmatprep.subr.mxu0 0.0
        %3348 = vmatpush2.msra.mxu0 0.0
        %3349 = vmatprep.subr.mxu0 0.0
        %3350 = vmatpush2.msra.mxu0 0.0
        %3351 = vmatprep.subr.mxu0 0.0
        %3352 = vmatpush2.msra.mxu0 0.0
        %3353 = vmatprep.mubr.f32.mxu0 0.0
        %3354 = vmatmul.mubr.f32.gmra.mxu0 %v1452
        %v3355 = vpop.f32.mrf.mxu0
        %v3356 = vadd.f32 0.0, %v3355
        %v3357 = vpop.f32.mrf.mxu0
        %3358 = vdwg.mxu0
        %v3360 = vsel %vm1450, %v3356, 0
        %3362 = vmatprep.subr.mxu0 0.0
        %3363 = vmatpush1.msra.mxu0 0.0
        %3364 = vmatprep.subr.mxu0 0.0
        %3365 = vmatpush1.msra.mxu0 0.0
        %3366 = vmatprep.subr.mxu0 0.0
        %3367 = vmatpush1.msra.mxu0 0.0
        %3368 = vmatprep.subr.mxu0 0.0
        %3369 = vmatpush1.msra.mxu0 0.0
        %3370 = vmatprep.subr.mxu0 0.0
        %3371 = vmatpush1.msra.mxu0 0.0
        %3372 = vmatprep.subr.mxu0 0.0
        %3373 = vmatpush1.msra.mxu0 0.0
        %3374 = vmatprep.subr.mxu0 0.0
        %3375 = vmatpush1.msra.mxu0 0.0
        %3376 = vmatprep.subr.mxu0 0.0
        %3377 = vmatpush1.msra.mxu0 0.0
        %3378 = vmatprep.subr.mxu0 0.0
        %3379 = vmatpush1.msra.mxu0 0.0
        %3380 = vmatprep.subr.mxu0 0.0
        %3381 = vmatpush1.msra.mxu0 0.0
        %3382 = vmatprep.subr.mxu0 0.0
        %3383 = vmatpush1.msra.mxu0 0.0
        %3384 = vmatprep.subr.mxu0 0.0
        %3385 = vmatpush1.msra.mxu0 0.0
        %3386 = vmatprep.subr.mxu0 0.0
        %3387 = vmatpush1.msra.mxu0 0.0
        %3388 = vmatprep.subr.mxu0 0.0
        %3389 = vmatpush1.msra.mxu0 0.0
        %3390 = vmatprep.subr.mxu0 0.0
        %3391 = vmatpush1.msra.mxu0 0.0
        %3392 = vmatprep.subr.mxu0 0.0
        %3393 = vmatpush1.msra.mxu0 %v1532
        %3394 = vmatprep.subr.mxu0 0.0
        %3395 = vmatpush2.msra.mxu0 0.0
        %3396 = vmatprep.subr.mxu0 0.0
        %3397 = vmatpush2.msra.mxu0 0.0
        %3398 = vmatprep.subr.mxu0 0.0
        %3399 = vmatpush2.msra.mxu0 0.0
        %3400 = vmatprep.subr.mxu0 0.0
        %3401 = vmatpush2.msra.mxu0 0.0
        %3402 = vmatprep.subr.mxu0 0.0
        %3403 = vmatpush2.msra.mxu0 0.0
        %3404 = vmatprep.subr.mxu0 0.0
        %3405 = vmatpush2.msra.mxu0 0.0
        %3406 = vmatprep.subr.mxu0 0.0
        %3407 = vmatpush2.msra.mxu0 0.0
        %3408 = vmatprep.subr.mxu0 0.0
        %3409 = vmatpush2.msra.mxu0 0.0
        %3410 = vmatprep.subr.mxu0 0.0
        %3411 = vmatpush2.msra.mxu0 0.0
        %3412 = vmatprep.subr.mxu0 0.0
        %3413 = vmatpush2.msra.mxu0 0.0
        %3414 = vmatprep.subr.mxu0 0.0
        %3415 = vmatpush2.msra.mxu0 0.0
        %3416 = vmatprep.subr.mxu0 0.0
        %3417 = vmatpush2.msra.mxu0 0.0
        %3418 = vmatprep.subr.mxu0 0.0
        %3419 = vmatpush2.msra.mxu0 0.0
        %3420 = vmatprep.subr.mxu0 0.0
        %3421 = vmatpush2.msra.mxu0 0.0
        %3422 = vmatprep.subr.mxu0 0.0
        %3423 = vmatpush2.msra.mxu0 0.0
        %3424 = vmatprep.subr.mxu0 0.0
        %3425 = vmatpush2.msra.mxu0 0.0
        %3426 = vmatprep.mubr.f32.mxu0 0.0
        %3427 = vmatmul.mubr.f32.gmra.mxu0 %v3360
        %v3428 = vpop.f32.mrf.mxu0
        %v3429 = vadd.f32 0.0, %v3428
        %v3430 = vpop.f32.mrf.mxu0
        %3431 = vdwg.mxu0
        %v3432 = vsub.f32 %v2988, %v3429
        %v3433 = vmul.f32 %v3432, 4.0
        %v3434 = vmax.f32 %v3433, -1.0
        %v3435 = vmin.f32 %v3434, 1.0
        %s3436 = scalar_lea.vmem %s618, 8 [#allocation8]
        %3437 = vst.msk [vmem:[%s3436] sm:$0xf] %vm1608, %v3435
        %s3438 = scalar_lea.vmem %s645, 4
        %3439 = vst.msk [vmem:[%s3438] sm:$0x3] %vm1610, %v3283
        %s3440 = sand.u32 %s370, 1
        %s3441 = scalar_lea.sflag [#allocation3], %s3440
        %s3442 = sand.u32 %s370, 1
        %s3443 = smul.addr %s3442, 48
        %s3444 = scalar_lea.vmem [#allocation5], %s3443
        %s3445 = sand.u32 %s37, 1
        %s3446 = scalar_lea.sflag [#allocation7], %s3445
        %s3447 = sand.u32 %s396, 1
        %s3448 = smul.addr %s3447, 24
        %s3449 = scalar_lea.vmem [#allocation6], %s3448
        %s3450 = sand.u32 %s37, 1
        %s3451 = scalar_lea.sflag [#allocation7], %s3450
        %s3452 = sand.u32 %s422, 1
        %s3453 = smul.addr %s3452, 12
        %s3454 = scalar_lea.vmem [#allocation8], %s3453
        %s3455 = smul.u32 3, %s37
        %p3456 = scmp.lt.s32.totalorder %s3455, 5
        %s3457 = scalar_select %p3456, %s3455, 5
        %s3458 = smul.addr %s3457, 2
        %s3459 = scalar_lea.vmem %s18, %s3458
        // Predicated region
        $region85: #{lpls_pyramid_forward.1} parent=79 // pred_check
          %p3460 = pneg %p380
        $region86: #{lpls_pyramid_forward.1} parent=79 // pred_check_branch
          %3462 = sbr.rel (%p3460) target = $region88
        $region87: #{lpls_pyramid_forward.1} parent=79 // pred_region
          %s3463 = smul.u32 3, %s37
          %s3465 = ssub.s32 768, 768
          %3466 = vsyncadd %s3441, %s3465
          %s3467 = smul.addr %s3463, 2
          %s3468 = smul.addr %s3467, 128
          %s3469 = scalar_lea.hbm %s15, %s3468
          %s3470 = sshll.u32 %s3444, 4
          %s3471 = int_to_ptr.vmem [resolvable:$true] %s3470
          %3476 = dma.vmem_to_hbm [thread:$0]  %s3471, 768, %s3469, %s3441, 128, 128, 8
        $region88: #{lpls_pyramid_forward.1} parent=79 // pred_fallthru
          _
        // Predicated region
        $region89: #{lpls_pyramid_forward.1} parent=79 // pred_check
          %p3477 = pneg %p406
        $region90: #{lpls_pyramid_forward.1} parent=79 // pred_check_branch
          %3479 = sbr.rel (%p3477) target = $region92
        $region91: #{lpls_pyramid_forward.1} parent=79 // pred_region
          %s3480 = smul.u32 3, %s37
          %s3482 = ssub.s32 384, 384
          %3483 = vsyncadd %s3446, %s3482
          %s3484 = smul.addr %s3480, 128
          %s3485 = scalar_lea.hbm %s16, %s3484
          %s3486 = sshll.u32 %s3449, 4
          %s3487 = int_to_ptr.vmem [resolvable:$true] %s3486
          %3492 = dma.vmem_to_hbm [thread:$0]  %s3487, 384, %s3485, %s3446, 128, 128, 8
        $region92: #{lpls_pyramid_forward.1} parent=79 // pred_fallthru
          _
        // Predicated region
        $region93: #{lpls_pyramid_forward.1} parent=79 // pred_check
          %p3493 = pneg %p432
        $region94: #{lpls_pyramid_forward.1} parent=79 // pred_check_branch
          %3495 = sbr.rel (%p3493) target = $region96
        $region95: #{lpls_pyramid_forward.1} parent=79 // pred_region
          %s3496 = smul.u32 3, %s37
          %s3498 = ssub.s32 192, 192
          %3499 = vsyncadd %s3451, %s3498
          %s3500 = smul.addr %s3496, 64
          %s3501 = scalar_lea.hbm %s17, %s3500
          %s3502 = sshll.u32 %s3454, 4
          %s3503 = int_to_ptr.vmem [resolvable:$true] %s3502
          %3508 = dma.vmem_to_hbm [thread:$0]  %s3503, 192, %s3501, %s3451, 64, 64, 4
        $region96: #{lpls_pyramid_forward.1} parent=79 // pred_fallthru
          _
        // Predicated region
        $region97: #{lpls_pyramid_forward.1} parent=79 // pred_check
          %p3509 = pneg %p458
        $region98: #{lpls_pyramid_forward.1} parent=79 // pred_check_branch
          %3511 = sbr.rel (%p3509) target = $region100
        $region99: #{lpls_pyramid_forward.1} parent=79 // pred_region
          %s3512 = smul.u32 3, %s37
        $region100: #{lpls_pyramid_forward.1} parent=79 // pred_fallthru
          _
      $region80: #{lpls_pyramid_forward.1} parent=5 // pred_fallthru
        _
      %p3513 = scmp.le.s32.totalorder 2, %s32
      // Predicated region
      $region101: #{lpls_pyramid_forward.1} parent=5 // pred_check
        %p3514 = pneg %p3513
      $region102: #{lpls_pyramid_forward.1} parent=5 // pred_check_branch
        %3516 = sbr.rel (%p3514) target = $region104
      $region103: #{lpls_pyramid_forward.1} parent=5 // pred_region
        %s3517 = ssub.s32 %s32, 2
        // Predicated region
        $region105: #{lpls_pyramid_forward.1} parent=103 // pred_check
          %p3518 = pneg %p386
        $region106: #{lpls_pyramid_forward.1} parent=103 // pred_check_branch
          %3520 = sbr.rel (%p3518) target = $region108
        $region107: #{lpls_pyramid_forward.1} parent=103 // pred_region
          %s3521 = sand.u32 %s371, 1
          %s3522 = scalar_lea.sflag [#allocation3], %s3521
          %s3523 = sand.u32 %s371, 1
          %s3524 = smul.addr %s3523, 48
          %s3525 = scalar_lea.vmem [#allocation5], %s3524
          %3526 = dma.done %s3522, 768
        $region108: #{lpls_pyramid_forward.1} parent=103 // pred_fallthru
          _
        // Predicated region
        $region109: #{lpls_pyramid_forward.1} parent=103 // pred_check
          %p3527 = pneg %p412
        $region110: #{lpls_pyramid_forward.1} parent=103 // pred_check_branch
          %3529 = sbr.rel (%p3527) target = $region112
        $region111: #{lpls_pyramid_forward.1} parent=103 // pred_region
          %s3530 = sand.u32 %s38, 1
          %s3531 = scalar_lea.sflag [#allocation7], %s3530
          %s3532 = sand.u32 %s397, 1
          %s3533 = smul.addr %s3532, 24
          %s3534 = scalar_lea.vmem [#allocation6], %s3533
          %3535 = dma.done %s3531, 384
        $region112: #{lpls_pyramid_forward.1} parent=103 // pred_fallthru
          _
        // Predicated region
        $region113: #{lpls_pyramid_forward.1} parent=103 // pred_check
          %p3536 = pneg %p438
        $region114: #{lpls_pyramid_forward.1} parent=103 // pred_check_branch
          %3538 = sbr.rel (%p3536) target = $region116
        $region115: #{lpls_pyramid_forward.1} parent=103 // pred_region
          %s3539 = sand.u32 %s38, 1
          %s3540 = scalar_lea.sflag [#allocation7], %s3539
          %s3541 = sand.u32 %s423, 1
          %s3542 = smul.addr %s3541, 12
          %s3543 = scalar_lea.vmem [#allocation8], %s3542
          %3544 = dma.done %s3540, 192
        $region116: #{lpls_pyramid_forward.1} parent=103 // pred_fallthru
          _
        // Predicated region
        $region117: #{lpls_pyramid_forward.1} parent=103 // pred_check
          %p3545 = pneg %p464
        $region118: #{lpls_pyramid_forward.1} parent=103 // pred_check_branch
          %3547 = sbr.rel (%p3545) target = $region120
        $region119: #{lpls_pyramid_forward.1} parent=103 // pred_region
          %s3548 = smul.u32 3, %s38
          %p3549 = scmp.lt.s32.totalorder %s3548, 5
          %s3550 = scalar_select %p3549, %s3548, 5
          %s3551 = smul.addr %s3550, 2
          %s3552 = scalar_lea.vmem %s18, %s3551
        $region120: #{lpls_pyramid_forward.1} parent=103 // pred_fallthru
          _
      $region104: #{lpls_pyramid_forward.1} parent=5 // pred_fallthru
        _
    $region6: #{lpls_pyramid_forward.1} parent=1 // loop_footer
      %s36 = sadd.s32 1, %s32
    $region7: #{lpls_pyramid_forward.1} parent=1 // loop_footer_branch
      %31 = sbr.rel target = $region3
    $region8: #{lpls_pyramid_forward.1} parent=1 // loop_exit
      _
    %3553 = vsyncpa [#allocation3], 1
    %s3554 = scalar_lea.sflag [#allocation3], 1
    %3555 = vsyncpa %s3554, 1
    %3556 = vsyncpa [#allocation7], 1
    %s3557 = scalar_lea.sflag [#allocation7], 1
    %3558 = vsyncpa %s3557, 1
    %3559 = vsyncpa [#allocation4], 1
    %s3560 = scalar_lea.sflag [#allocation4], 1
    %3561 = vsyncpa %s3560, 1

</llo_original>
